<compile_context>
chip_gen: v7x
topology: tpu7x:2x2x1
jax: 0.10.0
libtpu: 0.0.40
codegen_flags: <defaults>
</compile_context>

<pallas_src>
import functools

import numpy as np
import jax
import jax.numpy as jnp
from jax.experimental import pallas as pl
from jax.experimental.pallas import tpu as pltpu

K = 5          # deconv kernel size
STRIDE = 2
PAD = 2
OUT_PAD = 1
LANE = 128     # TPU lane width

# VMEM sizing: budget used to pick the row-tile height, and the scoped limit
# passed to Mosaic.  48 MiB < v7x's 64 MiB physical and well under v5e/v6e's
# 128 MiB.  TODO(synk): per-generation tuning (raise toward 96 MiB on v6e).
VMEM_TILE_BUDGET = 32 * 1024 * 1024
VMEM_LIMIT_BYTES = 48 * 1024 * 1024

# Polyphase taps.  Output index 2m (+parity) draws from the 1-padded input at
# row/col (m + offset) with kernel tap k:
#   even outputs (parity 0): offsets 0,1,2 -> taps 4,2,0
#   odd  outputs (parity 1): offsets 1,2   -> taps 3,1
_TAPS = (((0, 4), (1, 2), (2, 0)),     # parity 0
         ((1, 3), (2, 1)))             # parity 1


# ----------------------------------------------------------------------------
# Feature probe: single-buffered grid-invariant operands via pl.Buffered(1).
# ----------------------------------------------------------------------------
@functools.lru_cache(maxsize=None)
def _single_buffer_ok():
    if not hasattr(pl, "Buffered"):
        return False
    try:
        def k(x_ref, w_ref, o_ref):
            o_ref[...] = x_ref[...] + w_ref[...]

        f = pl.pallas_call(
            k,
            grid=(2, 2),
            in_specs=[
                pl.BlockSpec((8, LANE), lambda i, j: (i, j)),
                pl.BlockSpec((8, LANE), lambda i, j: (0, 0),
                             pipeline_mode=pl.Buffered(1)),
            ],
            out_specs=pl.BlockSpec((8, LANE), lambda i, j: (i, j)),
            out_shape=jax.ShapeDtypeStruct((16, 2 * LANE), jnp.float32),
            compiler_params=pltpu.CompilerParams(
                dimension_semantics=("parallel", "parallel")),
        )
        jax.block_until_ready(
            f(jnp.ones((16, 2 * LANE), jnp.float32),
              jnp.ones((8, LANE), jnp.float32)))
        return True
    except Exception:
        return False


def _invariant_spec(block_shape, index_map):
    """BlockSpec for operands whose block never changes across the grid."""
    if _single_buffer_ok():
        return pl.BlockSpec(block_shape, index_map, pipeline_mode=pl.Buffered(1))
    return pl.BlockSpec(block_shape, index_map)


# ----------------------------------------------------------------------------
# Pallas kernel: one row-tile of one transposed-conv layer (polyphase) with the
# bias / muls / floor / clip / scale post-ops fused in the epilogue.
# ----------------------------------------------------------------------------
def _make_poly_kernel(TH, Wp, Cout, post_fn):
    THWp = TH * Wp

    def kernel(x_ref, w_ref, b_ref, m_ref, o_ref):
        # x_ref: ((TH+3)*Wp, Cin) bf16  -- padded input rows, flattened at width Wp
        # w_ref: (K, K, Cin, Cout) bf16 -- raw conv_transpose weight taps
        # b_ref, m_ref: (1, Cout)  f32
        # o_ref: (4, TH*Wp, Cout)       -- one slab per output parity (py, px);
        #                                  2 junk columns per row dropped in glue
        bias = jnp.broadcast_to(b_ref[...], (THWp, Cout))       # f32
        mul = m_ref[...]                                         # (1, Cout) f32
        p = 0
        for py in range(2):
            for px in range(2):
                acc = bias                                       # bias-initialized
                for ro, ky in _TAPS[py]:
                    for co, kx in _TAPS[px]:
                        s = ro * Wp + co
                        # contiguous (TH*Wp, Cin) slice: no reshape, no shift copy
                        acc = acc + jnp.dot(
                            x_ref[s:s + THWp, :], w_ref[ky, kx],
                            preferred_element_type=jnp.float32)
                # TODO(synk): verify MRB in-place accumulation on v7x bundles.
                o_ref[p] = post_fn(acc * mul).astype(o_ref.dtype)
                p += 1

    return kernel


def _pick_tile_rows(H, Wp, cin, cout, out_bytes, vmem_budget):
    """Largest row-tile (of input rows) that keeps the pipeline inside budget."""
    wbuf = 1 if _single_buffer_ok() else 2
    weights = wbuf * K * K * cin * cout * 2                 # bf16 weights
    fixed = weights + 2 * 3 * Wp * cin * 2                  # halo/tail slab rows
    per_row = 2 * Wp * cin * 2 + 2 * 4 * Wp * cout * out_bytes
    th = max(1, int((vmem_budget - fixed) // max(per_row, 1)))
    th = max(1, min(th, H, 512))
    t = -(-H // th)                                          # ceil
    th = -(-H // t)                                          # balance tiles
    return th, t


def deconv_layer(x_nhwc, w_t, bias, muls, post_fn, *, out_dtype, cout_keep=None):
    """ConvTranspose2d(k=5, s=2, p=2, op=1) + fused post-ops (polyphase Pallas).

    Channels of x / w_t / bias / muls are assumed already lane-padded by the
    caller; `cout_keep` slices the output channels right after the kernel
    (before the depth-to-space glue)."""
    N, H, W, Cin = x_nhwc.shape
    Cout = w_t.shape[1]
    Wp = W + 2
    out_bytes = jnp.dtype(out_dtype).itemsize

    TH, T = _pick_tile_rows(H, Wp, Cin, Cout, out_bytes, VMEM_TILE_BUDGET)
    Ht = T * TH                                   # tiled input rows (>= H)
    slab_rows = (TH + 3) * Wp                     # TH + 2 halo + 1 tail row

    # ---- glue: bf16 cast + 1-pixel spatial zero pad (+ tail rows), flattened
    #      at width Wp so every tap's LHS is a contiguous slice in the kernel.
    x = x_nhwc.astype(jnp.bfloat16)
    xp = jnp.pad(x, ((0, 0), (1, Ht - H + 2), (1, 1), (0, 0)))   # (N, Ht+3, Wp, Cin)
    if T == 1:
        xt = xp.reshape(N, 1, slab_rows, Cin)
    else:
        # TODO(synk): switch to pl.Element / pl.BoundedSlice element-offset row
        # windows so the 3-row halo comes from overlapping DMA instead of this
        # duplicated copy (overhead (TH+3)/TH, small at the budgeted TH).
        row_idx = jnp.arange(T)[:, None] * TH + jnp.arange(TH + 3)[None, :]
        xt = jnp.take(xp, row_idx, axis=1).reshape(N, T, slab_rows, Cin)

    wk = jnp.transpose(w_t, (2, 3, 0, 1)).astype(jnp.bfloat16)   # (K,K,Cin,Cout)
    b2 = bias.reshape(1, Cout).astype(jnp.float32)
    m2 = muls.reshape(1, Cout).astype(jnp.float32)

    kernel = _make_poly_kernel(TH, Wp, Cout, post_fn)
    out = pl.pallas_call(
        kernel,
        out_shape=jax.ShapeDtypeStruct((N, T, 4, TH * Wp, Cout), out_dtype),
        grid=(N, T),
        in_specs=[
            pl.BlockSpec((None, None, slab_rows, Cin), lambda n, t: (n, t, 0, 0)),
            _invariant_spec((K, K, Cin, Cout), lambda n, t: (0, 0, 0, 0)),
            _invariant_spec((1, Cout), lambda n, t: (0, 0)),
            _invariant_spec((1, Cout), lambda n, t: (0, 0)),
        ],
        out_specs=pl.BlockSpec((None, None, 4, TH * Wp, Cout),
                               lambda n, t: (n, t, 0, 0, 0)),
        # TODO(synk): evaluate pltpu.CORE_PARALLEL on the row-tile axis for
        # explicit 2-TensorCore sharding on v7x at batch=1.
        compiler_params=pltpu.CompilerParams(
            dimension_semantics=("parallel", "parallel"),
            vmem_limit_bytes=VMEM_LIMIT_BYTES),
    )(xt, wk, b2, m2)

    # ---- glue: slice pad channels off BEFORE the depth-to-space transpose
    if cout_keep is not None and cout_keep < Cout:
        out = out[..., :cout_keep]
        Cout = cout_keep

    # ---- glue: drop junk columns + 2x2 depth-to-space interleave
    out = out.reshape(N, T, 2, 2, TH, Wp, Cout)[:, :, :, :, :, :W, :]
    out = jnp.transpose(out, (0, 1, 4, 2, 5, 3, 6))     # (N,T,TH,py,W,px,C)
    out = out.reshape(N, 2 * Ht, 2 * W, Cout)
    if Ht > H:
        out = out[:, :2 * H]
    return out


# ----------------------------------------------------------------------------
# Post-op closures (constants are Python floats baked at trace time).
# ----------------------------------------------------------------------------
def _mid_post(clp, scl, add2, div2):
    def post(a):
        a = jnp.floor((a + 2.0 ** 12) / 2.0 ** 13)
        a = jnp.clip(a, 0.0, clp)
        a = jnp.floor((a * scl + add2) / div2)
        return a
    return post


def _last_post(a):
    return jnp.floor((a + 2.0 ** 21) / 2.0 ** 22)


def _ceil_lane(c):
    return ((c + LANE - 1) // LANE) * LANE


# ----------------------------------------------------------------------------
# Full forward (mirrors Synthesis_net.forward)
# ----------------------------------------------------------------------------
def synthesis_forward(x_nchw, params):
    # pre-quantization (cheap elementwise glue)
    x = jnp.floor((x_nchw + 2.0 ** 3) / 2.0 ** 4)
    x = jnp.transpose(x, (0, 2, 3, 1))                        # NCHW -> NHWC
    posts = [
        _mid_post(params["clp"][0], params["scl"][0], 2.0 ** 19, 2.0 ** 20),
        _mid_post(params["clp"][1], params["scl"][1], 2.0 ** 17, 2.0 ** 18),
        _mid_post(params["clp"][2], params["scl"][2], 2.0 ** 17, 2.0 ** 18),
        _last_post,
    ]
    n_layers = len(params["w"])
    final_cout = params["w"][-1].shape[1]

    # Lane-multiple channel padding (323->384, 192->256, 3->128 at real sizes).
    cin0 = params["w"][0].shape[0]
    if _ceil_lane(cin0) > cin0:
        x = jnp.pad(x, ((0, 0), (0, 0), (0, 0), (0, _ceil_lane(cin0) - cin0)))

    for i in range(n_layers):
        w, b, m = params["w"][i], params["b"][i], params["muls"][i]
        cin, cout = w.shape[0], w.shape[1]
        cin_p, cout_p = _ceil_lane(cin), _ceil_lane(cout)
        if cin_p > cin or cout_p > cout:
            w = jnp.pad(w, ((0, cin_p - cin), (0, cout_p - cout), (0, 0), (0, 0)))
            b = jnp.pad(b, ((0, cout_p - cout),))
            m = jnp.pad(m, ((0, cout_p - cout),))
        last = (i == n_layers - 1)
        x = deconv_layer(
            x, w, b, m, posts[i],
            # bf16 between layers is bit-exact (post-clip/scale activations are
            # tiny integers); the final layer stays f32.
            out_dtype=jnp.float32 if last else jnp.bfloat16,
            cout_keep=final_cout if last else None)
    return jnp.transpose(x, (0, 3, 1, 2))                     # NHWC -> NCHW


# ----------------------------------------------------------------------------
# Deterministic synthetic parameters (the 5 floored splits of the PyTorch module
# are summed into one effective integer-valued weight/bias — exact by linearity).
# TODO(synk): mulsD*/clpD/sclD come from .npy files in the original; synthesized
# deterministically here.  With a real checkpoint, re-verify |weights| < 256 and
# activation sums < 2^24 before keeping bf16 MXU operands / bf16 activations.
# ----------------------------------------------------------------------------
def make_params(key, ch_m, ch_n):
    chans = [(ch_m, ch_n), (ch_n, ch_n), (ch_n, ch_n), (ch_n, 3)]
    ws, bs, ms = [], [], []
    for cin, cout in chans:
        key, kw, kb, km = jax.random.split(key, 4)
        w0 = jax.random.normal(kw, (cin, cout, K, K), jnp.float32) * 1.5
        b0 = jax.random.normal(kb, (cout,), jnp.float32) * 3.0
        w_eff = sum(jnp.floor((w0 + j) / 5.0) for j in range(5))
        b_eff = sum(jnp.floor((b0 + j) / 5.0) for j in range(5))
        ws.append(w_eff)
        bs.append(b_eff)
        ms.append(jax.random.randint(km, (cout,), 1, 33).astype(jnp.float32))
    return {
        "w": ws, "b": bs, "muls": ms,
        "clp": [255.0, 255.0, 255.0],
        "scl": [32768.0, 16384.0, 16384.0],
    }


# ----------------------------------------------------------------------------
# Independent numpy float64 reference of the exact PyTorch forward semantics.
# ----------------------------------------------------------------------------
def _conv_transpose_ref_np(x, w_t, b):
    n, cin, h, w = x.shape
    cout = w_t.shape[1]
    hout, wout = 2 * h, 2 * w
    hu, wu = (h - 1) * STRIDE + 1, (w - 1) * STRIDE + 1
    xu = np.zeros((n, cin, hu, wu), np.float64)
    xu[:, :, ::STRIDE, ::STRIDE] = x
    plo, phi = K - 1 - PAD, K - 1 - PAD + OUT_PAD
    xp = np.pad(xu, ((0, 0), (0, 0), (plo, phi), (plo, phi)))
    wf = np.flip(np.asarray(w_t, np.float64), axis=(2, 3))     # (Cin, Cout, K, K)
    out = np.zeros((n, cout, hout, wout), np.float64)
    for ky in range(K):
        for kx in range(K):
            patch = xp[:, :, ky:ky + hout, kx:kx + wout]       # (N, Cin, Ho, Wo)
            out += np.einsum("ncij,co->noij", patch, wf[:, :, ky, kx])
    return out + np.asarray(b, np.float64)[None, :, None, None]


def synthesis_forward_ref(x_nchw, params):
    x = np.floor((np.asarray(x_nchw, np.float64) + 2.0 ** 3) / 2.0 ** 4)
    for i in range(4):
        y = _conv_transpose_ref_np(x, params["w"][i], params["b"][i])
        y = y * np.asarray(params["muls"][i], np.float64)[None, :, None, None]
        if i < 3:
            y = np.floor((y + 2.0 ** 12) / 2.0 ** 13)
            y = np.clip(y, 0.0, params["clp"][i])
            add2, div2 = (2.0 ** 19, 2.0 ** 20) if i == 0 else (2.0 ** 17, 2.0 ** 18)
            y = np.floor((y * params["scl"][i] + add2) / div2)
        else:
            y = np.floor((y + 2.0 ** 21) / 2.0 ** 22)
        x = y
    return x


if __name__ == "__main__":
    key = jax.random.PRNGKey(0)
    # small stand-ins for out_channel_M=323 / out_channel_N=192
    CH_M, CH_N = 32, 16
    B, H, W = 2, 4, 4

    key, kp, kx = jax.random.split(key, 3)
    params = make_params(kp, CH_M, CH_N)
    x = jax.random.randint(kx, (B, CH_M, H, W), -512, 512).astype(jnp.float32)

    out = jax.block_until_ready(synthesis_forward(x, params))

    assert out.shape == (B, 3, 16 * H, 16 * W), out.shape
    ref = synthesis_forward_ref(np.asarray(x),
                                jax.tree_util.tree_map(np.asarray, params))
    max_err = float(np.max(np.abs(np.asarray(out, np.float64) - ref)))
    assert max_err == 0.0, f"mismatch vs reference, max_err={max_err}"

    print("KERNEL_OK")
</pallas_src>

<mosaic_0001>
module attributes {stable_mosaic.version = 11 : i64} {
  func.func @k(%arg0: i32, %arg1: i32, %arg2: memref<8x128xf32, #tpu.memory_space<vmem>>, %arg3: memref<8x128xf32, #tpu.memory_space<vmem>>, %arg4: memref<8x128xf32, #tpu.memory_space<vmem>>) attributes {dimension_semantics = [#tpu.dimension_semantics<parallel>, #tpu.dimension_semantics<parallel>], iteration_bounds = array<i64: 2, 2>, scalar_prefetch = 0 : i64, scratch_operands = 0 : i64, tpu.core_type = #tpu.core_type<tc>, window_params = [{transform_indices = @transform_0, window_bounds = array<i64: 8, 128>}, {pipeline_mode = #tpu.pipeline_mode<synchronous>, transform_indices = @transform_1, window_bounds = array<i64: 8, 128>}, {transform_indices = @transform_2, window_bounds = array<i64: 8, 128>}]} {
    %c0 = arith.constant 0 : index
    %c0_0 = arith.constant 0 : index
    %0 = vector.load %arg2[%c0, %c0_0] : memref<8x128xf32, #tpu.memory_space<vmem>>, vector<8x128xf32>
    %c0_1 = arith.constant 0 : index
    %c0_2 = arith.constant 0 : index
    %1 = vector.load %arg3[%c0_1, %c0_2] : memref<8x128xf32, #tpu.memory_space<vmem>>, vector<8x128xf32>
    %2 = arith.addf %0, %1 : vector<8x128xf32>
    %c0_3 = arith.constant 0 : index
    %c0_4 = arith.constant 0 : index
    %3 = vector.load %arg4[%c0_3, %c0_4] : memref<8x128xf32, #tpu.memory_space<vmem>>, vector<8x128xf32>
    tpu.vector_store %arg4[%c0_3, %c0_4], %2 {strides = array<i32>} : memref<8x128xf32, #tpu.memory_space<vmem>>, vector<8x128xf32>,
    return
  }
  func.func @transform_0(%arg0: i32, %arg1: i32) -> (i32, i32) {
    %c0_i32 = arith.constant 0 : i32
    return %arg0, %arg1 : i32, i32
  }
  func.func @transform_1(%arg0: i32, %arg1: i32) -> (i32, i32) {
    %c0_i32 = arith.constant 0 : i32
    %c0_i32_0 = arith.constant 0 : i32
    %c0_i32_1 = arith.constant 0 : i32
    return %c0_i32, %c0_i32_0 : i32, i32
  }
  func.func @transform_2(%arg0: i32, %arg1: i32) -> (i32, i32) {
    %c0_i32 = arith.constant 0 : i32
    return %arg0, %arg1 : i32, i32
  }
}

module attributes {stable_mosaic.version = 11 : i64} {
  func.func @kernel(%arg0: i32, %arg1: i32, %arg2: memref<1x1x42x128xbf16, #tpu.memory_space<vmem>>, %arg3: memref<5x5x128x128xbf16, #tpu.memory_space<vmem>>, %arg4: memref<1x128xf32, #tpu.memory_space<vmem>>, %arg5: memref<1x128xf32, #tpu.memory_space<vmem>>, %arg6: memref<1x1x4x24x128xbf16, #tpu.memory_space<vmem>>) attributes {dimension_semantics = [#tpu.dimension_semantics<parallel>, #tpu.dimension_semantics<parallel>], iteration_bounds = array<i64: 2, 1>, scalar_prefetch = 0 : i64, scratch_operands = 0 : i64, tpu.core_type = #tpu.core_type<tc>, window_params = [{transform_indices = @transform_0, window_bounds = array<i64: 1, 1, 42, 128>}, {pipeline_mode = #tpu.pipeline_mode<synchronous>, transform_indices = @transform_1, window_bounds = array<i64: 5, 5, 128, 128>}, {pipeline_mode = #tpu.pipeline_mode<synchronous>, transform_indices = @transform_2, window_bounds = array<i64: 1, 128>}, {pipeline_mode = #tpu.pipeline_mode<synchronous>, transform_indices = @transform_3, window_bounds = array<i64: 1, 128>}, {transform_indices = @transform_4, window_bounds = array<i64: 1, 1, 4, 24, 128>}]} {
    %c0 = arith.constant 0 : index
    %c0_0 = arith.constant 0 : index
    %0 = vector.load %arg4[%c0, %c0_0] : memref<1x128xf32, #tpu.memory_space<vmem>>, vector<1x128xf32>
    %1 = vector.shape_cast %0 : vector<1x128xf32> to vector<1x128xf32>
    %2 = vector.broadcast %1 : vector<1x128xf32> to vector<24x128xf32>
    %c0_1 = arith.constant 0 : index
    %c0_2 = arith.constant 0 : index
    %3 = vector.load %arg5[%c0_1, %c0_2] : memref<1x128xf32, #tpu.memory_space<vmem>>, vector<1x128xf32>
    %c0_3 = arith.constant 0 : index
    %c0_4 = arith.constant 0 : index
    %c0_5 = arith.constant 0 : index
    %c0_6 = arith.constant 0 : index
    %4 = vector.load %arg2[%c0_3, %c0_4, %c0_5, %c0_6] : memref<1x1x42x128xbf16, #tpu.memory_space<vmem>>, vector<1x1x24x128xbf16>
    %5 = vector.shape_cast %4 : vector<1x1x24x128xbf16> to vector<24x128xbf16>
    %c4 = arith.constant 4 : index
    %c4_7 = arith.constant 4 : index
    %c0_8 = arith.constant 0 : index
    %c0_9 = arith.constant 0 : index
    %6 = vector.load %arg3[%c4, %c4_7, %c0_8, %c0_9] : memref<5x5x128x128xbf16, #tpu.memory_space<vmem>>, vector<1x1x128x128xbf16>
    %7 = vector.shape_cast %6 : vector<1x1x128x128xbf16> to vector<128x128xbf16>
    %cst = arith.constant dense<0.000000e+00> : vector<24x128xf32>
    %8 = tpu.matmul %5, %7, %cst {dimension_numbers = #tpu.dot_dimension_numbers<[1], [0], [0], [1], [0, 0, 1, 1], [], []>} : vector<24x128xbf16>, vector<128x128xbf16>, vector<24x128xf32> -> vector<24x128xf32>
    %9 = arith.addf %2, %8 : vector<24x128xf32>
    %c0_10 = arith.constant 0 : index
    %c0_11 = arith.constant 0 : index
    %c1 = arith.constant 1 : index
    %c0_12 = arith.constant 0 : index
    %10 = vector.load %arg2[%c0_10, %c0_11, %c1, %c0_12] : memref<1x1x42x128xbf16, #tpu.memory_space<vmem>>, vector<1x1x24x128xbf16>
    %11 = vector.shape_cast %10 : vector<1x1x24x128xbf16> to vector<24x128xbf16>
    %c4_13 = arith.constant 4 : index
    %c2 = arith.constant 2 : index
    %c0_14 = arith.constant 0 : index
    %c0_15 = arith.constant 0 : index
    %12 = vector.load %arg3[%c4_13, %c2, %c0_14, %c0_15] : memref<5x5x128x128xbf16, #tpu.memory_space<vmem>>, vector<1x1x128x128xbf16>
    %13 = vector.shape_cast %12 : vector<1x1x128x128xbf16> to vector<128x128xbf16>
    %cst_16 = arith.constant dense<0.000000e+00> : vector<24x128xf32>
    %14 = tpu.matmul %11, %13, %cst_16 {dimension_numbers = #tpu.dot_dimension_numbers<[1], [0], [0], [1], [0, 0, 1, 1], [], []>} : vector<24x128xbf16>, vector<128x128xbf16>, vector<24x128xf32> -> vector<24x128xf32>
    %15 = arith.addf %9, %14 : vector<24x128xf32>
    %c0_17 = arith.constant 0 : index
    %c0_18 = arith.constant 0 : index
    %c2_19 = arith.constant 2 : index
    %c0_20 = arith.constant 0 : index
    %16 = vector.load %arg2[%c0_17, %c0_18, %c2_19, %c0_20] : memref<1x1x42x128xbf16, #tpu.memory_space<vmem>>, vector<1x1x24x128xbf16>
    %17 = vector.shape_cast %16 : vector<1x1x24x128xbf16> to vector<24x128xbf16>
    %c4_21 = arith.constant 4 : index
    %c0_22 = arith.constant 0 : index
    %c0_23 = arith.constant 0 : index
    %c0_24 = arith.constant 0 : index
    %18 = vector.load %arg3[%c4_21, %c0_22, %c0_23, %c0_24] : memref<5x5x128x128xbf16, #tpu.memory_space<vmem>>, vector<1x1x128x128xbf16>
    %19 = vector.shape_cast %18 : vector<1x1x128x128xbf16> to vector<128x128xbf16>
    %cst_25 = arith.constant dense<0.000000e+00> : vector<24x128xf32>
    %20 = tpu.matmul %17, %19, %cst_25 {dimension_numbers = #tpu.dot_dimension_numbers<[1], [0], [0], [1], [0, 0, 1, 1], [], []>} : vector<24x128xbf16>, vector<128x128xbf16>, vector<24x128xf32> -> vector<24x128xf32>
    %21 = arith.addf %15, %20 : vector<24x128xf32>
    %c0_26 = arith.constant 0 : index
    %c0_27 = arith.constant 0 : index
    %c6 = arith.constant 6 : index
    %c0_28 = arith.constant 0 : index
    %22 = vector.load %arg2[%c0_26, %c0_27, %c6, %c0_28] : memref<1x1x42x128xbf16, #tpu.memory_space<vmem>>, vector<1x1x24x128xbf16>
    %23 = vector.shape_cast %22 : vector<1x1x24x128xbf16> to vector<24x128xbf16>
    %c2_29 = arith.constant 2 : index
    %c4_30 = arith.constant 4 : index
    %c0_31 = arith.constant 0 : index
    %c0_32 = arith.constant 0 : index
    %24 = vector.load %arg3[%c2_29, %c4_30, %c0_31, %c0_32] : memref<5x5x128x128xbf16, #tpu.memory_space<vmem>>, vector<1x1x128x128xbf16>
    %25 = vector.shape_cast %24 : vector<1x1x128x128xbf16> to vector<128x128xbf16>
    %cst_33 = arith.constant dense<0.000000e+00> : vector<24x128xf32>
    %26 = tpu.matmul %23, %25, %cst_33 {dimension_numbers = #tpu.dot_dimension_numbers<[1], [0], [0], [1], [0, 0, 1, 1], [], []>} : vector<24x128xbf16>, vector<128x128xbf16>, vector<24x128xf32> -> vector<24x128xf32>
    %27 = arith.addf %21, %26 : vector<24x128xf32>
    %c0_34 = arith.constant 0 : index
    %c0_35 = arith.constant 0 : index
    %c7 = arith.constant 7 : index
    %c0_36 = arith.constant 0 : index
    %28 = vector.load %arg2[%c0_34, %c0_35, %c7, %c0_36] : memref<1x1x42x128xbf16, #tpu.memory_space<vmem>>, vector<1x1x24x128xbf16>
    %29 = vector.shape_cast %28 : vector<1x1x24x128xbf16> to vector<24x128xbf16>
    %c2_37 = arith.constant 2 : index
    %c2_38 = arith.constant 2 : index
    %c0_39 = arith.constant 0 : index
    %c0_40 = arith.constant 0 : index
    %30 = vector.load %arg3[%c2_37, %c2_38, %c0_39, %c0_40] : memref<5x5x128x128xbf16, #tpu.memory_space<vmem>>, vector<1x1x128x128xbf16>
    %31 = vector.shape_cast %30 : vector<1x1x128x128xbf16> to vector<128x128xbf16>
    %cst_41 = arith.constant dense<0.000000e+00> : vector<24x128xf32>
    %32 = tpu.matmul %29, %31, %cst_41 {dimension_numbers = #tpu.dot_dimension_numbers<[1], [0], [0], [1], [0, 0, 1, 1], [], []>} : vector<24x128xbf16>, vector<128x128xbf16>, vector<24x128xf32> -> vector<24x128xf32>
    %33 = arith.addf %27, %32 : vector<24x128xf32>
    %c0_42 = arith.constant 0 : index
    %c0_43 = arith.constant 0 : index
    %c8 = arith.constant 8 : index
    %c0_44 = arith.constant 0 : index
    %34 = vector.load %arg2[%c0_42, %c0_43, %c8, %c0_44] : memref<1x1x42x128xbf16, #tpu.memory_space<vmem>>, vector<1x1x24x128xbf16>
    %35 = vector.shape_cast %34 : vector<1x1x24x128xbf16> to vector<24x128xbf16>
    %c2_45 = arith.constant 2 : index
    %c0_46 = arith.constant 0 : index
    %c0_47 = arith.constant 0 : index
    %c0_48 = arith.constant 0 : index
    %36 = vector.load %arg3[%c2_45, %c0_46, %c0_47, %c0_48] : memref<5x5x128x128xbf16, #tpu.memory_space<vmem>>, vector<1x1x128x128xbf16>
    %37 = vector.shape_cast %36 : vector<1x1x128x128xbf16> to vector<128x128xbf16>
    %cst_49 = arith.constant dense<0.000000e+00> : vector<24x128xf32>
    %38 = tpu.matmul %35, %37, %cst_49 {dimension_numbers = #tpu.dot_dimension_numbers<[1], [0], [0], [1], [0, 0, 1, 1], [], []>} : vector<24x128xbf16>, vector<128x128xbf16>, vector<24x128xf32> -> vector<24x128xf32>
    %39 = arith.addf %33, %38 : vector<24x128xf32>
    %c0_50 = arith.constant 0 : index
    %c0_51 = arith.constant 0 : index
    %c12 = arith.constant 12 : index
    %c0_52 = arith.constant 0 : index
    %40 = vector.load %arg2[%c0_50, %c0_51, %c12, %c0_52] : memref<1x1x42x128xbf16, #tpu.memory_space<vmem>>, vector<1x1x24x128xbf16>
    %41 = vector.shape_cast %40 : vector<1x1x24x128xbf16> to vector<24x128xbf16>
    %c0_53 = arith.constant 0 : index
    %c4_54 = arith.constant 4 : index
    %c0_55 = arith.constant 0 : index
    %c0_56 = arith.constant 0 : index
    %42 = vector.load %arg3[%c0_53, %c4_54, %c0_55, %c0_56] : memref<5x5x128x128xbf16, #tpu.memory_space<vmem>>, vector<1x1x128x128xbf16>
    %43 = vector.shape_cast %42 : vector<1x1x128x128xbf16> to vector<128x128xbf16>
    %cst_57 = arith.constant dense<0.000000e+00> : vector<24x128xf32>
    %44 = tpu.matmul %41, %43, %cst_57 {dimension_numbers = #tpu.dot_dimension_numbers<[1], [0], [0], [1], [0, 0, 1, 1], [], []>} : vector<24x128xbf16>, vector<128x128xbf16>, vector<24x128xf32> -> vector<24x128xf32>
    %45 = arith.addf %39, %44 : vector<24x128xf32>
    %c0_58 = arith.constant 0 : index
    %c0_59 = arith.constant 0 : index
    %c13 = arith.constant 13 : index
    %c0_60 = arith.constant 0 : index
    %46 = vector.load %arg2[%c0_58, %c0_59, %c13, %c0_60] : memref<1x1x42x128xbf16, #tpu.memory_space<vmem>>, vector<1x1x24x128xbf16>
    %47 = vector.shape_cast %46 : vector<1x1x24x128xbf16> to vector<24x128xbf16>
    %c0_61 = arith.constant 0 : index
    %c2_62 = arith.constant 2 : index
    %c0_63 = arith.constant 0 : index
    %c0_64 = arith.constant 0 : index
    %48 = vector.load %arg3[%c0_61, %c2_62, %c0_63, %c0_64] : memref<5x5x128x128xbf16, #tpu.memory_space<vmem>>, vector<1x1x128x128xbf16>
    %49 = vector.shape_cast %48 : vector<1x1x128x128xbf16> to vector<128x128xbf16>
    %cst_65 = arith.constant dense<0.000000e+00> : vector<24x128xf32>
    %50 = tpu.matmul %47, %49, %cst_65 {dimension_numbers = #tpu.dot_dimension_numbers<[1], [0], [0], [1], [0, 0, 1, 1], [], []>} : vector<24x128xbf16>, vector<128x128xbf16>, vector<24x128xf32> -> vector<24x128xf32>
    %51 = arith.addf %45, %50 : vector<24x128xf32>
    %c0_66 = arith.constant 0 : index
    %c0_67 = arith.constant 0 : index
    %c14 = arith.constant 14 : index
    %c0_68 = arith.constant 0 : index
    %52 = vector.load %arg2[%c0_66, %c0_67, %c14, %c0_68] : memref<1x1x42x128xbf16, #tpu.memory_space<vmem>>, vector<1x1x24x128xbf16>
    %53 = vector.shape_cast %52 : vector<1x1x24x128xbf16> to vector<24x128xbf16>
    %c0_69 = arith.constant 0 : index
    %c0_70 = arith.constant 0 : index
    %c0_71 = arith.constant 0 : index
    %c0_72 = arith.constant 0 : index
    %54 = vector.load %arg3[%c0_69, %c0_70, %c0_71, %c0_72] : memref<5x5x128x128xbf16, #tpu.memory_space<vmem>>, vector<1x1x128x128xbf16>
    %55 = vector.shape_cast %54 : vector<1x1x128x128xbf16> to vector<128x128xbf16>
    %cst_73 = arith.constant dense<0.000000e+00> : vector<24x128xf32>
    %56 = tpu.matmul %53, %55, %cst_73 {dimension_numbers = #tpu.dot_dimension_numbers<[1], [0], [0], [1], [0, 0, 1, 1], [], []>} : vector<24x128xbf16>, vector<128x128xbf16>, vector<24x128xf32> -> vector<24x128xf32>
    %57 = arith.addf %51, %56 : vector<24x128xf32>
    %58 = vector.broadcast %3 : vector<1x128xf32> to vector<24x128xf32>
    %59 = arith.mulf %57, %58 : vector<24x128xf32>
    %cst_74 = arith.constant 4.096000e+03 : f32
    %60 = vector.broadcast %cst_74 : f32 to vector<24x128xf32>
    %61 = arith.addf %59, %60 : vector<24x128xf32>
    %cst_75 = arith.constant 8.192000e+03 : f32
    %62 = vector.broadcast %cst_75 : f32 to vector<24x128xf32>
    %63 = arith.divf %61, %62 : vector<24x128xf32>
    %64 = math.floor %63 : vector<24x128xf32>
    %cst_76 = arith.constant 0.000000e+00 : f32
    %cst_77 = arith.constant 2.550000e+02 : f32
    %65 = vector.broadcast %cst_76 : f32 to vector<24x128xf32>
    %66 = arith.maximumf %65, %64 : vector<24x128xf32>
    %67 = vector.broadcast %cst_77 : f32 to vector<24x128xf32>
    %68 = arith.minimumf %67, %66 : vector<24x128xf32>
    %cst_78 = arith.constant 3.276800e+04 : f32
    %69 = vector.broadcast %cst_78 : f32 to vector<24x128xf32>
    %70 = arith.mulf %68, %69 : vector<24x128xf32>
    %cst_79 = arith.constant 5.242880e+05 : f32
    %71 = vector.broadcast %cst_79 : f32 to vector<24x128xf32>
    %72 = arith.addf %70, %71 : vector<24x128xf32>
    %cst_80 = arith.constant 0x49800000 : f32
    %73 = vector.broadcast %cst_80 : f32 to vector<24x128xf32>
    %74 = arith.divf %72, %73 : vector<24x128xf32>
    %75 = math.floor %74 : vector<24x128xf32>
    %76 = arith.truncf %75 : vector<24x128xf32> to vector<24x128xbf16>
    %c0_81 = arith.constant 0 : index
    %c0_82 = arith.constant 0 : index
    %c0_83 = arith.constant 0 : index
    %c0_84 = arith.constant 0 : index
    %c0_85 = arith.constant 0 : index
    %77 = vector.load %arg6[%c0_81, %c0_82, %c0_83, %c0_84, %c0_85] : memref<1x1x4x24x128xbf16, #tpu.memory_space<vmem>>, vector<1x1x1x24x128xbf16>
    %78 = vector.shape_cast %77 : vector<1x1x1x24x128xbf16> to vector<24x128xbf16>
    %79 = vector.shape_cast %76 : vector<24x128xbf16> to vector<1x1x1x24x128xbf16>
    tpu.vector_store %arg6[%c0_81, %c0_82, %c0_83, %c0_84, %c0_85], %79 {strides = array<i32>} : memref<1x1x4x24x128xbf16, #tpu.memory_space<vmem>>, vector<1x1x1x24x128xbf16>,
    %c0_86 = arith.constant 0 : index
    %c0_87 = arith.constant 0 : index
    %c1_88 = arith.constant 1 : index
    %c0_89 = arith.constant 0 : index
    %80 = vector.load %arg2[%c0_86, %c0_87, %c1_88, %c0_89] : memref<1x1x42x128xbf16, #tpu.memory_space<vmem>>, vector<1x1x24x128xbf16>
    %81 = vector.shape_cast %80 : vector<1x1x24x128xbf16> to vector<24x128xbf16>
    %c4_90 = arith.constant 4 : index
    %c3 = arith.constant 3 : index
    %c0_91 = arith.constant 0 : index
    %c0_92 = arith.constant 0 : index
    %82 = vector.load %arg3[%c4_90, %c3, %c0_91, %c0_92] : memref<5x5x128x128xbf16, #tpu.memory_space<vmem>>, vector<1x1x128x128xbf16>
    %83 = vector.shape_cast %82 : vector<1x1x128x128xbf16> to vector<128x128xbf16>
    %cst_93 = arith.constant dense<0.000000e+00> : vector<24x128xf32>
    %84 = tpu.matmul %81, %83, %cst_93 {dimension_numbers = #tpu.dot_dimension_numbers<[1], [0], [0], [1], [0, 0, 1, 1], [], []>} : vector<24x128xbf16>, vector<128x128xbf16>, vector<24x128xf32> -> vector<24x128xf32>
    %85 = arith.addf %2, %84 : vector<24x128xf32>
    %c0_94 = arith.constant 0 : index
    %c0_95 = arith.constant 0 : index
    %c2_96 = arith.constant 2 : index
    %c0_97 = arith.constant 0 : index
    %86 = vector.load %arg2[%c0_94, %c0_95, %c2_96, %c0_97] : memref<1x1x42x128xbf16, #tpu.memory_space<vmem>>, vector<1x1x24x128xbf16>
    %87 = vector.shape_cast %86 : vector<1x1x24x128xbf16> to vector<24x128xbf16>
    %c4_98 = arith.constant 4 : index
    %c1_99 = arith.constant 1 : index
    %c0_100 = arith.constant 0 : index
    %c0_101 = arith.constant 0 : index
    %88 = vector.load %arg3[%c4_98, %c1_99, %c0_100, %c0_101] : memref<5x5x128x128xbf16, #tpu.memory_space<vmem>>, vector<1x1x128x128xbf16>
    %89 = vector.shape_cast %88 : vector<1x1x128x128xbf16> to vector<128x128xbf16>
    %cst_102 = arith.constant dense<0.000000e+00> : vector<24x128xf32>
    %90 = tpu.matmul %87, %89, %cst_102 {dimension_numbers = #tpu.dot_dimension_numbers<[1], [0], [0], [1], [0, 0, 1, 1], [], []>} : vector<24x128xbf16>, vector<128x128xbf16>, vector<24x128xf32> -> vector<24x128xf32>
    %91 = arith.addf %85, %90 : vector<24x128xf32>
    %c0_103 = arith.constant 0 : index
    %c0_104 = arith.constant 0 : index
    %c7_105 = arith.constant 7 : index
    %c0_106 = arith.constant 0 : index
    %92 = vector.load %arg2[%c0_103, %c0_104, %c7_105, %c0_106] : memref<1x1x42x128xbf16, #tpu.memory_space<vmem>>, vector<1x1x24x128xbf16>
    %93 = vector.shape_cast %92 : vector<1x1x24x128xbf16> to vector<24x128xbf16>
    %c2_107 = arith.constant 2 : index
    %c3_108 = arith.constant 3 : index
    %c0_109 = arith.constant 0 : index
    %c0_110 = arith.constant 0 : index
    %94 = vector.load %arg3[%c2_107, %c3_108, %c0_109, %c0_110] : memref<5x5x128x128xbf16, #tpu.memory_space<vmem>>, vector<1x1x128x128xbf16>
    %95 = vector.shape_cast %94 : vector<1x1x128x128xbf16> to vector<128x128xbf16>
    %cst_111 = arith.constant dense<0.000000e+00> : vector<24x128xf32>
    %96 = tpu.matmul %93, %95, %cst_111 {dimension_numbers = #tpu.dot_dimension_numbers<[1], [0], [0], [1], [0, 0, 1, 1], [], []>} : vector<24x128xbf16>, vector<128x128xbf16>, vector<24x128xf32> -> vector<24x128xf32>
    %97 = arith.addf %91, %96 : vector<24x128xf32>
    %c0_112 = arith.constant 0 : index
    %c0_113 = arith.constant 0 : index
    %c8_114 = arith.constant 8 : index
    %c0_115 = arith.constant 0 : index
    %98 = vector.load %arg2[%c0_112, %c0_113, %c8_114, %c0_115] : memref<1x1x42x128xbf16, #tpu.memory_space<vmem>>, vector<1x1x24x128xbf16>
    %99 = vector.shape_cast %98 : vector<1x1x24x128xbf16> to vector<24x128xbf16>
    %c2_116 = arith.constant 2 : index
    %c1_117 = arith.constant 1 : index
    %c0_118 = arith.constant 0 : index
    %c0_119 = arith.constant 0 : index
    %100 = vector.load %arg3[%c2_116, %c1_117, %c0_118, %c0_119] : memref<5x5x128x128xbf16, #tpu.memory_space<vmem>>, vector<1x1x128x128xbf16>
    %101 = vector.shape_cast %100 : vector<1x1x128x128xbf16> to vector<128x128xbf16>
    %cst_120 = arith.constant dense<0.000000e+00> : vector<24x128xf32>
    %102 = tpu.matmul %99, %101, %cst_120 {dimension_numbers = #tpu.dot_dimension_numbers<[1], [0], [0], [1], [0, 0, 1, 1], [], []>} : vector<24x128xbf16>, vector<128x128xbf16>, vector<24x128xf32> -> vector<24x128xf32>
    %103 = arith.addf %97, %102 : vector<24x128xf32>
    %c0_121 = arith.constant 0 : index
    %c0_122 = arith.constant 0 : index
    %c13_123 = arith.constant 13 : index
    %c0_124 = arith.constant 0 : index
    %104 = vector.load %arg2[%c0_121, %c0_122, %c13_123, %c0_124] : memref<1x1x42x128xbf16, #tpu.memory_space<vmem>>, vector<1x1x24x128xbf16>
    %105 = vector.shape_cast %104 : vector<1x1x24x128xbf16> to vector<24x128xbf16>
    %c0_125 = arith.constant 0 : index
    %c3_126 = arith.constant 3 : index
    %c0_127 = arith.constant 0 : index
    %c0_128 = arith.constant 0 : index
    %106 = vector.load %arg3[%c0_125, %c3_126, %c0_127, %c0_128] : memref<5x5x128x128xbf16, #tpu.memory_space<vmem>>, vector<1x1x128x128xbf16>
    %107 = vector.shape_cast %106 : vector<1x1x128x128xbf16> to vector<128x128xbf16>
    %cst_129 = arith.constant dense<0.000000e+00> : vector<24x128xf32>
    %108 = tpu.matmul %105, %107, %cst_129 {dimension_numbers = #tpu.dot_dimension_numbers<[1], [0], [0], [1], [0, 0, 1, 1], [], []>} : vector<24x128xbf16>, vector<128x128xbf16>, vector<24x128xf32> -> vector<24x128xf32>
    %109 = arith.addf %103, %108 : vector<24x128xf32>
    %c0_130 = arith.constant 0 : index
    %c0_131 = arith.constant 0 : index
    %c14_132 = arith.constant 14 : index
    %c0_133 = arith.constant 0 : index
    %110 = vector.load %arg2[%c0_130, %c0_131, %c14_132, %c0_133] : memref<1x1x42x128xbf16, #tpu.memory_space<vmem>>, vector<1x1x24x128xbf16>
    %111 = vector.shape_cast %110 : vector<1x1x24x128xbf16> to vector<24x128xbf16>
    %c0_134 = arith.constant 0 : index
    %c1_135 = arith.constant 1 : index
    %c0_136 = arith.constant 0 : index
    %c0_137 = arith.constant 0 : index
    %112 = vector.load %arg3[%c0_134, %c1_135, %c0_136, %c0_137] : memref<5x5x128x128xbf16, #tpu.memory_space<vmem>>, vector<1x1x128x128xbf16>
    %113 = vector.shape_cast %112 : vector<1x1x128x128xbf16> to vector<128x128xbf16>
    %cst_138 = arith.constant dense<0.000000e+00> : vector<24x128xf32>
    %114 = tpu.matmul %111, %113, %cst_138 {dimension_numbers = #tpu.dot_dimension_numbers<[1], [0], [0], [1], [0, 0, 1, 1], [], []>} : vector<24x128xbf16>, vector<128x128xbf16>, vector<24x128xf32> -> vector<24x128xf32>
    %115 = arith.addf %109, %114 : vector<24x128xf32>
    %116 = vector.broadcast %3 : vector<1x128xf32> to vector<24x128xf32>
    %117 = arith.mulf %115, %116 : vector<24x128xf32>
    %cst_139 = arith.constant 4.096000e+03 : f32
    %118 = vector.broadcast %cst_139 : f32 to vector<24x128xf32>
    %119 = arith.addf %117, %118 : vector<24x128xf32>
    %cst_140 = arith.constant 8.192000e+03 : f32
    %120 = vector.broadcast %cst_140 : f32 to vector<24x128xf32>
    %121 = arith.divf %119, %120 : vector<24x128xf32>
    %122 = math.floor %121 : vector<24x128xf32>
    %cst_141 = arith.constant 0.000000e+00 : f32
    %cst_142 = arith.constant 2.550000e+02 : f32
    %123 = vector.broadcast %cst_141 : f32 to vector<24x128xf32>
    %124 = arith.maximumf %123, %122 : vector<24x128xf32>
    %125 = vector.broadcast %cst_142 : f32 to vector<24x128xf32>
    %126 = arith.minimumf %125, %124 : vector<24x128xf32>
    %cst_143 = arith.constant 3.276800e+04 : f32
    %127 = vector.broadcast %cst_143 : f32 to vector<24x128xf32>
    %128 = arith.mulf %126, %127 : vector<24x128xf32>
    %cst_144 = arith.constant 5.242880e+05 : f32
    %129 = vector.broadcast %cst_144 : f32 to vector<24x128xf32>
    %130 = arith.addf %128, %129 : vector<24x128xf32>
    %cst_145 = arith.constant 0x49800000 : f32
    %131 = vector.broadcast %cst_145 : f32 to vector<24x128xf32>
    %132 = arith.divf %130, %131 : vector<24x128xf32>
    %133 = math.floor %132 : vector<24x128xf32>
    %134 = arith.truncf %133 : vector<24x128xf32> to vector<24x128xbf16>
    %c0_146 = arith.constant 0 : index
    %c0_147 = arith.constant 0 : index
    %c1_148 = arith.constant 1 : index
    %c0_149 = arith.constant 0 : index
    %c0_150 = arith.constant 0 : index
    %135 = vector.load %arg6[%c0_146, %c0_147, %c1_148, %c0_149, %c0_150] : memref<1x1x4x24x128xbf16, #tpu.memory_space<vmem>>, vector<1x1x1x24x128xbf16>
    %136 = vector.shape_cast %135 : vector<1x1x1x24x128xbf16> to vector<24x128xbf16>
    %137 = vector.shape_cast %134 : vector<24x128xbf16> to vector<1x1x1x24x128xbf16>
    tpu.vector_store %arg6[%c0_146, %c0_147, %c1_148, %c0_149, %c0_150], %137 {strides = array<i32>} : memref<1x1x4x24x128xbf16, #tpu.memory_space<vmem>>, vector<1x1x1x24x128xbf16>,
    %c0_151 = arith.constant 0 : index
    %c0_152 = arith.constant 0 : index
    %c6_153 = arith.constant 6 : index
    %c0_154 = arith.constant 0 : index
    %138 = vector.load %arg2[%c0_151, %c0_152, %c6_153, %c0_154] : memref<1x1x42x128xbf16, #tpu.memory_space<vmem>>, vector<1x1x24x128xbf16>
    %139 = vector.shape_cast %138 : vector<1x1x24x128xbf16> to vector<24x128xbf16>
    %c3_155 = arith.constant 3 : index
    %c4_156 = arith.constant 4 : index
    %c0_157 = arith.constant 0 : index
    %c0_158 = arith.constant 0 : index
    %140 = vector.load %arg3[%c3_155, %c4_156, %c0_157, %c0_158] : memref<5x5x128x128xbf16, #tpu.memory_space<vmem>>, vector<1x1x128x128xbf16>
    %141 = vector.shape_cast %140 : vector<1x1x128x128xbf16> to vector<128x128xbf16>
    %cst_159 = arith.constant dense<0.000000e+00> : vector<24x128xf32>
    %142 = tpu.matmul %139, %141, %cst_159 {dimension_numbers = #tpu.dot_dimension_numbers<[1], [0], [0], [1], [0, 0, 1, 1], [], []>} : vector<24x128xbf16>, vector<128x128xbf16>, vector<24x128xf32> -> vector<24x128xf32>
    %143 = arith.addf %2, %142 : vector<24x128xf32>
    %c0_160 = arith.constant 0 : index
    %c0_161 = arith.constant 0 : index
    %c7_162 = arith.constant 7 : index
    %c0_163 = arith.constant 0 : index
    %144 = vector.load %arg2[%c0_160, %c0_161, %c7_162, %c0_163] : memref<1x1x42x128xbf16, #tpu.memory_space<vmem>>, vector<1x1x24x128xbf16>
    %145 = vector.shape_cast %144 : vector<1x1x24x128xbf16> to vector<24x128xbf16>
    %c3_164 = arith.constant 3 : index
    %c2_165 = arith.constant 2 : index
    %c0_166 = arith.constant 0 : index
    %c0_167 = arith.constant 0 : index
    %146 = vector.load %arg3[%c3_164, %c2_165, %c0_166, %c0_167] : memref<5x5x128x128xbf16, #tpu.memory_space<vmem>>, vector<1x1x128x128xbf16>
    %147 = vector.shape_cast %146 : vector<1x1x128x128xbf16> to vector<128x128xbf16>
    %cst_168 = arith.constant dense<0.000000e+00> : vector<24x128xf32>
    %148 = tpu.matmul %145, %147, %cst_168 {dimension_numbers = #tpu.dot_dimension_numbers<[1], [0], [0], [1], [0, 0, 1, 1], [], []>} : vector<24x128xbf16>, vector<128x128xbf16>, vector<24x128xf32> -> vector<24x128xf32>
    %149 = arith.addf %143, %148 : vector<24x128xf32>
    %c0_169 = arith.constant 0 : index
    %c0_170 = arith.constant 0 : index
    %c8_171 = arith.constant 8 : index
    %c0_172 = arith.constant 0 : index
    %150 = vector.load %arg2[%c0_169, %c0_170, %c8_171, %c0_172] : memref<1x1x42x128xbf16, #tpu.memory_space<vmem>>, vector<1x1x24x128xbf16>
    %151 = vector.shape_cast %150 : vector<1x1x24x128xbf16> to vector<24x128xbf16>
    %c3_173 = arith.constant 3 : index
    %c0_174 = arith.constant 0 : index
    %c0_175 = arith.constant 0 : index
    %c0_176 = arith.constant 0 : index
    %152 = vector.load %arg3[%c3_173, %c0_174, %c0_175, %c0_176] : memref<5x5x128x128xbf16, #tpu.memory_space<vmem>>, vector<1x1x128x128xbf16>
    %153 = vector.shape_cast %152 : vector<1x1x128x128xbf16> to vector<128x128xbf16>
    %cst_177 = arith.constant dense<0.000000e+00> : vector<24x128xf32>
    %154 = tpu.matmul %151, %153, %cst_177 {dimension_numbers = #tpu.dot_dimension_numbers<[1], [0], [0], [1], [0, 0, 1, 1], [], []>} : vector<24x128xbf16>, vector<128x128xbf16>, vector<24x128xf32> -> vector<24x128xf32>
    %155 = arith.addf %149, %154 : vector<24x128xf32>
    %c0_178 = arith.constant 0 : index
    %c0_179 = arith.constant 0 : index
    %c12_180 = arith.constant 12 : index
    %c0_181 = arith.constant 0 : index
    %156 = vector.load %arg2[%c0_178, %c0_179, %c12_180, %c0_181] : memref<1x1x42x128xbf16, #tpu.memory_space<vmem>>, vector<1x1x24x128xbf16>
    %157 = vector.shape_cast %156 : vector<1x1x24x128xbf16> to vector<24x128xbf16>
    %c1_182 = arith.constant 1 : index
    %c4_183 = arith.constant 4 : index
    %c0_184 = arith.constant 0 : index
    %c0_185 = arith.constant 0 : index
    %158 = vector.load %arg3[%c1_182, %c4_183, %c0_184, %c0_185] : memref<5x5x128x128xbf16, #tpu.memory_space<vmem>>, vector<1x1x128x128xbf16>
    %159 = vector.shape_cast %158 : vector<1x1x128x128xbf16> to vector<128x128xbf16>
    %cst_186 = arith.constant dense<0.000000e+00> : vector<24x128xf32>
    %160 = tpu.matmul %157, %159, %cst_186 {dimension_numbers = #tpu.dot_dimension_numbers<[1], [0], [0], [1], [0, 0, 1, 1], [], []>} : vector<24x128xbf16>, vector<128x128xbf16>, vector<24x128xf32> -> vector<24x128xf32>
    %161 = arith.addf %155, %160 : vector<24x128xf32>
    %c0_187 = arith.constant 0 : index
    %c0_188 = arith.constant 0 : index
    %c13_189 = arith.constant 13 : index
    %c0_190 = arith.constant 0 : index
    %162 = vector.load %arg2[%c0_187, %c0_188, %c13_189, %c0_190] : memref<1x1x42x128xbf16, #tpu.memory_space<vmem>>, vector<1x1x24x128xbf16>
    %163 = vector.shape_cast %162 : vector<1x1x24x128xbf16> to vector<24x128xbf16>
    %c1_191 = arith.constant 1 : index
    %c2_192 = arith.constant 2 : index
    %c0_193 = arith.constant 0 : index
    %c0_194 = arith.constant 0 : index
    %164 = vector.load %arg3[%c1_191, %c2_192, %c0_193, %c0_194] : memref<5x5x128x128xbf16, #tpu.memory_space<vmem>>, vector<1x1x128x128xbf16>
    %165 = vector.shape_cast %164 : vector<1x1x128x128xbf16> to vector<128x128xbf16>
    %cst_195 = arith.constant dense<0.000000e+00> : vector<24x128xf32>
    %166 = tpu.matmul %163, %165, %cst_195 {dimension_numbers = #tpu.dot_dimension_numbers<[1], [0], [0], [1], [0, 0, 1, 1], [], []>} : vector<24x128xbf16>, vector<128x128xbf16>, vector<24x128xf32> -> vector<24x128xf32>
    %167 = arith.addf %161, %166 : vector<24x128xf32>
    %c0_196 = arith.constant 0 : index
    %c0_197 = arith.constant 0 : index
    %c14_198 = arith.constant 14 : index
    %c0_199 = arith.constant 0 : index
    %168 = vector.load %arg2[%c0_196, %c0_197, %c14_198, %c0_199] : memref<1x1x42x128xbf16, #tpu.memory_space<vmem>>, vector<1x1x24x128xbf16>
    %169 = vector.shape_cast %168 : vector<1x1x24x128xbf16> to vector<24x128xbf16>
    %c1_200 = arith.constant 1 : index
    %c0_201 = arith.constant 0 : index
    %c0_202 = arith.constant 0 : index
    %c0_203 = arith.constant 0 : index
    %170 = vector.load %arg3[%c1_200, %c0_201, %c0_202, %c0_203] : memref<5x5x128x128xbf16, #tpu.memory_space<vmem>>, vector<1x1x128x128xbf16>
    %171 = vector.shape_cast %170 : vector<1x1x128x128xbf16> to vector<128x128xbf16>
    %cst_204 = arith.constant dense<0.000000e+00> : vector<24x128xf32>
    %172 = tpu.matmul %169, %171, %cst_204 {dimension_numbers = #tpu.dot_dimension_numbers<[1], [0], [0], [1], [0, 0, 1, 1], [], []>} : vector<24x128xbf16>, vector<128x128xbf16>, vector<24x128xf32> -> vector<24x128xf32>
    %173 = arith.addf %167, %172 : vector<24x128xf32>
    %174 = vector.broadcast %3 : vector<1x128xf32> to vector<24x128xf32>
    %175 = arith.mulf %173, %174 : vector<24x128xf32>
    %cst_205 = arith.constant 4.096000e+03 : f32
    %176 = vector.broadcast %cst_205 : f32 to vector<24x128xf32>
    %177 = arith.addf %175, %176 : vector<24x128xf32>
    %cst_206 = arith.constant 8.192000e+03 : f32
    %178 = vector.broadcast %cst_206 : f32 to vector<24x128xf32>
    %179 = arith.divf %177, %178 : vector<24x128xf32>
    %180 = math.floor %179 : vector<24x128xf32>
    %cst_207 = arith.constant 0.000000e+00 : f32
    %cst_208 = arith.constant 2.550000e+02 : f32
    %181 = vector.broadcast %cst_207 : f32 to vector<24x128xf32>
    %182 = arith.maximumf %181, %180 : vector<24x128xf32>
    %183 = vector.broadcast %cst_208 : f32 to vector<24x128xf32>
    %184 = arith.minimumf %183, %182 : vector<24x128xf32>
    %cst_209 = arith.constant 3.276800e+04 : f32
    %185 = vector.broadcast %cst_209 : f32 to vector<24x128xf32>
    %186 = arith.mulf %184, %185 : vector<24x128xf32>
    %cst_210 = arith.constant 5.242880e+05 : f32
    %187 = vector.broadcast %cst_210 : f32 to vector<24x128xf32>
    %188 = arith.addf %186, %187 : vector<24x128xf32>
    %cst_211 = arith.constant 0x49800000 : f32
    %189 = vector.broadcast %cst_211 : f32 to vector<24x128xf32>
    %190 = arith.divf %188, %189 : vector<24x128xf32>
    %191 = math.floor %190 : vector<24x128xf32>
    %192 = arith.truncf %191 : vector<24x128xf32> to vector<24x128xbf16>
    %c0_212 = arith.constant 0 : index
    %c0_213 = arith.constant 0 : index
    %c2_214 = arith.constant 2 : index
    %c0_215 = arith.constant 0 : index
    %c0_216 = arith.constant 0 : index
    %193 = vector.load %arg6[%c0_212, %c0_213, %c2_214, %c0_215, %c0_216] : memref<1x1x4x24x128xbf16, #tpu.memory_space<vmem>>, vector<1x1x1x24x128xbf16>
    %194 = vector.shape_cast %193 : vector<1x1x1x24x128xbf16> to vector<24x128xbf16>
    %195 = vector.shape_cast %192 : vector<24x128xbf16> to vector<1x1x1x24x128xbf16>
    tpu.vector_store %arg6[%c0_212, %c0_213, %c2_214, %c0_215, %c0_216], %195 {strides = array<i32>} : memref<1x1x4x24x128xbf16, #tpu.memory_space<vmem>>, vector<1x1x1x24x128xbf16>,
    %c0_217 = arith.constant 0 : index
    %c0_218 = arith.constant 0 : index
    %c7_219 = arith.constant 7 : index
    %c0_220 = arith.constant 0 : index
    %196 = vector.load %arg2[%c0_217, %c0_218, %c7_219, %c0_220] : memref<1x1x42x128xbf16, #tpu.memory_space<vmem>>, vector<1x1x24x128xbf16>
    %197 = vector.shape_cast %196 : vector<1x1x24x128xbf16> to vector<24x128xbf16>
    %c3_221 = arith.constant 3 : index
    %c3_222 = arith.constant 3 : index
    %c0_223 = arith.constant 0 : index
    %c0_224 = arith.constant 0 : index
    %198 = vector.load %arg3[%c3_221, %c3_222, %c0_223, %c0_224] : memref<5x5x128x128xbf16, #tpu.memory_space<vmem>>, vector<1x1x128x128xbf16>
    %199 = vector.shape_cast %198 : vector<1x1x128x128xbf16> to vector<128x128xbf16>
    %cst_225 = arith.constant dense<0.000000e+00> : vector<24x128xf32>
    %200 = tpu.matmul %197, %199, %cst_225 {dimension_numbers = #tpu.dot_dimension_numbers<[1], [0], [0], [1], [0, 0, 1, 1], [], []>} : vector<24x128xbf16>, vector<128x128xbf16>, vector<24x128xf32> -> vector<24x128xf32>
    %201 = arith.addf %2, %200 : vector<24x128xf32>
    %c0_226 = arith.constant 0 : index
    %c0_227 = arith.constant 0 : index
    %c8_228 = arith.constant 8 : index
    %c0_229 = arith.constant 0 : index
    %202 = vector.load %arg2[%c0_226, %c0_227, %c8_228, %c0_229] : memref<1x1x42x128xbf16, #tpu.memory_space<vmem>>, vector<1x1x24x128xbf16>
    %203 = vector.shape_cast %202 : vector<1x1x24x128xbf16> to vector<24x128xbf16>
    %c3_230 = arith.constant 3 : index
    %c1_231 = arith.constant 1 : index
    %c0_232 = arith.constant 0 : index
    %c0_233 = arith.constant 0 : index
    %204 = vector.load %arg3[%c3_230, %c1_231, %c0_232, %c0_233] : memref<5x5x128x128xbf16, #tpu.memory_space<vmem>>, vector<1x1x128x128xbf16>
    %205 = vector.shape_cast %204 : vector<1x1x128x128xbf16> to vector<128x128xbf16>
    %cst_234 = arith.constant dense<0.000000e+00> : vector<24x128xf32>
    %206 = tpu.matmul %203, %205, %cst_234 {dimension_numbers = #tpu.dot_dimension_numbers<[1], [0], [0], [1], [0, 0, 1, 1], [], []>} : vector<24x128xbf16>, vector<128x128xbf16>, vector<24x128xf32> -> vector<24x128xf32>
    %207 = arith.addf %201, %206 : vector<24x128xf32>
    %c0_235 = arith.constant 0 : index
    %c0_236 = arith.constant 0 : index
    %c13_237 = arith.constant 13 : index
    %c0_238 = arith.constant 0 : index
    %208 = vector.load %arg2[%c0_235, %c0_236, %c13_237, %c0_238] : memref<1x1x42x128xbf16, #tpu.memory_space<vmem>>, vector<1x1x24x128xbf16>
    %209 = vector.shape_cast %208 : vector<1x1x24x128xbf16> to vector<24x128xbf16>
    %c1_239 = arith.constant 1 : index
    %c3_240 = arith.constant 3 : index
    %c0_241 = arith.constant 0 : index
    %c0_242 = arith.constant 0 : index
    %210 = vector.load %arg3[%c1_239, %c3_240, %c0_241, %c0_242] : memref<5x5x128x128xbf16, #tpu.memory_space<vmem>>, vector<1x1x128x128xbf16>
    %211 = vector.shape_cast %210 : vector<1x1x128x128xbf16> to vector<128x128xbf16>
    %cst_243 = arith.constant dense<0.000000e+00> : vector<24x128xf32>
    %212 = tpu.matmul %209, %211, %cst_243 {dimension_numbers = #tpu.dot_dimension_numbers<[1], [0], [0], [1], [0, 0, 1, 1], [], []>} : vector<24x128xbf16>, vector<128x128xbf16>, vector<24x128xf32> -> vector<24x128xf32>
    %213 = arith.addf %207, %212 : vector<24x128xf32>
    %c0_244 = arith.constant 0 : index
    %c0_245 = arith.constant 0 : index
    %c14_246 = arith.constant 14 : index
    %c0_247 = arith.constant 0 : index
    %214 = vector.load %arg2[%c0_244, %c0_245, %c14_246, %c0_247] : memref<1x1x42x128xbf16, #tpu.memory_space<vmem>>, vector<1x1x24x128xbf16>
    %215 = vector.shape_cast %214 : vector<1x1x24x128xbf16> to vector<24x128xbf16>
    %c1_248 = arith.constant 1 : index
    %c1_249 = arith.constant 1 : index
    %c0_250 = arith.constant 0 : index
    %c0_251 = arith.constant 0 : index
    %216 = vector.load %arg3[%c1_248, %c1_249, %c0_250, %c0_251] : memref<5x5x128x128xbf16, #tpu.memory_space<vmem>>, vector<1x1x128x128xbf16>
    %217 = vector.shape_cast %216 : vector<1x1x128x128xbf16> to vector<128x128xbf16>
    %cst_252 = arith.constant dense<0.000000e+00> : vector<24x128xf32>
    %218 = tpu.matmul %215, %217, %cst_252 {dimension_numbers = #tpu.dot_dimension_numbers<[1], [0], [0], [1], [0, 0, 1, 1], [], []>} : vector<24x128xbf16>, vector<128x128xbf16>, vector<24x128xf32> -> vector<24x128xf32>
    %219 = arith.addf %213, %218 : vector<24x128xf32>
    %220 = vector.broadcast %3 : vector<1x128xf32> to vector<24x128xf32>
    %221 = arith.mulf %219, %220 : vector<24x128xf32>
    %cst_253 = arith.constant 4.096000e+03 : f32
    %222 = vector.broadcast %cst_253 : f32 to vector<24x128xf32>
    %223 = arith.addf %221, %222 : vector<24x128xf32>
    %cst_254 = arith.constant 8.192000e+03 : f32
    %224 = vector.broadcast %cst_254 : f32 to vector<24x128xf32>
    %225 = arith.divf %223, %224 : vector<24x128xf32>
    %226 = math.floor %225 : vector<24x128xf32>
    %cst_255 = arith.constant 0.000000e+00 : f32
    %cst_256 = arith.constant 2.550000e+02 : f32
    %227 = vector.broadcast %cst_255 : f32 to vector<24x128xf32>
    %228 = arith.maximumf %227, %226 : vector<24x128xf32>
    %229 = vector.broadcast %cst_256 : f32 to vector<24x128xf32>
    %230 = arith.minimumf %229, %228 : vector<24x128xf32>
    %cst_257 = arith.constant 3.276800e+04 : f32
    %231 = vector.broadcast %cst_257 : f32 to vector<24x128xf32>
    %232 = arith.mulf %230, %231 : vector<24x128xf32>
    %cst_258 = arith.constant 5.242880e+05 : f32
    %233 = vector.broadcast %cst_258 : f32 to vector<24x128xf32>
    %234 = arith.addf %232, %233 : vector<24x128xf32>
    %cst_259 = arith.constant 0x49800000 : f32
    %235 = vector.broadcast %cst_259 : f32 to vector<24x128xf32>
    %236 = arith.divf %234, %235 : vector<24x128xf32>
    %237 = math.floor %236 : vector<24x128xf32>
    %238 = arith.truncf %237 : vector<24x128xf32> to vector<24x128xbf16>
    %c0_260 = arith.constant 0 : index
    %c0_261 = arith.constant 0 : index
    %c3_262 = arith.constant 3 : index
    %c0_263 = arith.constant 0 : index
    %c0_264 = arith.constant 0 : index
    %239 = vector.load %arg6[%c0_260, %c0_261, %c3_262, %c0_263, %c0_264] : memref<1x1x4x24x128xbf16, #tpu.memory_space<vmem>>, vector<1x1x1x24x128xbf16>
    %240 = vector.shape_cast %239 : vector<1x1x1x24x128xbf16> to vector<24x128xbf16>
    %241 = vector.shape_cast %238 : vector<24x128xbf16> to vector<1x1x1x24x128xbf16>
    tpu.vector_store %arg6[%c0_260, %c0_261, %c3_262, %c0_263, %c0_264], %241 {strides = array<i32>} : memref<1x1x4x24x128xbf16, #tpu.memory_space<vmem>>, vector<1x1x1x24x128xbf16>,
    return
  }
  func.func @transform_0(%arg0: i32, %arg1: i32) -> (i32, i32, i32, i32) {
    %c0_i32 = arith.constant 0 : i32
    %c0_i32_0 = arith.constant 0 : i32
    %c0_i32_1 = arith.constant 0 : i32
    return %arg0, %arg1, %c0_i32, %c0_i32_0 : i32, i32, i32, i32
  }
  func.func @transform_1(%arg0: i32, %arg1: i32) -> (i32, i32, i32, i32) {
    %c0_i32 = arith.constant 0 : i32
    %c0_i32_0 = arith.constant 0 : i32
    %c0_i32_1 = arith.constant 0 : i32
    %c0_i32_2 = arith.constant 0 : i32
    %c0_i32_3 = arith.constant 0 : i32
    return %c0_i32, %c0_i32_0, %c0_i32_1, %c0_i32_2 : i32, i32, i32, i32
  }
  func.func @transform_2(%arg0: i32, %arg1: i32) -> (i32, i32) {
    %c0_i32 = arith.constant 0 : i32
    %c0_i32_0 = arith.constant 0 : i32
    %c0_i32_1 = arith.constant 0 : i32
    return %c0_i32, %c0_i32_0 : i32, i32
  }
  func.func @transform_3(%arg0: i32, %arg1: i32) -> (i32, i32) {
    %c0_i32 = arith.constant 0 : i32
    %c0_i32_0 = arith.constant 0 : i32
    %c0_i32_1 = arith.constant 0 : i32
    return %c0_i32, %c0_i32_0 : i32, i32
  }
  func.func @transform_4(%arg0: i32, %arg1: i32) -> (i32, i32, i32, i32, i32) {
    %c0_i32 = arith.constant 0 : i32
    %c0_i32_0 = arith.constant 0 : i32
    %c0_i32_1 = arith.constant 0 : i32
    %c0_i32_2 = arith.constant 0 : i32
    return %arg0, %arg1, %c0_i32, %c0_i32_0, %c0_i32_1 : i32, i32, i32, i32, i32
  }
}

</mosaic_0001>

<llo_original>
// kernel: tpu_custom_call.1
$region0: #{tpu_custom_call.1}
  #allocation0 [shape = 'u32[]', space=smem, size = 0x4, offset = 0x4, fixed_abs, tag = 'smem constant byte address 0x4 - core index']
  #allocation1 [shape = 'u32[144,128]{1,0:T(1,128)}', space=vmem, size = 0x12000, scoped, tag = 'internal scratch']
  %s0 = inlined_call_operand.hbm [shape: f32[16,256], index: 0, kind: input, shape index: {}]
  %s1 = inlined_call_operand.hbm [shape: f32[8,128], index: 1, kind: input, shape index: {}]
  %s2 = inlined_call_operand.hbm [shape: f32[16,256], index: 2, kind: output, shape index: {}]
  %s3 = sld [smem:[#allocation0]]
  $region49: #{tpu_custom_call.1} parent=0
    _
  %s5 = ssub.s32 1, %s3
  %s6 = scalar_select 0, %s5, %s3
  $region1: #{tpu_custom_call.1} parent=0
    #allocation2 [shape = 'u8[8192]{0}', space=vmem, size = 0x2000, scoped, tag = 'input window, operand 0']
    #allocation3 [shape = 's32[2]{0}', space=sflag, size = 0x8, scoped, tag = 'scoped memory for tpu_custom_call.1']
    #allocation4 [shape = 's32[2]{0}', space=sflag, size = 0x8, scoped, tag = 'scoped memory for tpu_custom_call.1']
    #allocation5 [shape = 'u8[4096]{0}', space=vmem, size = 0x1000, scoped, tag = 'input window, operand 1, single buffered']
    #allocation6 [shape = 's32[1]{0}', space=sflag, size = 0x4, scoped, tag = 'scoped memory for tpu_custom_call.1']
    #allocation7 [shape = 'u8[8192]{0}', space=vmem, size = 0x2000, scoped, tag = 'output window, operand 0']
    %7 = vsyncpa [#allocation3], 0
    %s8 = scalar_lea.sflag [#allocation3], 1
    %9 = vsyncpa %s8, 0
    %10 = vsyncpa [#allocation6], 0
    %11 = vsyncpa [#allocation4], 0
    %s12 = scalar_lea.sflag [#allocation4], 1
    %13 = vsyncpa %s12, 0
    loop: start=0, step=1, limit=6
    $region2: #{tpu_custom_call.1} parent=1 // loop_pre_header
      _
    $region3: #{tpu_custom_call.1} parent=1 // loop_header
      %s15 = sphi 0, %s19
      %p16 = scmp.ge.s32.totalorder %s15, 6
      %s22 = sphi 0, %s34
      %s23 = sphi 0, %s30
      %s24 = sphi 0, %s22
      %s25 = sphi 0, %s23
      %s26 = sphi 0, %s24
      %s27 = sphi 0, %s25
      %s39 = sphi 0, %s41
      %s42 = sphi 0, %s39
      %s43 = sphi 0, %s42
      %s59 = sphi 0, %s43
      %s63 = sphi 0, %s63
      %s65 = sphi 0, %s63
      %s66 = sphi 0, %s65
      %s80 = sphi 0, %s66
      %s88 = sphi 0, %s90
      %s91 = sphi 0, %s88
      %s92 = sphi 0, %s91
      %s108 = sphi 0, %s92
    $region4: #{tpu_custom_call.1} parent=1 // loop_header_branch
      %18 = sbr.rel (%p16) target = $region8
    $region5: #{tpu_custom_call.1} parent=1 // loop_body
      %s20 = ssub.s32 %s15, 1
      %s21 = ssub.s32 %s15, 2
      %s28 = sadd.s32 1, %s23
      %p29 = scmp.ge.s32.totalorder %s28, 2
      %s30 = scalar_select %p29, 0, %s28
      %s31 = sadd.s32 1, %s22
      %s32 = scalar_select %p29, %s31, %s22
      %p33 = scmp.ge.s32.totalorder %s32, 2
      %s34 = scalar_select %p33, 0, %s32
      %s35 = ssub.s32 %s22, %s34
      %s36 = ssub.s32 %s23, %s30
      %s37 = sor.u32 %s35, %s36
      %p38 = scmp.eq.s32.totalorder %s37, 0
      %s40 = sadd.s32 %s39, 1
      %s41 = scalar_select %p38, %s39, %s40
      %p44 = pneg %p38
      %p45 = scmp.eq.s32.totalorder %s15, 3
      %p46 = por %p44, %p45
      %p47 = scmp.ne.s32.totalorder %s39, %s42
      %p48 = scmp.eq.s32.totalorder %s15, 0
      %p49 = por %p47, %p48
      %p50 = scmp.ne.s32.totalorder %s39, %s42
      %p51 = scmp.eq.s32.totalorder %s20, 3
      %p52 = por %p50, %p51
      %p53 = scmp.ne.s32.totalorder %s42, %s43
      %p54 = scmp.eq.s32.totalorder %s20, 0
      %p55 = por %p53, %p54
      %p56 = scmp.ne.s32.totalorder %s42, %s43
      %p57 = scmp.eq.s32.totalorder %s21, 3
      %p58 = por %p56, %p57
      %p60 = scmp.ne.s32.totalorder %s43, %s59
      %p61 = scmp.eq.s32.totalorder %s21, 0
      %p62 = por %p60, %p61
      %s64 = sadd.s32 %s63, 1
      %p67 = scmp.eq.s32.totalorder %s15, 3
      %p68 = scmp.ne.s32.totalorder %s63, %s65
      %p69 = scmp.eq.s32.totalorder %s15, 0
      %p70 = por %p68, %p69
      %p71 = scmp.ne.s32.totalorder %s63, %s65
      %p72 = scmp.eq.s32.totalorder %s20, 3
      %p73 = por %p71, %p72
      %p74 = scmp.ne.s32.totalorder %s65, %s66
      %p75 = scmp.eq.s32.totalorder %s20, 0
      %p76 = por %p74, %p75
      %p77 = scmp.ne.s32.totalorder %s65, %s66
      %p78 = scmp.eq.s32.totalorder %s21, 3
      %p79 = por %p77, %p78
      %p81 = scmp.ne.s32.totalorder %s66, %s80
      %p82 = scmp.eq.s32.totalorder %s21, 0
      %p83 = por %p81, %p82
      %s84 = ssub.s32 %s22, %s34
      %s85 = ssub.s32 %s23, %s30
      %s86 = sor.u32 %s84, %s85
      %p87 = scmp.eq.s32.totalorder %s86, 0
      %s89 = sadd.s32 %s88, 1
      %s90 = scalar_select %p87, %s88, %s89
      %p93 = pneg %p87
      %p94 = scmp.eq.s32.totalorder %s15, 3
      %p95 = por %p93, %p94
      %p96 = scmp.ne.s32.totalorder %s88, %s91
      %p97 = scmp.eq.s32.totalorder %s15, 0
      %p98 = por %p96, %p97
      %p99 = scmp.ne.s32.totalorder %s88, %s91
      %p100 = scmp.eq.s32.totalorder %s20, 3
      %p101 = por %p99, %p100
      %p102 = scmp.ne.s32.totalorder %s91, %s92
      %p103 = scmp.eq.s32.totalorder %s20, 0
      %p104 = por %p102, %p103
      %p105 = scmp.ne.s32.totalorder %s91, %s92
      %p106 = scmp.eq.s32.totalorder %s21, 3
      %p107 = por %p105, %p106
      %p109 = scmp.ne.s32.totalorder %s92, %s108
      %p110 = scmp.eq.s32.totalorder %s21, 0
      %p111 = por %p109, %p110
      %p112 = scmp.le.s32.totalorder 1, %s15
      %p113 = scmp.lt.s32.totalorder %s15, 5
      %p114 = pnand %p112, %p113
      %p115 = pneg %p114
      // Predicated region
      $region9: #{tpu_custom_call.1} parent=5 // pred_check
        _
      $region10: #{tpu_custom_call.1} parent=5 // pred_check_branch
        %117 = sbr.rel (%p114) target = $region12
      $region11: #{tpu_custom_call.1} parent=5 // pred_region
        %s118 = ssub.s32 %s15, 1
        // Predicated region
        $region13: #{tpu_custom_call.1} parent=11 // pred_check
          %p119 = pneg %p76
        $region14: #{tpu_custom_call.1} parent=11 // pred_check_branch
          %121 = sbr.rel (%p119) target = $region16
        $region15: #{tpu_custom_call.1} parent=11 // pred_region
          %s123 = ssub.s32 128, 128
          %124 = vsyncadd [#allocation6], %s123
          %s126 = sshll.u32 [#allocation5], 4
          %s127 = int_to_ptr.vmem [resolvable:$true] %s126
          %129 = dma.hbm_to_vmem [thread:$0]  %s1, 128, %s127, [#allocation6]
        $region16: #{tpu_custom_call.1} parent=11 // pred_fallthru
          _
      $region12: #{tpu_custom_call.1} parent=5 // pred_fallthru
        _
      %p130 = scmp.lt.s32.totalorder %s15, 4
      // Predicated region
      $region17: #{tpu_custom_call.1} parent=5 // pred_check
        %p131 = pneg %p130
      $region18: #{tpu_custom_call.1} parent=5 // pred_check_branch
        %133 = sbr.rel (%p131) target = $region20
      $region19: #{tpu_custom_call.1} parent=5 // pred_region
        // Predicated region
        $region21: #{tpu_custom_call.1} parent=19 // pred_check
          %p134 = pneg %p49
        $region22: #{tpu_custom_call.1} parent=19 // pred_check_branch
          %136 = sbr.rel (%p134) target = $region24
        $region23: #{tpu_custom_call.1} parent=19 // pred_region
          %s137 = sand.u32 %s39, 1
          %s138 = scalar_lea.sflag [#allocation3], %s137
          %s139 = sand.u32 %s39, 1
          %s140 = smul.addr %s139, 8
          %s141 = scalar_lea.vmem [#allocation2], %s140
          %s143 = ssub.s32 128, 128
          %144 = vsyncadd %s138, %s143
          %s145 = smul.addr %s22, 2
          %s146 = sadd.s32 %s23, %s145
          %s147 = smul.addr %s146, 128
          %s148 = scalar_lea.hbm %s0, %s147
          %s150 = sshll.u32 %s141, 4
          %s151 = int_to_ptr.vmem [resolvable:$true] %s150
          %153 = dma.hbm_to_vmem [thread:$0]  %s148, 128, %s151, %s138
        $region24: #{tpu_custom_call.1} parent=19 // pred_fallthru
          _
      $region20: #{tpu_custom_call.1} parent=5 // pred_fallthru
        _
      %p154 = scmp.le.s32.totalorder 1, %s15
      %p155 = scmp.lt.s32.totalorder %s15, 5
      %p156 = pnand %p154, %p155
      %p157 = pneg %p156
      // Predicated region
      $region25: #{tpu_custom_call.1} parent=5 // pred_check
        _
      $region26: #{tpu_custom_call.1} parent=5 // pred_check_branch
        %159 = sbr.rel (%p156) target = $region28
      $region27: #{tpu_custom_call.1} parent=5 // pred_region
        %s160 = ssub.s32 %s15, 1
        %s161 = sand.u32 %s42, 1
        %s162 = scalar_lea.sflag [#allocation3], %s161
        %s163 = sand.u32 %s42, 1
        %s164 = smul.addr %s163, 8
        %s165 = scalar_lea.vmem [#allocation2], %s164
        // Predicated region
        $region29: #{tpu_custom_call.1} parent=27 // pred_check
          %p166 = pneg %p55
        $region30: #{tpu_custom_call.1} parent=27 // pred_check_branch
          %168 = sbr.rel (%p166) target = $region32
        $region31: #{tpu_custom_call.1} parent=27 // pred_region
          %169 = dma.done %s162, 128
        $region32: #{tpu_custom_call.1} parent=27 // pred_fallthru
          _
        // Predicated region
        $region33: #{tpu_custom_call.1} parent=27 // pred_check
          %p170 = pneg %p76
        $region34: #{tpu_custom_call.1} parent=27 // pred_check_branch
          %172 = sbr.rel (%p170) target = $region36
        $region35: #{tpu_custom_call.1} parent=27 // pred_region
          %173 = dma.done [#allocation6], 128
        $region36: #{tpu_custom_call.1} parent=27 // pred_fallthru
          _
        %s174 = sand.u32 %s42, 1
        %s175 = scalar_lea.sflag [#allocation3], %s174
        %s176 = sand.u32 %s42, 1
        %s177 = smul.addr %s176, 8
        %s178 = scalar_lea.vmem [#allocation2], %s177
        %p179 = pneg %p55
        %p180 = pneg %p52
        %p181 = pneg %p76
        %p182 = pneg %p73
        %p183 = pneg %p104
        %p184 = pneg %p101
        %s185 = sand.u32 %s91, 1
        %s186 = scalar_lea.sflag [#allocation4], %s185
        %s187 = sand.u32 %s91, 1
        %s188 = smul.addr %s187, 8
        %s189 = scalar_lea.vmem [#allocation7], %s188
        %v190 = vld [vmem:[%s165] sm:$0xff]
        %v191 = vld [vmem:[#allocation5] sm:$0xff]
        %v192 = vadd.f32 %v190, %v191
        %193 = vst [vmem:[%s189] sm:$0xff] %v192
        %s194 = sand.u32 %s91, 1
        %s195 = scalar_lea.sflag [#allocation4], %s194
        %s196 = sand.u32 %s91, 1
        %s197 = smul.addr %s196, 8
        %s198 = scalar_lea.vmem [#allocation7], %s197
        // Predicated region
        $region37: #{tpu_custom_call.1} parent=27 // pred_check
          %p199 = pneg %p101
        $region38: #{tpu_custom_call.1} parent=27 // pred_check_branch
          %201 = sbr.rel (%p199) target = $region40
        $region39: #{tpu_custom_call.1} parent=27 // pred_region
          %s203 = ssub.s32 128, 128
          %204 = vsyncadd %s195, %s203
          %s205 = smul.addr %s24, 2
          %s206 = sadd.s32 %s25, %s205
          %s207 = smul.addr %s206, 128
          %s208 = scalar_lea.hbm %s2, %s207
          %s210 = sshll.u32 %s198, 4
          %s211 = int_to_ptr.vmem [resolvable:$true] %s210
          %213 = dma.vmem_to_hbm [thread:$0]  %s211, 128, %s208, %s195
        $region40: #{tpu_custom_call.1} parent=27 // pred_fallthru
          _
      $region28: #{tpu_custom_call.1} parent=5 // pred_fallthru
        _
      %p214 = scmp.le.s32.totalorder 2, %s15
      // Predicated region
      $region41: #{tpu_custom_call.1} parent=5 // pred_check
        %p215 = pneg %p214
      $region42: #{tpu_custom_call.1} parent=5 // pred_check_branch
        %217 = sbr.rel (%p215) target = $region44
      $region43: #{tpu_custom_call.1} parent=5 // pred_region
        %s218 = ssub.s32 %s15, 2
        // Predicated region
        $region45: #{tpu_custom_call.1} parent=43 // pred_check
          %p219 = pneg %p107
        $region46: #{tpu_custom_call.1} parent=43 // pred_check_branch
          %221 = sbr.rel (%p219) target = $region48
        $region47: #{tpu_custom_call.1} parent=43 // pred_region
          %s222 = sand.u32 %s92, 1
          %s223 = scalar_lea.sflag [#allocation4], %s222
          %s224 = sand.u32 %s92, 1
          %s225 = smul.addr %s224, 8
          %s226 = scalar_lea.vmem [#allocation7], %s225
          %227 = dma.done %s223, 128
        $region48: #{tpu_custom_call.1} parent=43 // pred_fallthru
          _
      $region44: #{tpu_custom_call.1} parent=5 // pred_fallthru
        _
    $region6: #{tpu_custom_call.1} parent=1 // loop_footer
      %s19 = sadd.s32 1, %s15
    $region7: #{tpu_custom_call.1} parent=1 // loop_footer_branch
      %14 = sbr.rel target = $region3
    $region8: #{tpu_custom_call.1} parent=1 // loop_exit
      _
    %228 = vsyncpa [#allocation3], 1
    %s229 = scalar_lea.sflag [#allocation3], 1
    %230 = vsyncpa %s229, 1
    %231 = vsyncpa [#allocation6], 1
    %232 = vsyncpa [#allocation4], 1
    %s233 = scalar_lea.sflag [#allocation4], 1
    %234 = vsyncpa %s233, 1

// kernel: tpu_custom_call.1
$region0: #{tpu_custom_call.1}
  #allocation0 [shape = 'u32[]', space=smem, size = 0x4, offset = 0x4, fixed_abs, tag = 'smem constant byte address 0x4 - core index']
  #allocation1 [shape = 'u32[144,128]{1,0:T(1,128)}', space=vmem, size = 0x12000, scoped, tag = 'internal scratch']
  %s0 = inlined_call_operand.vmem [shape: bf16[2,1,42,128], index: 0, kind: input, shape index: {}]
  %s1 = inlined_call_operand.hbm [shape: bf16[5,5,128,128], index: 1, kind: input, shape index: {}]
  %s2 = inlined_call_operand.vmem [shape: f32[1,128], index: 2, kind: input, shape index: {}]
  %s3 = inlined_call_operand.vmem [shape: f32[1,128], index: 3, kind: input, shape index: {}]
  %s4 = inlined_call_operand.hbm [shape: bf16[2,1,4,24,128], index: 4, kind: output, shape index: {}]
  %s5 = sld [smem:[#allocation0]]
  $region53: #{tpu_custom_call.1} parent=0
    _
  %s7 = ssub.s32 1, %s5
  %s8 = scalar_select 0, %s7, %s5
  $region1: #{tpu_custom_call.1} parent=0
    #allocation2 [shape = 'u8[819200]{0}', space=vmem, size = 0xc8000, scoped, tag = 'input window, operand 1, single buffered']
    #allocation3 [shape = 's32[2]{0}', space=sflag, size = 0x8, scoped, tag = 'scoped memory for tpu_custom_call.1']
    #allocation4 [shape = 's32[2]{0}', space=sflag, size = 0x8, scoped, tag = 'scoped memory for tpu_custom_call.1']
    #allocation5 [shape = 'u8[49152]{0}', space=vmem, size = 0xc000, scoped, tag = 'output window, operand 0']
    %9 = vsyncpa [#allocation3], 0
    %10 = vsyncpa [#allocation4], 0
    %s11 = scalar_lea.sflag [#allocation4], 1
    %12 = vsyncpa %s11, 0
    loop: start=0, step=1, limit=4
    $region2: #{tpu_custom_call.1} parent=1 // loop_pre_header
      _
    $region3: #{tpu_custom_call.1} parent=1 // loop_header
      %s14 = sphi 0, %s18
      %p15 = scmp.ge.s32.totalorder %s14, 4
      %s21 = sphi 0, %s33
      %s22 = sphi 0, %s29
      %s23 = sphi 0, %s21
      %s24 = sphi 0, %s22
      %s25 = sphi 0, %s23
      %s26 = sphi 0, %s24
      %s38 = sphi 0, %s40
      %s41 = sphi 0, %s38
      %s42 = sphi 0, %s41
      %s58 = sphi 0, %s42
      %s62 = sphi 0, %s62
      %s64 = sphi 0, %s62
      %s65 = sphi 0, %s64
      %s79 = sphi 0, %s65
      %s83 = sphi 0, %s83
      %s85 = sphi 0, %s83
      %s86 = sphi 0, %s85
      %s100 = sphi 0, %s86
      %s104 = sphi 0, %s104
      %s106 = sphi 0, %s104
      %s107 = sphi 0, %s106
      %s121 = sphi 0, %s107
      %s129 = sphi 0, %s131
      %s132 = sphi 0, %s129
      %s133 = sphi 0, %s132
      %s149 = sphi 0, %s133
    $region4: #{tpu_custom_call.1} parent=1 // loop_header_branch
      %17 = sbr.rel (%p15) target = $region8
    $region5: #{tpu_custom_call.1} parent=1 // loop_body
      %s19 = ssub.s32 %s14, 1
      %s20 = ssub.s32 %s14, 2
      %s27 = sadd.s32 1, %s22
      %p28 = scmp.ge.s32.totalorder %s27, 1
      %s29 = scalar_select %p28, 0, %s27
      %s30 = sadd.s32 1, %s21
      %s31 = scalar_select %p28, %s30, %s21
      %p32 = scmp.ge.s32.totalorder %s31, 2
      %s33 = scalar_select %p32, 0, %s31
      %s34 = ssub.s32 %s21, %s33
      %s35 = ssub.s32 %s22, %s29
      %s36 = sor.u32 %s34, %s35
      %p37 = scmp.eq.s32.totalorder %s36, 0
      %s39 = sadd.s32 %s38, 1
      %s40 = scalar_select %p37, %s38, %s39
      %p43 = pneg %p37
      %p44 = scmp.eq.s32.totalorder %s14, 1
      %p45 = por %p43, %p44
      %p46 = scmp.ne.s32.totalorder %s38, %s41
      %p47 = scmp.eq.s32.totalorder %s14, 0
      %p48 = por %p46, %p47
      %p49 = scmp.ne.s32.totalorder %s38, %s41
      %p50 = scmp.eq.s32.totalorder %s19, 1
      %p51 = por %p49, %p50
      %p52 = scmp.ne.s32.totalorder %s41, %s42
      %p53 = scmp.eq.s32.totalorder %s19, 0
      %p54 = por %p52, %p53
      %p55 = scmp.ne.s32.totalorder %s41, %s42
      %p56 = scmp.eq.s32.totalorder %s20, 1
      %p57 = por %p55, %p56
      %p59 = scmp.ne.s32.totalorder %s42, %s58
      %p60 = scmp.eq.s32.totalorder %s20, 0
      %p61 = por %p59, %p60
      %s63 = sadd.s32 %s62, 1
      %p66 = scmp.eq.s32.totalorder %s14, 1
      %p67 = scmp.ne.s32.totalorder %s62, %s64
      %p68 = scmp.eq.s32.totalorder %s14, 0
      %p69 = por %p67, %p68
      %p70 = scmp.ne.s32.totalorder %s62, %s64
      %p71 = scmp.eq.s32.totalorder %s19, 1
      %p72 = por %p70, %p71
      %p73 = scmp.ne.s32.totalorder %s64, %s65
      %p74 = scmp.eq.s32.totalorder %s19, 0
      %p75 = por %p73, %p74
      %p76 = scmp.ne.s32.totalorder %s64, %s65
      %p77 = scmp.eq.s32.totalorder %s20, 1
      %p78 = por %p76, %p77
      %p80 = scmp.ne.s32.totalorder %s65, %s79
      %p81 = scmp.eq.s32.totalorder %s20, 0
      %p82 = por %p80, %p81
      %s84 = sadd.s32 %s83, 1
      %p87 = scmp.eq.s32.totalorder %s14, 1
      %p88 = scmp.ne.s32.totalorder %s83, %s85
      %p89 = scmp.eq.s32.totalorder %s14, 0
      %p90 = por %p88, %p89
      %p91 = scmp.ne.s32.totalorder %s83, %s85
      %p92 = scmp.eq.s32.totalorder %s19, 1
      %p93 = por %p91, %p92
      %p94 = scmp.ne.s32.totalorder %s85, %s86
      %p95 = scmp.eq.s32.totalorder %s19, 0
      %p96 = por %p94, %p95
      %p97 = scmp.ne.s32.totalorder %s85, %s86
      %p98 = scmp.eq.s32.totalorder %s20, 1
      %p99 = por %p97, %p98
      %p101 = scmp.ne.s32.totalorder %s86, %s100
      %p102 = scmp.eq.s32.totalorder %s20, 0
      %p103 = por %p101, %p102
      %s105 = sadd.s32 %s104, 1
      %p108 = scmp.eq.s32.totalorder %s14, 1
      %p109 = scmp.ne.s32.totalorder %s104, %s106
      %p110 = scmp.eq.s32.totalorder %s14, 0
      %p111 = por %p109, %p110
      %p112 = scmp.ne.s32.totalorder %s104, %s106
      %p113 = scmp.eq.s32.totalorder %s19, 1
      %p114 = por %p112, %p113
      %p115 = scmp.ne.s32.totalorder %s106, %s107
      %p116 = scmp.eq.s32.totalorder %s19, 0
      %p117 = por %p115, %p116
      %p118 = scmp.ne.s32.totalorder %s106, %s107
      %p119 = scmp.eq.s32.totalorder %s20, 1
      %p120 = por %p118, %p119
      %p122 = scmp.ne.s32.totalorder %s107, %s121
      %p123 = scmp.eq.s32.totalorder %s20, 0
      %p124 = por %p122, %p123
      %s125 = ssub.s32 %s21, %s33
      %s126 = ssub.s32 %s22, %s29
      %s127 = sor.u32 %s125, %s126
      %p128 = scmp.eq.s32.totalorder %s127, 0
      %s130 = sadd.s32 %s129, 1
      %s131 = scalar_select %p128, %s129, %s130
      %p134 = pneg %p128
      %p135 = scmp.eq.s32.totalorder %s14, 1
      %p136 = por %p134, %p135
      %p137 = scmp.ne.s32.totalorder %s129, %s132
      %p138 = scmp.eq.s32.totalorder %s14, 0
      %p139 = por %p137, %p138
      %p140 = scmp.ne.s32.totalorder %s129, %s132
      %p141 = scmp.eq.s32.totalorder %s19, 1
      %p142 = por %p140, %p141
      %p143 = scmp.ne.s32.totalorder %s132, %s133
      %p144 = scmp.eq.s32.totalorder %s19, 0
      %p145 = por %p143, %p144
      %p146 = scmp.ne.s32.totalorder %s132, %s133
      %p147 = scmp.eq.s32.totalorder %s20, 1
      %p148 = por %p146, %p147
      %p150 = scmp.ne.s32.totalorder %s133, %s149
      %p151 = scmp.eq.s32.totalorder %s20, 0
      %p152 = por %p150, %p151
      %p153 = scmp.le.s32.totalorder 1, %s14
      %p154 = scmp.lt.s32.totalorder %s14, 3
      %p155 = pnand %p153, %p154
      %p156 = pneg %p155
      // Predicated region
      $region9: #{tpu_custom_call.1} parent=5 // pred_check
        _
      $region10: #{tpu_custom_call.1} parent=5 // pred_check_branch
        %158 = sbr.rel (%p155) target = $region12
      $region11: #{tpu_custom_call.1} parent=5 // pred_region
        %s159 = ssub.s32 %s14, 1
        // Predicated region
        $region13: #{tpu_custom_call.1} parent=11 // pred_check
          %p160 = pneg %p75
        $region14: #{tpu_custom_call.1} parent=11 // pred_check_branch
          %162 = sbr.rel (%p160) target = $region16
        $region15: #{tpu_custom_call.1} parent=11 // pred_region
          %s164 = ssub.s32 25600, 25600
          %165 = vsyncadd [#allocation3], %s164
          %s166 = sshll.u32 [#allocation2], 4
          %s167 = int_to_ptr.vmem [resolvable:$true] %s166
          %172 = dma.hbm_to_vmem [thread:$0]  %s1, 25600, %s167, [#allocation3], 64, 64, 4
        $region16: #{tpu_custom_call.1} parent=11 // pred_fallthru
          _
        // Predicated region
        $region17: #{tpu_custom_call.1} parent=11 // pred_check
          %p173 = pneg %p96
        $region18: #{tpu_custom_call.1} parent=11 // pred_check_branch
          %175 = sbr.rel (%p173) target = $region20
        $region19: #{tpu_custom_call.1} parent=11 // pred_region
          _
        $region20: #{tpu_custom_call.1} parent=11 // pred_fallthru
          _
        // Predicated region
        $region21: #{tpu_custom_call.1} parent=11 // pred_check
          %p176 = pneg %p117
        $region22: #{tpu_custom_call.1} parent=11 // pred_check_branch
          %178 = sbr.rel (%p176) target = $region24
        $region23: #{tpu_custom_call.1} parent=11 // pred_region
          _
        $region24: #{tpu_custom_call.1} parent=11 // pred_fallthru
          _
      $region12: #{tpu_custom_call.1} parent=5 // pred_fallthru
        _
      %p179 = scmp.lt.s32.totalorder %s14, 2
      // Predicated region
      $region25: #{tpu_custom_call.1} parent=5 // pred_check
        %p180 = pneg %p179
      $region26: #{tpu_custom_call.1} parent=5 // pred_check_branch
        %182 = sbr.rel (%p180) target = $region28
      $region27: #{tpu_custom_call.1} parent=5 // pred_region
        // Predicated region
        $region29: #{tpu_custom_call.1} parent=27 // pred_check
          %p183 = pneg %p48
        $region30: #{tpu_custom_call.1} parent=27 // pred_check_branch
          %185 = sbr.rel (%p183) target = $region32
        $region31: #{tpu_custom_call.1} parent=27 // pred_region
          %p186 = scmp.lt.s32.totalorder %s21, 1
          %s187 = scalar_select %p186, %s21, 1
          %p188 = scmp.lt.s32.totalorder %s22, 0
          %s189 = scalar_select %p188, %s22, 0
          %s190 = smul.addr %s189, 6
          %s191 = smul.addr %s187, 6
          %s192 = sadd.s32 %s190, %s191
          %s193 = smul.addr %s192, 4
          %s194 = scalar_lea.vmem %s0, %s193
        $region32: #{tpu_custom_call.1} parent=27 // pred_fallthru
          _
      $region28: #{tpu_custom_call.1} parent=5 // pred_fallthru
        _
      %p195 = scmp.le.s32.totalorder 1, %s14
      %p196 = scmp.lt.s32.totalorder %s14, 3
      %p197 = pnand %p195, %p196
      %p198 = pneg %p197
      // Predicated region
      $region33: #{tpu_custom_call.1} parent=5 // pred_check
        _
      $region34: #{tpu_custom_call.1} parent=5 // pred_check_branch
        %200 = sbr.rel (%p197) target = $region36
      $region35: #{tpu_custom_call.1} parent=5 // pred_region
        %s201 = ssub.s32 %s14, 1
        // Predicated region
        $region37: #{tpu_custom_call.1} parent=35 // pred_check
          %p202 = pneg %p75
        $region38: #{tpu_custom_call.1} parent=35 // pred_check_branch
          %204 = sbr.rel (%p202) target = $region40
        $region39: #{tpu_custom_call.1} parent=35 // pred_region
          %205 = dma.done [#allocation3], 25600
        $region40: #{tpu_custom_call.1} parent=35 // pred_fallthru
          _
        %p206 = scmp.lt.s32.totalorder %s23, 1
        %s207 = scalar_select %p206, %s23, 1
        %p208 = scmp.lt.s32.totalorder %s24, 0
        %s209 = scalar_select %p208, %s24, 0
        %s210 = smul.addr %s209, 6
        %s211 = smul.addr %s207, 6
        %s212 = sadd.s32 %s210, %s211
        %s213 = smul.addr %s212, 4
        %s214 = scalar_lea.vmem %s0, %s213
        %p215 = pneg %p54
        %p216 = pneg %p51
        %p217 = pneg %p75
        %p218 = pneg %p72
        %p219 = pneg %p96
        %p220 = pneg %p93
        %p221 = pneg %p117
        %p222 = pneg %p114
        %p223 = pneg %p145
        %p224 = pneg %p142
        %s225 = sand.u32 %s132, 1
        %s226 = scalar_lea.sflag [#allocation4], %s225
        %s227 = sand.u32 %s132, 1
        %s228 = smul.addr %s227, 48
        %s229 = scalar_lea.vmem [#allocation5], %s228
        %p230 = scmp.lt.s32.totalorder %s23, 1
        %s231 = scalar_select %p230, %s23, 1
        %p232 = scmp.lt.s32.totalorder %s24, 0
        %s233 = scalar_select %p232, %s24, 0
        %s234 = smul.addr %s233, 6
        %s235 = smul.addr %s231, 6
        %s236 = sadd.s32 %s234, %s235
        %s237 = smul.addr %s236, 4
        %s238 = scalar_lea.vmem %s0, %s237
        %v240 = vld [vmem:[%s2] sm:$0x1]
        %v242 = vlaneseq
        %v243 = vshrl.u32 %v242, 7
        %v244 = vsub.s32 0, %v243
        %v245 = vrot.slane %v240, %v244
        %v247 = vld [vmem:[%s3] sm:$0x1]
        %v248 = vld [vmem:[%s238] sm:$0xf]
        %v249 = vld [vmem:[%s238 + $0x4] sm:$0xf]
        %v250 = vld [vmem:[%s238 + $0x8] sm:$0xf]
        %s251 = scalar_lea.vmem [#allocation2], 1536
        %v252 = vld [vmem:[%s251] sm:$0xf]
        %v253 = vld [vmem:[%s251 + $0x4] sm:$0xf]
        %v254 = vld [vmem:[%s251 + $0x8] sm:$0xf]
        %v255 = vld [vmem:[%s251 + $0xc] sm:$0xf]
        %v256 = vld [vmem:[%s251 + $0x10] sm:$0xf]
        %v257 = vld [vmem:[%s251 + $0x14] sm:$0xf]
        %v258 = vld [vmem:[%s251 + $0x18] sm:$0xf]
        %v259 = vld [vmem:[%s251 + $0x1c] sm:$0xf]
        %v260 = vld [vmem:[%s251 + $0x20] sm:$0xf]
        %v261 = vld [vmem:[%s251 + $0x24] sm:$0xf]
        %v262 = vld [vmem:[%s251 + $0x28] sm:$0xf]
        %v263 = vld [vmem:[%s251 + $0x2c] sm:$0xf]
        %v264 = vld [vmem:[%s251 + $0x30] sm:$0xf]
        %v265 = vld [vmem:[%s251 + $0x34] sm:$0xf]
        %v266 = vld [vmem:[%s251 + $0x38] sm:$0xf]
        %v267 = vld [vmem:[%s251 + $0x3c] sm:$0xf]
        %v271 = vunpack.c.l.b16 %v248
        %v272 = vunpack.c.l.b16 %v249
        %v273 = vunpack.c.l.b16 %v250
        %v274 = vpack.c.b16 %v272, %v271
        %v275 = vpack.c.b16 %v273, %v273
        %v294 = vunpack.c.l.b16 %v252
        %v295 = vunpack.c.l.b16 %v253
        %v296 = vunpack.c.l.b16 %v254
        %v297 = vunpack.c.l.b16 %v255
        %v298 = vunpack.c.l.b16 %v256
        %v299 = vunpack.c.l.b16 %v257
        %v300 = vunpack.c.l.b16 %v258
        %v301 = vunpack.c.l.b16 %v259
        %v302 = vunpack.c.l.b16 %v260
        %v303 = vunpack.c.l.b16 %v261
        %v304 = vunpack.c.l.b16 %v262
        %v305 = vunpack.c.l.b16 %v263
        %v306 = vunpack.c.l.b16 %v264
        %v307 = vunpack.c.l.b16 %v265
        %v308 = vunpack.c.l.b16 %v266
        %v309 = vunpack.c.l.b16 %v267
        %v310 = vpack.c.b16 %v295, %v294
        %v311 = vpack.c.b16 %v297, %v296
        %v312 = vpack.c.b16 %v299, %v298
        %v313 = vpack.c.b16 %v301, %v300
        %v314 = vpack.c.b16 %v303, %v302
        %v315 = vpack.c.b16 %v305, %v304
        %v316 = vpack.c.b16 %v307, %v306
        %v317 = vpack.c.b16 %v309, %v308
        %326 = vmatprep.subr.bf16.mxu0 0
        %327 = vmatpush1.bf16.msra.mxu0 %v310
        %328 = vmatprep.subr.bf16.mxu0 0
        %329 = vmatpush1.bf16.msra.mxu0 %v311
        %330 = vmatprep.subr.bf16.mxu0 0
        %331 = vmatpush1.bf16.msra.mxu0 %v312
        %332 = vmatprep.subr.bf16.mxu0 0
        %333 = vmatpush1.bf16.msra.mxu0 %v313
        %334 = vmatprep.subr.bf16.mxu0 0
        %335 = vmatpush1.bf16.msra.mxu0 %v314
        %336 = vmatprep.subr.bf16.mxu0 0
        %337 = vmatpush1.bf16.msra.mxu0 %v315
        %338 = vmatprep.subr.bf16.mxu0 0
        %339 = vmatpush1.bf16.msra.mxu0 %v316
        %340 = vmatprep.subr.bf16.mxu0 0
        %341 = vmatpush1.bf16.msra.mxu0 %v317
        %342 = vmatprep.subr.bf16.mxu0 0
        %343 = vmatpush1.bf16.msra.mxu0 0
        %344 = vmatprep.subr.bf16.mxu0 0
        %345 = vmatpush1.bf16.msra.mxu0 0
        %346 = vmatprep.subr.bf16.mxu0 0
        %347 = vmatpush1.bf16.msra.mxu0 0
        %348 = vmatprep.subr.bf16.mxu0 0
        %349 = vmatpush1.bf16.msra.mxu0 0
        %350 = vmatprep.subr.bf16.mxu0 0
        %351 = vmatpush1.bf16.msra.mxu0 0
        %352 = vmatprep.subr.bf16.mxu0 0
        %353 = vmatpush1.bf16.msra.mxu0 0
        %354 = vmatprep.subr.bf16.mxu0 0
        %355 = vmatpush1.bf16.msra.mxu0 0
        %356 = vmatprep.subr.bf16.mxu0 0
        %357 = vmatpush1.bf16.msra.mxu0 0
        %358 = vmatprep.mubr.bf16.mxu0 0
        %359 = vmatmul.mubr.bf16.gmra.mrb[0].mxu0 %v274
        %v360 = vpop.f32.mrb[0].mxu0
        %v361 = vadd.f32 0.0, %v360
        %v362 = vpop.f32.mrb[0].mxu0
        %v363 = vpop.f32.mrb[0].mxu0
        %v364 = vadd.f32 0.0, %v363
        %v365 = vpop.f32.mrb[0].mxu0
        %366 = vmatprep.mubr.bf16.mxu0 0
        %367 = vmatmul.mubr.bf16.gmra.mrb[0].mxu0 %v275
        %v368 = vpop.f32.mrb[0].mxu0
        %v369 = vadd.f32 0.0, %v368
        %v370 = vpop.f32.mrb[0].mxu0
        %v371 = vpop.f32.mrb[0].mxu0
        %v372 = vpop.f32.mrb[0].mxu0
        %373 = vdwg.mxu0
        %v374 = vadd.f32 %v245, %v361
        %v375 = vadd.f32 %v245, %v364
        %v376 = vadd.f32 %v245, %v369
        %v377 = vld [vmem:[%s238] sm:$0xf]
        %v378 = vld [vmem:[%s238 + $0x4] sm:$0xf]
        %v379 = vld [vmem:[%s238 + $0x8] sm:$0xf]
        %v380 = vld [vmem:[%s238 + $0xc] sm:$0x1]
        %s381 = scalar_lea.vmem [#allocation2], 1408
        %v382 = vld [vmem:[%s381] sm:$0xf]
        %v383 = vld [vmem:[%s381 + $0x4] sm:$0xf]
        %v384 = vld [vmem:[%s381 + $0x8] sm:$0xf]
        %v385 = vld [vmem:[%s381 + $0xc] sm:$0xf]
        %v386 = vld [vmem:[%s381 + $0x10] sm:$0xf]
        %v387 = vld [vmem:[%s381 + $0x14] sm:$0xf]
        %v388 = vld [vmem:[%s381 + $0x18] sm:$0xf]
        %v389 = vld [vmem:[%s381 + $0x1c] sm:$0xf]
        %v390 = vld [vmem:[%s381 + $0x20] sm:$0xf]
        %v391 = vld [vmem:[%s381 + $0x24] sm:$0xf]
        %v392 = vld [vmem:[%s381 + $0x28] sm:$0xf]
        %v393 = vld [vmem:[%s381 + $0x2c] sm:$0xf]
        %v394 = vld [vmem:[%s381 + $0x30] sm:$0xf]
        %v395 = vld [vmem:[%s381 + $0x34] sm:$0xf]
        %v396 = vld [vmem:[%s381 + $0x38] sm:$0xf]
        %v397 = vld [vmem:[%s381 + $0x3c] sm:$0xf]
        %v402 = vunpack.c.l.b16 %v377
        %v403 = vunpack.c.l.b16 %v378
        %v404 = vunpack.c.l.b16 %v379
        %v405 = vunpack.c.l.b16 %v380
        %v406 = vpack.c.b16 %v403, %v402
        %v407 = vpack.c.b16 %v405, %v404
        %vm408 = vsmask.f32 7424
        %v410 = vshrl.u32 %v406, 16
        %v412 = vshll.u32 %v406, 16
        %v414 = vrot.slane %v412, 1
        %v415 = vor.u32 %v410, %v414
        %v417 = vshll.u32 %v407, 16
        %v419 = vrot.slane %v417, 1
        %v420 = vsel %vm408, %v415, %v419
        %v421 = vshrl.u32 %v407, 16
        %v423 = vor.u32 %v421, %v419
        %v442 = vunpack.c.l.b16 %v382
        %v443 = vunpack.c.l.b16 %v383
        %v444 = vunpack.c.l.b16 %v384
        %v445 = vunpack.c.l.b16 %v385
        %v446 = vunpack.c.l.b16 %v386
        %v447 = vunpack.c.l.b16 %v387
        %v448 = vunpack.c.l.b16 %v388
        %v449 = vunpack.c.l.b16 %v389
        %v450 = vunpack.c.l.b16 %v390
        %v451 = vunpack.c.l.b16 %v391
        %v452 = vunpack.c.l.b16 %v392
        %v453 = vunpack.c.l.b16 %v393
        %v454 = vunpack.c.l.b16 %v394
        %v455 = vunpack.c.l.b16 %v395
        %v456 = vunpack.c.l.b16 %v396
        %v457 = vunpack.c.l.b16 %v397
        %v458 = vpack.c.b16 %v443, %v442
        %v459 = vpack.c.b16 %v445, %v444
        %v460 = vpack.c.b16 %v447, %v446
        %v461 = vpack.c.b16 %v449, %v448
        %v462 = vpack.c.b16 %v451, %v450
        %v463 = vpack.c.b16 %v453, %v452
        %v464 = vpack.c.b16 %v455, %v454
        %v465 = vpack.c.b16 %v457, %v456
        %474 = vmatprep.subr.bf16.mxu0 0
        %475 = vmatpush1.bf16.msra.mxu0 %v458
        %476 = vmatprep.subr.bf16.mxu0 0
        %477 = vmatpush1.bf16.msra.mxu0 %v459
        %478 = vmatprep.subr.bf16.mxu0 0
        %479 = vmatpush1.bf16.msra.mxu0 %v460
        %480 = vmatprep.subr.bf16.mxu0 0
        %481 = vmatpush1.bf16.msra.mxu0 %v461
        %482 = vmatprep.subr.bf16.mxu0 0
        %483 = vmatpush1.bf16.msra.mxu0 %v462
        %484 = vmatprep.subr.bf16.mxu0 0
        %485 = vmatpush1.bf16.msra.mxu0 %v463
        %486 = vmatprep.subr.bf16.mxu0 0
        %487 = vmatpush1.bf16.msra.mxu0 %v464
        %488 = vmatprep.subr.bf16.mxu0 0
        %489 = vmatpush1.bf16.msra.mxu0 %v465
        %490 = vmatprep.subr.bf16.mxu0 0
        %491 = vmatpush1.bf16.msra.mxu0 0
        %492 = vmatprep.subr.bf16.mxu0 0
        %493 = vmatpush1.bf16.msra.mxu0 0
        %494 = vmatprep.subr.bf16.mxu0 0
        %495 = vmatpush1.bf16.msra.mxu0 0
        %496 = vmatprep.subr.bf16.mxu0 0
        %497 = vmatpush1.bf16.msra.mxu0 0
        %498 = vmatprep.subr.bf16.mxu0 0
        %499 = vmatpush1.bf16.msra.mxu0 0
        %500 = vmatprep.subr.bf16.mxu0 0
        %501 = vmatpush1.bf16.msra.mxu0 0
        %502 = vmatprep.subr.bf16.mxu0 0
        %503 = vmatpush1.bf16.msra.mxu0 0
        %504 = vmatprep.subr.bf16.mxu0 0
        %505 = vmatpush1.bf16.msra.mxu0 0
        %506 = vmatprep.mubr.bf16.mxu0 0
        %507 = vmatmul.mubr.bf16.gmra.mrb[0].mxu0 %v420
        %v508 = vpop.f32.mrb[0].mxu0
        %v509 = vadd.f32 0.0, %v508
        %v510 = vpop.f32.mrb[0].mxu0
        %v511 = vpop.f32.mrb[0].mxu0
        %v512 = vadd.f32 0.0, %v511
        %v513 = vpop.f32.mrb[0].mxu0
        %514 = vmatprep.mubr.bf16.mxu0 0
        %515 = vmatmul.mubr.bf16.gmra.mrb[0].mxu0 %v423
        %v516 = vpop.f32.mrb[0].mxu0
        %v517 = vadd.f32 0.0, %v516
        %v518 = vpop.f32.mrb[0].mxu0
        %v519 = vpop.f32.mrb[0].mxu0
        %v520 = vpop.f32.mrb[0].mxu0
        %521 = vdwg.mxu0
        %v522 = vadd.f32 %v374, %v509
        %v523 = vadd.f32 %v375, %v512
        %v524 = vadd.f32 %v376, %v517
        %v525 = vld [vmem:[%s238] sm:$0xe]
        %s526 = scalar_lea.vmem [#allocation2], 1280
        %v527 = vld [vmem:[%s526] sm:$0xf]
        %v528 = vld [vmem:[%s526 + $0x4] sm:$0xf]
        %v529 = vld [vmem:[%s526 + $0x8] sm:$0xf]
        %v530 = vld [vmem:[%s526 + $0xc] sm:$0xf]
        %v531 = vld [vmem:[%s526 + $0x10] sm:$0xf]
        %v532 = vld [vmem:[%s526 + $0x14] sm:$0xf]
        %v533 = vld [vmem:[%s526 + $0x18] sm:$0xf]
        %v534 = vld [vmem:[%s526 + $0x1c] sm:$0xf]
        %v535 = vld [vmem:[%s526 + $0x20] sm:$0xf]
        %v536 = vld [vmem:[%s526 + $0x24] sm:$0xf]
        %v537 = vld [vmem:[%s526 + $0x28] sm:$0xf]
        %v538 = vld [vmem:[%s526 + $0x2c] sm:$0xf]
        %v539 = vld [vmem:[%s526 + $0x30] sm:$0xf]
        %v540 = vld [vmem:[%s526 + $0x34] sm:$0xf]
        %v541 = vld [vmem:[%s526 + $0x38] sm:$0xf]
        %v542 = vld [vmem:[%s526 + $0x3c] sm:$0xf]
        %v544 = vunpack.c.l.b16 %v525
        %v545 = vpack.c.b16 %v403, %v544
        %vm546 = vcmask 1046528
        %v547 = vrot.slane %v545, 1
        %v548 = vrot.slane %v407, 1
        %v549 = vsel %vm546, %v547, %v548
        %v568 = vunpack.c.l.b16 %v527
        %v569 = vunpack.c.l.b16 %v528
        %v570 = vunpack.c.l.b16 %v529
        %v571 = vunpack.c.l.b16 %v530
        %v572 = vunpack.c.l.b16 %v531
        %v573 = vunpack.c.l.b16 %v532
        %v574 = vunpack.c.l.b16 %v533
        %v575 = vunpack.c.l.b16 %v534
        %v576 = vunpack.c.l.b16 %v535
        %v577 = vunpack.c.l.b16 %v536
        %v578 = vunpack.c.l.b16 %v537
        %v579 = vunpack.c.l.b16 %v538
        %v580 = vunpack.c.l.b16 %v539
        %v581 = vunpack.c.l.b16 %v540
        %v582 = vunpack.c.l.b16 %v541
        %v583 = vunpack.c.l.b16 %v542
        %v584 = vpack.c.b16 %v569, %v568
        %v585 = vpack.c.b16 %v571, %v570
        %v586 = vpack.c.b16 %v573, %v572
        %v587 = vpack.c.b16 %v575, %v574
        %v588 = vpack.c.b16 %v577, %v576
        %v589 = vpack.c.b16 %v579, %v578
        %v590 = vpack.c.b16 %v581, %v580
        %v591 = vpack.c.b16 %v583, %v582
        %600 = vmatprep.subr.bf16.mxu0 0
        %601 = vmatpush1.bf16.msra.mxu0 %v584
        %602 = vmatprep.subr.bf16.mxu0 0
        %603 = vmatpush1.bf16.msra.mxu0 %v585
        %604 = vmatprep.subr.bf16.mxu0 0
        %605 = vmatpush1.bf16.msra.mxu0 %v586
        %606 = vmatprep.subr.bf16.mxu0 0
        %607 = vmatpush1.bf16.msra.mxu0 %v587
        %608 = vmatprep.subr.bf16.mxu0 0
        %609 = vmatpush1.bf16.msra.mxu0 %v588
        %610 = vmatprep.subr.bf16.mxu0 0
        %611 = vmatpush1.bf16.msra.mxu0 %v589
        %612 = vmatprep.subr.bf16.mxu0 0
        %613 = vmatpush1.bf16.msra.mxu0 %v590
        %614 = vmatprep.subr.bf16.mxu0 0
        %615 = vmatpush1.bf16.msra.mxu0 %v591
        %616 = vmatprep.subr.bf16.mxu0 0
        %617 = vmatpush1.bf16.msra.mxu0 0
        %618 = vmatprep.subr.bf16.mxu0 0
        %619 = vmatpush1.bf16.msra.mxu0 0
        %620 = vmatprep.subr.bf16.mxu0 0
        %621 = vmatpush1.bf16.msra.mxu0 0
        %622 = vmatprep.subr.bf16.mxu0 0
        %623 = vmatpush1.bf16.msra.mxu0 0
        %624 = vmatprep.subr.bf16.mxu0 0
        %625 = vmatpush1.bf16.msra.mxu0 0
        %626 = vmatprep.subr.bf16.mxu0 0
        %627 = vmatpush1.bf16.msra.mxu0 0
        %628 = vmatprep.subr.bf16.mxu0 0
        %629 = vmatpush1.bf16.msra.mxu0 0
        %630 = vmatprep.subr.bf16.mxu0 0
        %631 = vmatpush1.bf16.msra.mxu0 0
        %632 = vmatprep.mubr.bf16.mxu0 0
        %633 = vmatmul.mubr.bf16.gmra.mrb[0].mxu0 %v549
        %v634 = vpop.f32.mrb[0].mxu0
        %v635 = vadd.f32 0.0, %v634
        %v636 = vpop.f32.mrb[0].mxu0
        %v637 = vpop.f32.mrb[0].mxu0
        %v638 = vadd.f32 0.0, %v637
        %v639 = vpop.f32.mrb[0].mxu0
        %640 = vmatprep.mubr.bf16.mxu0 0
        %641 = vmatmul.mubr.bf16.gmra.mrb[0].mxu0 %v548
        %v642 = vpop.f32.mrb[0].mxu0
        %v643 = vadd.f32 0.0, %v642
        %v644 = vpop.f32.mrb[0].mxu0
        %v645 = vpop.f32.mrb[0].mxu0
        %v646 = vpop.f32.mrb[0].mxu0
        %647 = vdwg.mxu0
        %v648 = vadd.f32 %v522, %v635
        %v649 = vadd.f32 %v523, %v638
        %v650 = vadd.f32 %v524, %v643
        %v651 = vld [vmem:[%s238] sm:$0x8]
        %v652 = vld [vmem:[%s238 + $0xc] sm:$0x7]
        %s653 = scalar_lea.vmem [#allocation2], 896
        %v654 = vld [vmem:[%s653] sm:$0xf]
        %v655 = vld [vmem:[%s653 + $0x4] sm:$0xf]
        %v656 = vld [vmem:[%s653 + $0x8] sm:$0xf]
        %v657 = vld [vmem:[%s653 + $0xc] sm:$0xf]
        %v658 = vld [vmem:[%s653 + $0x10] sm:$0xf]
        %v659 = vld [vmem:[%s653 + $0x14] sm:$0xf]
        %v660 = vld [vmem:[%s653 + $0x18] sm:$0xf]
        %v661 = vld [vmem:[%s653 + $0x1c] sm:$0xf]
        %v662 = vld [vmem:[%s653 + $0x20] sm:$0xf]
        %v663 = vld [vmem:[%s653 + $0x24] sm:$0xf]
        %v664 = vld [vmem:[%s653 + $0x28] sm:$0xf]
        %v665 = vld [vmem:[%s653 + $0x2c] sm:$0xf]
        %v666 = vld [vmem:[%s653 + $0x30] sm:$0xf]
        %v667 = vld [vmem:[%s653 + $0x34] sm:$0xf]
        %v668 = vld [vmem:[%s653 + $0x38] sm:$0xf]
        %v669 = vld [vmem:[%s653 + $0x3c] sm:$0xf]
        %v672 = vunpack.c.l.b16 %v651
        %v673 = vunpack.c.l.b16 %v652
        %v674 = vpack.c.b16 %v403, %v672
        %v675 = vpack.c.b16 %v673, %v404
        %vm676 = vcmask 1044480
        %v677 = vrot.slane %v674, 3
        %v678 = vrot.slane %v675, 3
        %v679 = vsel %vm676, %v677, %v678
        %v698 = vunpack.c.l.b16 %v654
        %v699 = vunpack.c.l.b16 %v655
        %v700 = vunpack.c.l.b16 %v656
        %v701 = vunpack.c.l.b16 %v657
        %v702 = vunpack.c.l.b16 %v658
        %v703 = vunpack.c.l.b16 %v659
        %v704 = vunpack.c.l.b16 %v660
        %v705 = vunpack.c.l.b16 %v661
        %v706 = vunpack.c.l.b16 %v662
        %v707 = vunpack.c.l.b16 %v663
        %v708 = vunpack.c.l.b16 %v664
        %v709 = vunpack.c.l.b16 %v665
        %v710 = vunpack.c.l.b16 %v666
        %v711 = vunpack.c.l.b16 %v667
        %v712 = vunpack.c.l.b16 %v668
        %v713 = vunpack.c.l.b16 %v669
        %v714 = vpack.c.b16 %v699, %v698
        %v715 = vpack.c.b16 %v701, %v700
        %v716 = vpack.c.b16 %v703, %v702
        %v717 = vpack.c.b16 %v705, %v704
        %v718 = vpack.c.b16 %v707, %v706
        %v719 = vpack.c.b16 %v709, %v708
        %v720 = vpack.c.b16 %v711, %v710
        %v721 = vpack.c.b16 %v713, %v712
        %730 = vmatprep.subr.bf16.mxu0 0
        %731 = vmatpush1.bf16.msra.mxu0 %v714
        %732 = vmatprep.subr.bf16.mxu0 0
        %733 = vmatpush1.bf16.msra.mxu0 %v715
        %734 = vmatprep.subr.bf16.mxu0 0
        %735 = vmatpush1.bf16.msra.mxu0 %v716
        %736 = vmatprep.subr.bf16.mxu0 0
        %737 = vmatpush1.bf16.msra.mxu0 %v717
        %738 = vmatprep.subr.bf16.mxu0 0
        %739 = vmatpush1.bf16.msra.mxu0 %v718
        %740 = vmatprep.subr.bf16.mxu0 0
        %741 = vmatpush1.bf16.msra.mxu0 %v719
        %742 = vmatprep.subr.bf16.mxu0 0
        %743 = vmatpush1.bf16.msra.mxu0 %v720
        %744 = vmatprep.subr.bf16.mxu0 0
        %745 = vmatpush1.bf16.msra.mxu0 %v721
        %746 = vmatprep.subr.bf16.mxu0 0
        %747 = vmatpush1.bf16.msra.mxu0 0
        %748 = vmatprep.subr.bf16.mxu0 0
        %749 = vmatpush1.bf16.msra.mxu0 0
        %750 = vmatprep.subr.bf16.mxu0 0
        %751 = vmatpush1.bf16.msra.mxu0 0
        %752 = vmatprep.subr.bf16.mxu0 0
        %753 = vmatpush1.bf16.msra.mxu0 0
        %754 = vmatprep.subr.bf16.mxu0 0
        %755 = vmatpush1.bf16.msra.mxu0 0
        %756 = vmatprep.subr.bf16.mxu0 0
        %757 = vmatpush1.bf16.msra.mxu0 0
        %758 = vmatprep.subr.bf16.mxu0 0
        %759 = vmatpush1.bf16.msra.mxu0 0
        %760 = vmatprep.subr.bf16.mxu0 0
        %761 = vmatpush1.bf16.msra.mxu0 0
        %762 = vmatprep.mubr.bf16.mxu0 0
        %763 = vmatmul.mubr.bf16.gmra.mrb[0].mxu0 %v679
        %v764 = vpop.f32.mrb[0].mxu0
        %v765 = vadd.f32 0.0, %v764
        %v766 = vpop.f32.mrb[0].mxu0
        %v767 = vpop.f32.mrb[0].mxu0
        %v768 = vadd.f32 0.0, %v767
        %v769 = vpop.f32.mrb[0].mxu0
        %770 = vmatprep.mubr.bf16.mxu0 0
        %771 = vmatmul.mubr.bf16.gmra.mrb[0].mxu0 %v678
        %v772 = vpop.f32.mrb[0].mxu0
        %v773 = vadd.f32 0.0, %v772
        %v774 = vpop.f32.mrb[0].mxu0
        %v775 = vpop.f32.mrb[0].mxu0
        %v776 = vpop.f32.mrb[0].mxu0
        %777 = vdwg.mxu0
        %v778 = vadd.f32 %v648, %v765
        %v779 = vadd.f32 %v649, %v768
        %v780 = vadd.f32 %v650, %v773
        %v781 = vld [vmem:[%s238 + $0xc] sm:$0xf]
        %s782 = scalar_lea.vmem [#allocation2], 768
        %v783 = vld [vmem:[%s782] sm:$0xf]
        %v784 = vld [vmem:[%s782 + $0x4] sm:$0xf]
        %v785 = vld [vmem:[%s782 + $0x8] sm:$0xf]
        %v786 = vld [vmem:[%s782 + $0xc] sm:$0xf]
        %v787 = vld [vmem:[%s782 + $0x10] sm:$0xf]
        %v788 = vld [vmem:[%s782 + $0x14] sm:$0xf]
        %v789 = vld [vmem:[%s782 + $0x18] sm:$0xf]
        %v790 = vld [vmem:[%s782 + $0x1c] sm:$0xf]
        %v791 = vld [vmem:[%s782 + $0x20] sm:$0xf]
        %v792 = vld [vmem:[%s782 + $0x24] sm:$0xf]
        %v793 = vld [vmem:[%s782 + $0x28] sm:$0xf]
        %v794 = vld [vmem:[%s782 + $0x2c] sm:$0xf]
        %v795 = vld [vmem:[%s782 + $0x30] sm:$0xf]
        %v796 = vld [vmem:[%s782 + $0x34] sm:$0xf]
        %v797 = vld [vmem:[%s782 + $0x38] sm:$0xf]
        %v798 = vld [vmem:[%s782 + $0x3c] sm:$0xf]
        %v800 = vunpack.c.l.b16 %v781
        %v801 = vpack.c.b16 %v800, %v404
        %vm802 = vsmask.f32 4352
        %v804 = vshrl.u32 %v674, 16
        %v806 = vrot.slane %v804, 3
        %v807 = vshll.u32 %v674, 16
        %v809 = vrot.slane %v807, 4
        %v810 = vor.u32 %v806, %v809
        %v812 = vshrl.u32 %v801, 16
        %v814 = vrot.slane %v812, 3
        %v815 = vshll.u32 %v801, 16
        %v817 = vrot.slane %v815, 4
        %v818 = vor.u32 %v814, %v817
        %v819 = vsel %vm802, %v810, %v818
        %v838 = vunpack.c.l.b16 %v783
        %v839 = vunpack.c.l.b16 %v784
        %v840 = vunpack.c.l.b16 %v785
        %v841 = vunpack.c.l.b16 %v786
        %v842 = vunpack.c.l.b16 %v787
        %v843 = vunpack.c.l.b16 %v788
        %v844 = vunpack.c.l.b16 %v789
        %v845 = vunpack.c.l.b16 %v790
        %v846 = vunpack.c.l.b16 %v791
        %v847 = vunpack.c.l.b16 %v792
        %v848 = vunpack.c.l.b16 %v793
        %v849 = vunpack.c.l.b16 %v794
        %v850 = vunpack.c.l.b16 %v795
        %v851 = vunpack.c.l.b16 %v796
        %v852 = vunpack.c.l.b16 %v797
        %v853 = vunpack.c.l.b16 %v798
        %v854 = vpack.c.b16 %v839, %v838
        %v855 = vpack.c.b16 %v841, %v840
        %v856 = vpack.c.b16 %v843, %v842
        %v857 = vpack.c.b16 %v845, %v844
        %v858 = vpack.c.b16 %v847, %v846
        %v859 = vpack.c.b16 %v849, %v848
        %v860 = vpack.c.b16 %v851, %v850
        %v861 = vpack.c.b16 %v853, %v852
        %870 = vmatprep.subr.bf16.mxu0 0
        %871 = vmatpush1.bf16.msra.mxu0 %v854
        %872 = vmatprep.subr.bf16.mxu0 0
        %873 = vmatpush1.bf16.msra.mxu0 %v855
        %874 = vmatprep.subr.bf16.mxu0 0
        %875 = vmatpush1.bf16.msra.mxu0 %v856
        %876 = vmatprep.subr.bf16.mxu0 0
        %877 = vmatpush1.bf16.msra.mxu0 %v857
        %878 = vmatprep.subr.bf16.mxu0 0
        %879 = vmatpush1.bf16.msra.mxu0 %v858
        %880 = vmatprep.subr.bf16.mxu0 0
        %881 = vmatpush1.bf16.msra.mxu0 %v859
        %882 = vmatprep.subr.bf16.mxu0 0
        %883 = vmatpush1.bf16.msra.mxu0 %v860
        %884 = vmatprep.subr.bf16.mxu0 0
        %885 = vmatpush1.bf16.msra.mxu0 %v861
        %886 = vmatprep.subr.bf16.mxu0 0
        %887 = vmatpush1.bf16.msra.mxu0 0
        %888 = vmatprep.subr.bf16.mxu0 0
        %889 = vmatpush1.bf16.msra.mxu0 0
        %890 = vmatprep.subr.bf16.mxu0 0
        %891 = vmatpush1.bf16.msra.mxu0 0
        %892 = vmatprep.subr.bf16.mxu0 0
        %893 = vmatpush1.bf16.msra.mxu0 0
        %894 = vmatprep.subr.bf16.mxu0 0
        %895 = vmatpush1.bf16.msra.mxu0 0
        %896 = vmatprep.subr.bf16.mxu0 0
        %897 = vmatpush1.bf16.msra.mxu0 0
        %898 = vmatprep.subr.bf16.mxu0 0
        %899 = vmatpush1.bf16.msra.mxu0 0
        %900 = vmatprep.subr.bf16.mxu0 0
        %901 = vmatpush1.bf16.msra.mxu0 0
        %902 = vmatprep.mubr.bf16.mxu0 0
        %903 = vmatmul.mubr.bf16.gmra.mrb[0].mxu0 %v819
        %v904 = vpop.f32.mrb[0].mxu0
        %v905 = vadd.f32 0.0, %v904
        %v906 = vpop.f32.mrb[0].mxu0
        %v907 = vpop.f32.mrb[0].mxu0
        %v908 = vadd.f32 0.0, %v907
        %v909 = vpop.f32.mrb[0].mxu0
        %910 = vmatprep.mubr.bf16.mxu0 0
        %911 = vmatmul.mubr.bf16.gmra.mrb[0].mxu0 %v818
        %v912 = vpop.f32.mrb[0].mxu0
        %v913 = vadd.f32 0.0, %v912
        %v914 = vpop.f32.mrb[0].mxu0
        %v915 = vpop.f32.mrb[0].mxu0
        %v916 = vpop.f32.mrb[0].mxu0
        %917 = vdwg.mxu0
        %v918 = vadd.f32 %v778, %v905
        %v919 = vadd.f32 %v779, %v908
        %v920 = vadd.f32 %v780, %v913
        %s921 = scalar_lea.vmem [#allocation2], 640
        %v922 = vld [vmem:[%s921] sm:$0xf]
        %v923 = vld [vmem:[%s921 + $0x4] sm:$0xf]
        %v924 = vld [vmem:[%s921 + $0x8] sm:$0xf]
        %v925 = vld [vmem:[%s921 + $0xc] sm:$0xf]
        %v926 = vld [vmem:[%s921 + $0x10] sm:$0xf]
        %v927 = vld [vmem:[%s921 + $0x14] sm:$0xf]
        %v928 = vld [vmem:[%s921 + $0x18] sm:$0xf]
        %v929 = vld [vmem:[%s921 + $0x1c] sm:$0xf]
        %v930 = vld [vmem:[%s921 + $0x20] sm:$0xf]
        %v931 = vld [vmem:[%s921 + $0x24] sm:$0xf]
        %v932 = vld [vmem:[%s921 + $0x28] sm:$0xf]
        %v933 = vld [vmem:[%s921 + $0x2c] sm:$0xf]
        %v934 = vld [vmem:[%s921 + $0x30] sm:$0xf]
        %v935 = vld [vmem:[%s921 + $0x34] sm:$0xf]
        %v936 = vld [vmem:[%s921 + $0x38] sm:$0xf]
        %v937 = vld [vmem:[%s921 + $0x3c] sm:$0xf]
        %v938 = vpack.c.b16 %v404, %v403
        %v939 = vpack.c.b16 %v800, %v800
        %v958 = vunpack.c.l.b16 %v922
        %v959 = vunpack.c.l.b16 %v923
        %v960 = vunpack.c.l.b16 %v924
        %v961 = vunpack.c.l.b16 %v925
        %v962 = vunpack.c.l.b16 %v926
        %v963 = vunpack.c.l.b16 %v927
        %v964 = vunpack.c.l.b16 %v928
        %v965 = vunpack.c.l.b16 %v929
        %v966 = vunpack.c.l.b16 %v930
        %v967 = vunpack.c.l.b16 %v931
        %v968 = vunpack.c.l.b16 %v932
        %v969 = vunpack.c.l.b16 %v933
        %v970 = vunpack.c.l.b16 %v934
        %v971 = vunpack.c.l.b16 %v935
        %v972 = vunpack.c.l.b16 %v936
        %v973 = vunpack.c.l.b16 %v937
        %v974 = vpack.c.b16 %v959, %v958
        %v975 = vpack.c.b16 %v961, %v960
        %v976 = vpack.c.b16 %v963, %v962
        %v977 = vpack.c.b16 %v965, %v964
        %v978 = vpack.c.b16 %v967, %v966
        %v979 = vpack.c.b16 %v969, %v968
        %v980 = vpack.c.b16 %v971, %v970
        %v981 = vpack.c.b16 %v973, %v972
        %990 = vmatprep.subr.bf16.mxu0 0
        %991 = vmatpush1.bf16.msra.mxu0 %v974
        %992 = vmatprep.subr.bf16.mxu0 0
        %993 = vmatpush1.bf16.msra.mxu0 %v975
        %994 = vmatprep.subr.bf16.mxu0 0
        %995 = vmatpush1.bf16.msra.mxu0 %v976
        %996 = vmatprep.subr.bf16.mxu0 0
        %997 = vmatpush1.bf16.msra.mxu0 %v977
        %998 = vmatprep.subr.bf16.mxu0 0
        %999 = vmatpush1.bf16.msra.mxu0 %v978
        %1000 = vmatprep.subr.bf16.mxu0 0
        %1001 = vmatpush1.bf16.msra.mxu0 %v979
        %1002 = vmatprep.subr.bf16.mxu0 0
        %1003 = vmatpush1.bf16.msra.mxu0 %v980
        %1004 = vmatprep.subr.bf16.mxu0 0
        %1005 = vmatpush1.bf16.msra.mxu0 %v981
        %1006 = vmatprep.subr.bf16.mxu0 0
        %1007 = vmatpush1.bf16.msra.mxu0 0
        %1008 = vmatprep.subr.bf16.mxu0 0
        %1009 = vmatpush1.bf16.msra.mxu0 0
        %1010 = vmatprep.subr.bf16.mxu0 0
        %1011 = vmatpush1.bf16.msra.mxu0 0
        %1012 = vmatprep.subr.bf16.mxu0 0
        %1013 = vmatpush1.bf16.msra.mxu0 0
        %1014 = vmatprep.subr.bf16.mxu0 0
        %1015 = vmatpush1.bf16.msra.mxu0 0
        %1016 = vmatprep.subr.bf16.mxu0 0
        %1017 = vmatpush1.bf16.msra.mxu0 0
        %1018 = vmatprep.subr.bf16.mxu0 0
        %1019 = vmatpush1.bf16.msra.mxu0 0
        %1020 = vmatprep.subr.bf16.mxu0 0
        %1021 = vmatpush1.bf16.msra.mxu0 0
        %1022 = vmatprep.mubr.bf16.mxu0 0
        %1023 = vmatmul.mubr.bf16.gmra.mrb[0].mxu0 %v938
        %v1024 = vpop.f32.mrb[0].mxu0
        %v1025 = vadd.f32 0.0, %v1024
        %v1026 = vpop.f32.mrb[0].mxu0
        %v1027 = vpop.f32.mrb[0].mxu0
        %v1028 = vadd.f32 0.0, %v1027
        %v1029 = vpop.f32.mrb[0].mxu0
        %1030 = vmatprep.mubr.bf16.mxu0 0
        %1031 = vmatmul.mubr.bf16.gmra.mrb[0].mxu0 %v939
        %v1032 = vpop.f32.mrb[0].mxu0
        %v1033 = vadd.f32 0.0, %v1032
        %v1034 = vpop.f32.mrb[0].mxu0
        %v1035 = vpop.f32.mrb[0].mxu0
        %v1036 = vpop.f32.mrb[0].mxu0
        %1037 = vdwg.mxu0
        %v1038 = vadd.f32 %v918, %v1025
        %v1039 = vadd.f32 %v919, %v1028
        %v1040 = vadd.f32 %v920, %v1033
        %v1041 = vld [vmem:[%s238 + $0x4] sm:$0xc]
        %v1042 = vld [vmem:[%s238 + $0x8] sm:$0xf]
        %v1043 = vld [vmem:[%s238 + $0xc] sm:$0xf]
        %v1044 = vld [vmem:[%s238 + $0x10] sm:$0x3]
        %s1045 = scalar_lea.vmem [#allocation2], 256
        %v1046 = vld [vmem:[%s1045] sm:$0xf]
        %v1047 = vld [vmem:[%s1045 + $0x4] sm:$0xf]
        %v1048 = vld [vmem:[%s1045 + $0x8] sm:$0xf]
        %v1049 = vld [vmem:[%s1045 + $0xc] sm:$0xf]
        %v1050 = vld [vmem:[%s1045 + $0x10] sm:$0xf]
        %v1051 = vld [vmem:[%s1045 + $0x14] sm:$0xf]
        %v1052 = vld [vmem:[%s1045 + $0x18] sm:$0xf]
        %v1053 = vld [vmem:[%s1045 + $0x1c] sm:$0xf]
        %v1054 = vld [vmem:[%s1045 + $0x20] sm:$0xf]
        %v1055 = vld [vmem:[%s1045 + $0x24] sm:$0xf]
        %v1056 = vld [vmem:[%s1045 + $0x28] sm:$0xf]
        %v1057 = vld [vmem:[%s1045 + $0x2c] sm:$0xf]
        %v1058 = vld [vmem:[%s1045 + $0x30] sm:$0xf]
        %v1059 = vld [vmem:[%s1045 + $0x34] sm:$0xf]
        %v1060 = vld [vmem:[%s1045 + $0x38] sm:$0xf]
        %v1061 = vld [vmem:[%s1045 + $0x3c] sm:$0xf]
        %v1066 = vunpack.c.l.b16 %v1041
        %v1067 = vunpack.c.l.b16 %v1042
        %v1068 = vunpack.c.l.b16 %v1043
        %v1069 = vunpack.c.l.b16 %v1044
        %v1070 = vpack.c.b16 %v1067, %v1066
        %v1071 = vpack.c.b16 %v1069, %v1068
        %vm1072 = vcmask 1045504
        %v1073 = vrot.slane %v1070, 2
        %v1074 = vrot.slane %v1071, 2
        %v1075 = vsel %vm1072, %v1073, %v1074
        %v1094 = vunpack.c.l.b16 %v1046
        %v1095 = vunpack.c.l.b16 %v1047
        %v1096 = vunpack.c.l.b16 %v1048
        %v1097 = vunpack.c.l.b16 %v1049
        %v1098 = vunpack.c.l.b16 %v1050
        %v1099 = vunpack.c.l.b16 %v1051
        %v1100 = vunpack.c.l.b16 %v1052
        %v1101 = vunpack.c.l.b16 %v1053
        %v1102 = vunpack.c.l.b16 %v1054
        %v1103 = vunpack.c.l.b16 %v1055
        %v1104 = vunpack.c.l.b16 %v1056
        %v1105 = vunpack.c.l.b16 %v1057
        %v1106 = vunpack.c.l.b16 %v1058
        %v1107 = vunpack.c.l.b16 %v1059
        %v1108 = vunpack.c.l.b16 %v1060
        %v1109 = vunpack.c.l.b16 %v1061
        %v1110 = vpack.c.b16 %v1095, %v1094
        %v1111 = vpack.c.b16 %v1097, %v1096
        %v1112 = vpack.c.b16 %v1099, %v1098
        %v1113 = vpack.c.b16 %v1101, %v1100
        %v1114 = vpack.c.b16 %v1103, %v1102
        %v1115 = vpack.c.b16 %v1105, %v1104
        %v1116 = vpack.c.b16 %v1107, %v1106
        %v1117 = vpack.c.b16 %v1109, %v1108
        %1126 = vmatprep.subr.bf16.mxu0 0
        %1127 = vmatpush1.bf16.msra.mxu0 %v1110
        %1128 = vmatprep.subr.bf16.mxu0 0
        %1129 = vmatpush1.bf16.msra.mxu0 %v1111
        %1130 = vmatprep.subr.bf16.mxu0 0
        %1131 = vmatpush1.bf16.msra.mxu0 %v1112
        %1132 = vmatprep.subr.bf16.mxu0 0
        %1133 = vmatpush1.bf16.msra.mxu0 %v1113
        %1134 = vmatprep.subr.bf16.mxu0 0
        %1135 = vmatpush1.bf16.msra.mxu0 %v1114
        %1136 = vmatprep.subr.bf16.mxu0 0
        %1137 = vmatpush1.bf16.msra.mxu0 %v1115
        %1138 = vmatprep.subr.bf16.mxu0 0
        %1139 = vmatpush1.bf16.msra.mxu0 %v1116
        %1140 = vmatprep.subr.bf16.mxu0 0
        %1141 = vmatpush1.bf16.msra.mxu0 %v1117
        %1142 = vmatprep.subr.bf16.mxu0 0
        %1143 = vmatpush1.bf16.msra.mxu0 0
        %1144 = vmatprep.subr.bf16.mxu0 0
        %1145 = vmatpush1.bf16.msra.mxu0 0
        %1146 = vmatprep.subr.bf16.mxu0 0
        %1147 = vmatpush1.bf16.msra.mxu0 0
        %1148 = vmatprep.subr.bf16.mxu0 0
        %1149 = vmatpush1.bf16.msra.mxu0 0
        %1150 = vmatprep.subr.bf16.mxu0 0
        %1151 = vmatpush1.bf16.msra.mxu0 0
        %1152 = vmatprep.subr.bf16.mxu0 0
        %1153 = vmatpush1.bf16.msra.mxu0 0
        %1154 = vmatprep.subr.bf16.mxu0 0
        %1155 = vmatpush1.bf16.msra.mxu0 0
        %1156 = vmatprep.subr.bf16.mxu0 0
        %1157 = vmatpush1.bf16.msra.mxu0 0
        %1158 = vmatprep.mubr.bf16.mxu0 0
        %1159 = vmatmul.mubr.bf16.gmra.mrb[0].mxu0 %v1075
        %v1160 = vpop.f32.mrb[0].mxu0
        %v1161 = vadd.f32 0.0, %v1160
        %v1162 = vpop.f32.mrb[0].mxu0
        %v1163 = vpop.f32.mrb[0].mxu0
        %v1164 = vadd.f32 0.0, %v1163
        %v1165 = vpop.f32.mrb[0].mxu0
        %1166 = vmatprep.mubr.bf16.mxu0 0
        %1167 = vmatmul.mubr.bf16.gmra.mrb[0].mxu0 %v1074
        %v1168 = vpop.f32.mrb[0].mxu0
        %v1169 = vadd.f32 0.0, %v1168
        %v1170 = vpop.f32.mrb[0].mxu0
        %v1171 = vpop.f32.mrb[0].mxu0
        %v1172 = vpop.f32.mrb[0].mxu0
        %1173 = vdwg.mxu0
        %v1174 = vadd.f32 %v1038, %v1161
        %v1175 = vadd.f32 %v1039, %v1164
        %v1176 = vadd.f32 %v1040, %v1169
        %v1177 = vld [vmem:[%s238 + $0x10] sm:$0x7]
        %s1178 = scalar_lea.vmem [#allocation2], 128
        %v1179 = vld [vmem:[%s1178] sm:$0xf]
        %v1180 = vld [vmem:[%s1178 + $0x4] sm:$0xf]
        %v1181 = vld [vmem:[%s1178 + $0x8] sm:$0xf]
        %v1182 = vld [vmem:[%s1178 + $0xc] sm:$0xf]
        %v1183 = vld [vmem:[%s1178 + $0x10] sm:$0xf]
        %v1184 = vld [vmem:[%s1178 + $0x14] sm:$0xf]
        %v1185 = vld [vmem:[%s1178 + $0x18] sm:$0xf]
        %v1186 = vld [vmem:[%s1178 + $0x1c] sm:$0xf]
        %v1187 = vld [vmem:[%s1178 + $0x20] sm:$0xf]
        %v1188 = vld [vmem:[%s1178 + $0x24] sm:$0xf]
        %v1189 = vld [vmem:[%s1178 + $0x28] sm:$0xf]
        %v1190 = vld [vmem:[%s1178 + $0x2c] sm:$0xf]
        %v1191 = vld [vmem:[%s1178 + $0x30] sm:$0xf]
        %v1192 = vld [vmem:[%s1178 + $0x34] sm:$0xf]
        %v1193 = vld [vmem:[%s1178 + $0x38] sm:$0xf]
        %v1194 = vld [vmem:[%s1178 + $0x3c] sm:$0xf]
        %v1196 = vunpack.c.l.b16 %v1177
        %v1197 = vpack.c.b16 %v1196, %v1068
        %vm1198 = vsmask.f32 5376
        %v1200 = vshrl.u32 %v1070, 16
        %v1202 = vrot.slane %v1200, 2
        %v1203 = vshll.u32 %v1070, 16
        %v1205 = vrot.slane %v1203, 3
        %v1206 = vor.u32 %v1202, %v1205
        %v1208 = vshrl.u32 %v1197, 16
        %v1210 = vrot.slane %v1208, 2
        %v1211 = vshll.u32 %v1197, 16
        %v1213 = vrot.slane %v1211, 3
        %v1214 = vor.u32 %v1210, %v1213
        %v1215 = vsel %vm1198, %v1206, %v1214
        %v1234 = vunpack.c.l.b16 %v1179
        %v1235 = vunpack.c.l.b16 %v1180
        %v1236 = vunpack.c.l.b16 %v1181
        %v1237 = vunpack.c.l.b16 %v1182
        %v1238 = vunpack.c.l.b16 %v1183
        %v1239 = vunpack.c.l.b16 %v1184
        %v1240 = vunpack.c.l.b16 %v1185
        %v1241 = vunpack.c.l.b16 %v1186
        %v1242 = vunpack.c.l.b16 %v1187
        %v1243 = vunpack.c.l.b16 %v1188
        %v1244 = vunpack.c.l.b16 %v1189
        %v1245 = vunpack.c.l.b16 %v1190
        %v1246 = vunpack.c.l.b16 %v1191
        %v1247 = vunpack.c.l.b16 %v1192
        %v1248 = vunpack.c.l.b16 %v1193
        %v1249 = vunpack.c.l.b16 %v1194
        %v1250 = vpack.c.b16 %v1235, %v1234
        %v1251 = vpack.c.b16 %v1237, %v1236
        %v1252 = vpack.c.b16 %v1239, %v1238
        %v1253 = vpack.c.b16 %v1241, %v1240
        %v1254 = vpack.c.b16 %v1243, %v1242
        %v1255 = vpack.c.b16 %v1245, %v1244
        %v1256 = vpack.c.b16 %v1247, %v1246
        %v1257 = vpack.c.b16 %v1249, %v1248
        %1266 = vmatprep.subr.bf16.mxu0 0
        %1267 = vmatpush1.bf16.msra.mxu0 %v1250
        %1268 = vmatprep.subr.bf16.mxu0 0
        %1269 = vmatpush1.bf16.msra.mxu0 %v1251
        %1270 = vmatprep.subr.bf16.mxu0 0
        %1271 = vmatpush1.bf16.msra.mxu0 %v1252
        %1272 = vmatprep.subr.bf16.mxu0 0
        %1273 = vmatpush1.bf16.msra.mxu0 %v1253
        %1274 = vmatprep.subr.bf16.mxu0 0
        %1275 = vmatpush1.bf16.msra.mxu0 %v1254
        %1276 = vmatprep.subr.bf16.mxu0 0
        %1277 = vmatpush1.bf16.msra.mxu0 %v1255
        %1278 = vmatprep.subr.bf16.mxu0 0
        %1279 = vmatpush1.bf16.msra.mxu0 %v1256
        %1280 = vmatprep.subr.bf16.mxu0 0
        %1281 = vmatpush1.bf16.msra.mxu0 %v1257
        %1282 = vmatprep.subr.bf16.mxu0 0
        %1283 = vmatpush1.bf16.msra.mxu0 0
        %1284 = vmatprep.subr.bf16.mxu0 0
        %1285 = vmatpush1.bf16.msra.mxu0 0
        %1286 = vmatprep.subr.bf16.mxu0 0
        %1287 = vmatpush1.bf16.msra.mxu0 0
        %1288 = vmatprep.subr.bf16.mxu0 0
        %1289 = vmatpush1.bf16.msra.mxu0 0
        %1290 = vmatprep.subr.bf16.mxu0 0
        %1291 = vmatpush1.bf16.msra.mxu0 0
        %1292 = vmatprep.subr.bf16.mxu0 0
        %1293 = vmatpush1.bf16.msra.mxu0 0
        %1294 = vmatprep.subr.bf16.mxu0 0
        %1295 = vmatpush1.bf16.msra.mxu0 0
        %1296 = vmatprep.subr.bf16.mxu0 0
        %1297 = vmatpush1.bf16.msra.mxu0 0
        %1298 = vmatprep.mubr.bf16.mxu0 0
        %1299 = vmatmul.mubr.bf16.gmra.mrb[0].mxu0 %v1215
        %v1300 = vpop.f32.mrb[0].mxu0
        %v1301 = vadd.f32 0.0, %v1300
        %v1302 = vpop.f32.mrb[0].mxu0
        %v1303 = vpop.f32.mrb[0].mxu0
        %v1304 = vadd.f32 0.0, %v1303
        %v1305 = vpop.f32.mrb[0].mxu0
        %1306 = vmatprep.mubr.bf16.mxu0 0
        %1307 = vmatmul.mubr.bf16.gmra.mrb[0].mxu0 %v1214
        %v1308 = vpop.f32.mrb[0].mxu0
        %v1309 = vadd.f32 0.0, %v1308
        %v1310 = vpop.f32.mrb[0].mxu0
        %v1311 = vpop.f32.mrb[0].mxu0
        %v1312 = vpop.f32.mrb[0].mxu0
        %1313 = vdwg.mxu0
        %v1314 = vadd.f32 %v1174, %v1301
        %v1315 = vadd.f32 %v1175, %v1304
        %v1316 = vadd.f32 %v1176, %v1309
        %v1317 = vld [vmem:[%s238 + $0x4] sm:$0x8]
        %v1318 = vld [vmem:[#allocation2] sm:$0xf]
        %v1319 = vld [vmem:[#allocation2 + $0x4] sm:$0xf]
        %v1320 = vld [vmem:[#allocation2 + $0x8] sm:$0xf]
        %v1321 = vld [vmem:[#allocation2 + $0xc] sm:$0xf]
        %v1322 = vld [vmem:[#allocation2 + $0x10] sm:$0xf]
        %v1323 = vld [vmem:[#allocation2 + $0x14] sm:$0xf]
        %v1324 = vld [vmem:[#allocation2 + $0x18] sm:$0xf]
        %v1325 = vld [vmem:[#allocation2 + $0x1c] sm:$0xf]
        %v1326 = vld [vmem:[#allocation2 + $0x20] sm:$0xf]
        %v1327 = vld [vmem:[#allocation2 + $0x24] sm:$0xf]
        %v1328 = vld [vmem:[#allocation2 + $0x28] sm:$0xf]
        %v1329 = vld [vmem:[#allocation2 + $0x2c] sm:$0xf]
        %v1330 = vld [vmem:[#allocation2 + $0x30] sm:$0xf]
        %v1331 = vld [vmem:[#allocation2 + $0x34] sm:$0xf]
        %v1332 = vld [vmem:[#allocation2 + $0x38] sm:$0xf]
        %v1333 = vld [vmem:[#allocation2 + $0x3c] sm:$0xf]
        %v1335 = vunpack.c.l.b16 %v1317
        %v1336 = vpack.c.b16 %v1067, %v1335
        %v1337 = vrot.slane %v1336, 3
        %v1338 = vrot.slane %v1197, 3
        %v1339 = vsel %vm676, %v1337, %v1338
        %v1358 = vunpack.c.l.b16 %v1318
        %v1359 = vunpack.c.l.b16 %v1319
        %v1360 = vunpack.c.l.b16 %v1320
        %v1361 = vunpack.c.l.b16 %v1321
        %v1362 = vunpack.c.l.b16 %v1322
        %v1363 = vunpack.c.l.b16 %v1323
        %v1364 = vunpack.c.l.b16 %v1324
        %v1365 = vunpack.c.l.b16 %v1325
        %v1366 = vunpack.c.l.b16 %v1326
        %v1367 = vunpack.c.l.b16 %v1327
        %v1368 = vunpack.c.l.b16 %v1328
        %v1369 = vunpack.c.l.b16 %v1329
        %v1370 = vunpack.c.l.b16 %v1330
        %v1371 = vunpack.c.l.b16 %v1331
        %v1372 = vunpack.c.l.b16 %v1332
        %v1373 = vunpack.c.l.b16 %v1333
        %v1374 = vpack.c.b16 %v1359, %v1358
        %v1375 = vpack.c.b16 %v1361, %v1360
        %v1376 = vpack.c.b16 %v1363, %v1362
        %v1377 = vpack.c.b16 %v1365, %v1364
        %v1378 = vpack.c.b16 %v1367, %v1366
        %v1379 = vpack.c.b16 %v1369, %v1368
        %v1380 = vpack.c.b16 %v1371, %v1370
        %v1381 = vpack.c.b16 %v1373, %v1372
        %1390 = vmatprep.subr.bf16.mxu0 0
        %1391 = vmatpush1.bf16.msra.mxu0 %v1374
        %1392 = vmatprep.subr.bf16.mxu0 0
        %1393 = vmatpush1.bf16.msra.mxu0 %v1375
        %1394 = vmatprep.subr.bf16.mxu0 0
        %1395 = vmatpush1.bf16.msra.mxu0 %v1376
        %1396 = vmatprep.subr.bf16.mxu0 0
        %1397 = vmatpush1.bf16.msra.mxu0 %v1377
        %1398 = vmatprep.subr.bf16.mxu0 0
        %1399 = vmatpush1.bf16.msra.mxu0 %v1378
        %1400 = vmatprep.subr.bf16.mxu0 0
        %1401 = vmatpush1.bf16.msra.mxu0 %v1379
        %1402 = vmatprep.subr.bf16.mxu0 0
        %1403 = vmatpush1.bf16.msra.mxu0 %v1380
        %1404 = vmatprep.subr.bf16.mxu0 0
        %1405 = vmatpush1.bf16.msra.mxu0 %v1381
        %1406 = vmatprep.subr.bf16.mxu0 0
        %1407 = vmatpush1.bf16.msra.mxu0 0
        %1408 = vmatprep.subr.bf16.mxu0 0
        %1409 = vmatpush1.bf16.msra.mxu0 0
        %1410 = vmatprep.subr.bf16.mxu0 0
        %1411 = vmatpush1.bf16.msra.mxu0 0
        %1412 = vmatprep.subr.bf16.mxu0 0
        %1413 = vmatpush1.bf16.msra.mxu0 0
        %1414 = vmatprep.subr.bf16.mxu0 0
        %1415 = vmatpush1.bf16.msra.mxu0 0
        %1416 = vmatprep.subr.bf16.mxu0 0
        %1417 = vmatpush1.bf16.msra.mxu0 0
        %1418 = vmatprep.subr.bf16.mxu0 0
        %1419 = vmatpush1.bf16.msra.mxu0 0
        %1420 = vmatprep.subr.bf16.mxu0 0
        %1421 = vmatpush1.bf16.msra.mxu0 0
        %1422 = vmatprep.mubr.bf16.mxu0 0
        %1423 = vmatmul.mubr.bf16.gmra.mrb[0].mxu0 %v1339
        %v1424 = vpop.f32.mrb[0].mxu0
        %v1425 = vadd.f32 0.0, %v1424
        %v1426 = vpop.f32.mrb[0].mxu0
        %v1427 = vpop.f32.mrb[0].mxu0
        %v1428 = vadd.f32 0.0, %v1427
        %v1429 = vpop.f32.mrb[0].mxu0
        %1430 = vmatprep.mubr.bf16.mxu0 0
        %1431 = vmatmul.mubr.bf16.gmra.mrb[0].mxu0 %v1338
        %v1432 = vpop.f32.mrb[0].mxu0
        %v1433 = vadd.f32 0.0, %v1432
        %v1434 = vpop.f32.mrb[0].mxu0
        %v1435 = vpop.f32.mrb[0].mxu0
        %v1436 = vpop.f32.mrb[0].mxu0
        %1437 = vdwg.mxu0
        %v1438 = vadd.f32 %v1314, %v1425
        %v1439 = vadd.f32 %v1315, %v1428
        %v1440 = vadd.f32 %v1316, %v1433
        %v1442 = vlaneseq
        %v1443 = vshrl.u32 %v1442, 7
        %v1444 = vsub.s32 0, %v1443
        %v1445 = vrot.slane %v247, %v1444
        %v1447 = vmul.f32 %v1438, %v1445
        %v1448 = vmul.f32 %v1439, %v1445
        %v1449 = vmul.f32 %v1440, %v1445
        %v1450 = vadd.f32 %v1447, 4096.0
        %v1451 = vadd.f32 %v1448, 4096.0
        %v1452 = vadd.f32 %v1449, 4096.0
        %v1453 = vrcp.pop 8192.0
        %v1454 = vmul.f32 %v1450, %v1453
        %v1455 = vmul.f32 %v1451, %v1453
        %v1456 = vmul.f32 %v1452, %v1453
        %v1457 = vfloor.f32 %v1454
        %v1458 = vfloor.f32 %v1455
        %v1459 = vfloor.f32 %v1456
        %v1460 = vmax.f32 %v1457, 0.0
        %v1461 = vmax.f32 %v1458, 0.0
        %v1462 = vmax.f32 %v1459, 0.0
        %v1463 = vmin.f32 %v1460, 255.0
        %v1464 = vmin.f32 %v1461, 255.0
        %v1465 = vmin.f32 %v1462, 255.0
        %v1466 = vmul.f32 %v1463, 32768.0
        %v1467 = vmul.f32 %v1464, 32768.0
        %v1468 = vmul.f32 %v1465, 32768.0
        %v1469 = vadd.f32 %v1466, 524288.0
        %v1470 = vadd.f32 %v1467, 524288.0
        %v1471 = vadd.f32 %v1468, 524288.0
        %v1472 = vrcp.pop 1048576.0
        %v1473 = vmul.f32 %v1469, %v1472
        %v1474 = vmul.f32 %v1470, %v1472
        %v1475 = vmul.f32 %v1471, %v1472
        %v1476 = vfloor.f32 %v1473
        %v1477 = vfloor.f32 %v1474
        %v1478 = vfloor.f32 %v1475
        %v1479 = vpack.c.bf16 %v1477, %v1476
        %v1480 = vpack.c.bf16 %v1478, %v1478
        %v1483 = vunpack.c.l.b16 %v1479
        %v1484 = vunpack.c.h.b16 %v1479
        %v1485 = vunpack.c.l.b16 %v1480
        %v1486 = vpack.c.b16 %v1483, %v1483
        %v1487 = vpack.c.b16 %v1484, %v1484
        %v1488 = vpack.c.b16 %v1485, %v1485
        %1492 = vst [vmem:[%s229] sm:$0xf] %v1486
        %1493 = vst [vmem:[%s229 + $0x4] sm:$0xf] %v1487
        %1494 = vst [vmem:[%s229 + $0x8] sm:$0xf] %v1488
        %v1495 = vld [vmem:[%s238] sm:$0xf]
        %v1496 = vld [vmem:[%s238 + $0x4] sm:$0xf]
        %v1497 = vld [vmem:[%s238 + $0x8] sm:$0xf]
        %v1498 = vld [vmem:[%s238 + $0xc] sm:$0x1]
        %s1499 = scalar_lea.vmem [#allocation2], 1472
        %v1500 = vld [vmem:[%s1499] sm:$0xf]
        %v1501 = vld [vmem:[%s1499 + $0x4] sm:$0xf]
        %v1502 = vld [vmem:[%s1499 + $0x8] sm:$0xf]
        %v1503 = vld [vmem:[%s1499 + $0xc] sm:$0xf]
        %v1504 = vld [vmem:[%s1499 + $0x10] sm:$0xf]
        %v1505 = vld [vmem:[%s1499 + $0x14] sm:$0xf]
        %v1506 = vld [vmem:[%s1499 + $0x18] sm:$0xf]
        %v1507 = vld [vmem:[%s1499 + $0x1c] sm:$0xf]
        %v1508 = vld [vmem:[%s1499 + $0x20] sm:$0xf]
        %v1509 = vld [vmem:[%s1499 + $0x24] sm:$0xf]
        %v1510 = vld [vmem:[%s1499 + $0x28] sm:$0xf]
        %v1511 = vld [vmem:[%s1499 + $0x2c] sm:$0xf]
        %v1512 = vld [vmem:[%s1499 + $0x30] sm:$0xf]
        %v1513 = vld [vmem:[%s1499 + $0x34] sm:$0xf]
        %v1514 = vld [vmem:[%s1499 + $0x38] sm:$0xf]
        %v1515 = vld [vmem:[%s1499 + $0x3c] sm:$0xf]
        %v1520 = vunpack.c.l.b16 %v1495
        %v1521 = vunpack.c.l.b16 %v1496
        %v1522 = vunpack.c.l.b16 %v1497
        %v1523 = vunpack.c.l.b16 %v1498
        %v1524 = vpack.c.b16 %v1521, %v1520
        %v1525 = vpack.c.b16 %v1523, %v1522
        %v1527 = vshrl.u32 %v1524, 16
        %v1529 = vshll.u32 %v1524, 16
        %v1531 = vrot.slane %v1529, 1
        %v1532 = vor.u32 %v1527, %v1531
        %v1534 = vshll.u32 %v1525, 16
        %v1536 = vrot.slane %v1534, 1
        %v1537 = vsel %vm408, %v1532, %v1536
        %v1538 = vshrl.u32 %v1525, 16
        %v1540 = vor.u32 %v1538, %v1536
        %v1559 = vunpack.c.l.b16 %v1500
        %v1560 = vunpack.c.l.b16 %v1501
        %v1561 = vunpack.c.l.b16 %v1502
        %v1562 = vunpack.c.l.b16 %v1503
        %v1563 = vunpack.c.l.b16 %v1504
        %v1564 = vunpack.c.l.b16 %v1505
        %v1565 = vunpack.c.l.b16 %v1506
        %v1566 = vunpack.c.l.b16 %v1507
        %v1567 = vunpack.c.l.b16 %v1508
        %v1568 = vunpack.c.l.b16 %v1509
        %v1569 = vunpack.c.l.b16 %v1510
        %v1570 = vunpack.c.l.b16 %v1511
        %v1571 = vunpack.c.l.b16 %v1512
        %v1572 = vunpack.c.l.b16 %v1513
        %v1573 = vunpack.c.l.b16 %v1514
        %v1574 = vunpack.c.l.b16 %v1515
        %v1575 = vpack.c.b16 %v1560, %v1559
        %v1576 = vpack.c.b16 %v1562, %v1561
        %v1577 = vpack.c.b16 %v1564, %v1563
        %v1578 = vpack.c.b16 %v1566, %v1565
        %v1579 = vpack.c.b16 %v1568, %v1567
        %v1580 = vpack.c.b16 %v1570, %v1569
        %v1581 = vpack.c.b16 %v1572, %v1571
        %v1582 = vpack.c.b16 %v1574, %v1573
        %1591 = vmatprep.subr.bf16.mxu0 0
        %1592 = vmatpush1.bf16.msra.mxu0 %v1575
        %1593 = vmatprep.subr.bf16.mxu0 0
        %1594 = vmatpush1.bf16.msra.mxu0 %v1576
        %1595 = vmatprep.subr.bf16.mxu0 0
        %1596 = vmatpush1.bf16.msra.mxu0 %v1577
        %1597 = vmatprep.subr.bf16.mxu0 0
        %1598 = vmatpush1.bf16.msra.mxu0 %v1578
        %1599 = vmatprep.subr.bf16.mxu0 0
        %1600 = vmatpush1.bf16.msra.mxu0 %v1579
        %1601 = vmatprep.subr.bf16.mxu0 0
        %1602 = vmatpush1.bf16.msra.mxu0 %v1580
        %1603 = vmatprep.subr.bf16.mxu0 0
        %1604 = vmatpush1.bf16.msra.mxu0 %v1581
        %1605 = vmatprep.subr.bf16.mxu0 0
        %1606 = vmatpush1.bf16.msra.mxu0 %v1582
        %1607 = vmatprep.subr.bf16.mxu0 0
        %1608 = vmatpush1.bf16.msra.mxu0 0
        %1609 = vmatprep.subr.bf16.mxu0 0
        %1610 = vmatpush1.bf16.msra.mxu0 0
        %1611 = vmatprep.subr.bf16.mxu0 0
        %1612 = vmatpush1.bf16.msra.mxu0 0
        %1613 = vmatprep.subr.bf16.mxu0 0
        %1614 = vmatpush1.bf16.msra.mxu0 0
        %1615 = vmatprep.subr.bf16.mxu0 0
        %1616 = vmatpush1.bf16.msra.mxu0 0
        %1617 = vmatprep.subr.bf16.mxu0 0
        %1618 = vmatpush1.bf16.msra.mxu0 0
        %1619 = vmatprep.subr.bf16.mxu0 0
        %1620 = vmatpush1.bf16.msra.mxu0 0
        %1621 = vmatprep.subr.bf16.mxu0 0
        %1622 = vmatpush1.bf16.msra.mxu0 0
        %1623 = vmatprep.mubr.bf16.mxu0 0
        %1624 = vmatmul.mubr.bf16.gmra.mrb[0].mxu0 %v1537
        %v1625 = vpop.f32.mrb[0].mxu0
        %v1626 = vadd.f32 0.0, %v1625
        %v1627 = vpop.f32.mrb[0].mxu0
        %v1628 = vpop.f32.mrb[0].mxu0
        %v1629 = vadd.f32 0.0, %v1628
        %v1630 = vpop.f32.mrb[0].mxu0
        %1631 = vmatprep.mubr.bf16.mxu0 0
        %1632 = vmatmul.mubr.bf16.gmra.mrb[0].mxu0 %v1540
        %v1633 = vpop.f32.mrb[0].mxu0
        %v1634 = vadd.f32 0.0, %v1633
        %v1635 = vpop.f32.mrb[0].mxu0
        %v1636 = vpop.f32.mrb[0].mxu0
        %v1637 = vpop.f32.mrb[0].mxu0
        %1638 = vdwg.mxu0
        %v1639 = vadd.f32 %v245, %v1626
        %v1640 = vadd.f32 %v245, %v1629
        %v1641 = vadd.f32 %v245, %v1634
        %v1642 = vld [vmem:[%s238] sm:$0xe]
        %s1643 = scalar_lea.vmem [#allocation2], 1344
        %v1644 = vld [vmem:[%s1643] sm:$0xf]
        %v1645 = vld [vmem:[%s1643 + $0x4] sm:$0xf]
        %v1646 = vld [vmem:[%s1643 + $0x8] sm:$0xf]
        %v1647 = vld [vmem:[%s1643 + $0xc] sm:$0xf]
        %v1648 = vld [vmem:[%s1643 + $0x10] sm:$0xf]
        %v1649 = vld [vmem:[%s1643 + $0x14] sm:$0xf]
        %v1650 = vld [vmem:[%s1643 + $0x18] sm:$0xf]
        %v1651 = vld [vmem:[%s1643 + $0x1c] sm:$0xf]
        %v1652 = vld [vmem:[%s1643 + $0x20] sm:$0xf]
        %v1653 = vld [vmem:[%s1643 + $0x24] sm:$0xf]
        %v1654 = vld [vmem:[%s1643 + $0x28] sm:$0xf]
        %v1655 = vld [vmem:[%s1643 + $0x2c] sm:$0xf]
        %v1656 = vld [vmem:[%s1643 + $0x30] sm:$0xf]
        %v1657 = vld [vmem:[%s1643 + $0x34] sm:$0xf]
        %v1658 = vld [vmem:[%s1643 + $0x38] sm:$0xf]
        %v1659 = vld [vmem:[%s1643 + $0x3c] sm:$0xf]
        %v1661 = vunpack.c.l.b16 %v1642
        %v1662 = vpack.c.b16 %v1521, %v1661
        %v1663 = vrot.slane %v1662, 1
        %v1664 = vrot.slane %v1525, 1
        %v1665 = vsel %vm546, %v1663, %v1664
        %v1684 = vunpack.c.l.b16 %v1644
        %v1685 = vunpack.c.l.b16 %v1645
        %v1686 = vunpack.c.l.b16 %v1646
        %v1687 = vunpack.c.l.b16 %v1647
        %v1688 = vunpack.c.l.b16 %v1648
        %v1689 = vunpack.c.l.b16 %v1649
        %v1690 = vunpack.c.l.b16 %v1650
        %v1691 = vunpack.c.l.b16 %v1651
        %v1692 = vunpack.c.l.b16 %v1652
        %v1693 = vunpack.c.l.b16 %v1653
        %v1694 = vunpack.c.l.b16 %v1654
        %v1695 = vunpack.c.l.b16 %v1655
        %v1696 = vunpack.c.l.b16 %v1656
        %v1697 = vunpack.c.l.b16 %v1657
        %v1698 = vunpack.c.l.b16 %v1658
        %v1699 = vunpack.c.l.b16 %v1659
        %v1700 = vpack.c.b16 %v1685, %v1684
        %v1701 = vpack.c.b16 %v1687, %v1686
        %v1702 = vpack.c.b16 %v1689, %v1688
        %v1703 = vpack.c.b16 %v1691, %v1690
        %v1704 = vpack.c.b16 %v1693, %v1692
        %v1705 = vpack.c.b16 %v1695, %v1694
        %v1706 = vpack.c.b16 %v1697, %v1696
        %v1707 = vpack.c.b16 %v1699, %v1698
        %1716 = vmatprep.subr.bf16.mxu0 0
        %1717 = vmatpush1.bf16.msra.mxu0 %v1700
        %1718 = vmatprep.subr.bf16.mxu0 0
        %1719 = vmatpush1.bf16.msra.mxu0 %v1701
        %1720 = vmatprep.subr.bf16.mxu0 0
        %1721 = vmatpush1.bf16.msra.mxu0 %v1702
        %1722 = vmatprep.subr.bf16.mxu0 0
        %1723 = vmatpush1.bf16.msra.mxu0 %v1703
        %1724 = vmatprep.subr.bf16.mxu0 0
        %1725 = vmatpush1.bf16.msra.mxu0 %v1704
        %1726 = vmatprep.subr.bf16.mxu0 0
        %1727 = vmatpush1.bf16.msra.mxu0 %v1705
        %1728 = vmatprep.subr.bf16.mxu0 0
        %1729 = vmatpush1.bf16.msra.mxu0 %v1706
        %1730 = vmatprep.subr.bf16.mxu0 0
        %1731 = vmatpush1.bf16.msra.mxu0 %v1707
        %1732 = vmatprep.subr.bf16.mxu0 0
        %1733 = vmatpush1.bf16.msra.mxu0 0
        %1734 = vmatprep.subr.bf16.mxu0 0
        %1735 = vmatpush1.bf16.msra.mxu0 0
        %1736 = vmatprep.subr.bf16.mxu0 0
        %1737 = vmatpush1.bf16.msra.mxu0 0
        %1738 = vmatprep.subr.bf16.mxu0 0
        %1739 = vmatpush1.bf16.msra.mxu0 0
        %1740 = vmatprep.subr.bf16.mxu0 0
        %1741 = vmatpush1.bf16.msra.mxu0 0
        %1742 = vmatprep.subr.bf16.mxu0 0
        %1743 = vmatpush1.bf16.msra.mxu0 0
        %1744 = vmatprep.subr.bf16.mxu0 0
        %1745 = vmatpush1.bf16.msra.mxu0 0
        %1746 = vmatprep.subr.bf16.mxu0 0
        %1747 = vmatpush1.bf16.msra.mxu0 0
        %1748 = vmatprep.mubr.bf16.mxu0 0
        %1749 = vmatmul.mubr.bf16.gmra.mrb[0].mxu0 %v1665
        %v1750 = vpop.f32.mrb[0].mxu0
        %v1751 = vadd.f32 0.0, %v1750
        %v1752 = vpop.f32.mrb[0].mxu0
        %v1753 = vpop.f32.mrb[0].mxu0
        %v1754 = vadd.f32 0.0, %v1753
        %v1755 = vpop.f32.mrb[0].mxu0
        %1756 = vmatprep.mubr.bf16.mxu0 0
        %1757 = vmatmul.mubr.bf16.gmra.mrb[0].mxu0 %v1664
        %v1758 = vpop.f32.mrb[0].mxu0
        %v1759 = vadd.f32 0.0, %v1758
        %v1760 = vpop.f32.mrb[0].mxu0
        %v1761 = vpop.f32.mrb[0].mxu0
        %v1762 = vpop.f32.mrb[0].mxu0
        %1763 = vdwg.mxu0
        %v1764 = vadd.f32 %v1639, %v1751
        %v1765 = vadd.f32 %v1640, %v1754
        %v1766 = vadd.f32 %v1641, %v1759
        %v1767 = vld [vmem:[%s238] sm:$0x8]
        %v1768 = vld [vmem:[%s238 + $0xc] sm:$0xf]
        %s1769 = scalar_lea.vmem [#allocation2], 832
        %v1770 = vld [vmem:[%s1769] sm:$0xf]
        %v1771 = vld [vmem:[%s1769 + $0x4] sm:$0xf]
        %v1772 = vld [vmem:[%s1769 + $0x8] sm:$0xf]
        %v1773 = vld [vmem:[%s1769 + $0xc] sm:$0xf]
        %v1774 = vld [vmem:[%s1769 + $0x10] sm:$0xf]
        %v1775 = vld [vmem:[%s1769 + $0x14] sm:$0xf]
        %v1776 = vld [vmem:[%s1769 + $0x18] sm:$0xf]
        %v1777 = vld [vmem:[%s1769 + $0x1c] sm:$0xf]
        %v1778 = vld [vmem:[%s1769 + $0x20] sm:$0xf]
        %v1779 = vld [vmem:[%s1769 + $0x24] sm:$0xf]
        %v1780 = vld [vmem:[%s1769 + $0x28] sm:$0xf]
        %v1781 = vld [vmem:[%s1769 + $0x2c] sm:$0xf]
        %v1782 = vld [vmem:[%s1769 + $0x30] sm:$0xf]
        %v1783 = vld [vmem:[%s1769 + $0x34] sm:$0xf]
        %v1784 = vld [vmem:[%s1769 + $0x38] sm:$0xf]
        %v1785 = vld [vmem:[%s1769 + $0x3c] sm:$0xf]
        %v1788 = vunpack.c.l.b16 %v1767
        %v1789 = vunpack.c.l.b16 %v1768
        %v1790 = vpack.c.b16 %v1521, %v1788
        %v1791 = vpack.c.b16 %v1789, %v1522
        %v1793 = vshrl.u32 %v1790, 16
        %v1795 = vrot.slane %v1793, 3
        %v1796 = vshll.u32 %v1790, 16
        %v1798 = vrot.slane %v1796, 4
        %v1799 = vor.u32 %v1795, %v1798
        %v1801 = vshrl.u32 %v1791, 16
        %v1803 = vrot.slane %v1801, 3
        %v1804 = vshll.u32 %v1791, 16
        %v1806 = vrot.slane %v1804, 4
        %v1807 = vor.u32 %v1803, %v1806
        %v1808 = vsel %vm802, %v1799, %v1807
        %v1827 = vunpack.c.l.b16 %v1770
        %v1828 = vunpack.c.l.b16 %v1771
        %v1829 = vunpack.c.l.b16 %v1772
        %v1830 = vunpack.c.l.b16 %v1773
        %v1831 = vunpack.c.l.b16 %v1774
        %v1832 = vunpack.c.l.b16 %v1775
        %v1833 = vunpack.c.l.b16 %v1776
        %v1834 = vunpack.c.l.b16 %v1777
        %v1835 = vunpack.c.l.b16 %v1778
        %v1836 = vunpack.c.l.b16 %v1779
        %v1837 = vunpack.c.l.b16 %v1780
        %v1838 = vunpack.c.l.b16 %v1781
        %v1839 = vunpack.c.l.b16 %v1782
        %v1840 = vunpack.c.l.b16 %v1783
        %v1841 = vunpack.c.l.b16 %v1784
        %v1842 = vunpack.c.l.b16 %v1785
        %v1843 = vpack.c.b16 %v1828, %v1827
        %v1844 = vpack.c.b16 %v1830, %v1829
        %v1845 = vpack.c.b16 %v1832, %v1831
        %v1846 = vpack.c.b16 %v1834, %v1833
        %v1847 = vpack.c.b16 %v1836, %v1835
        %v1848 = vpack.c.b16 %v1838, %v1837
        %v1849 = vpack.c.b16 %v1840, %v1839
        %v1850 = vpack.c.b16 %v1842, %v1841
        %1859 = vmatprep.subr.bf16.mxu0 0
        %1860 = vmatpush1.bf16.msra.mxu0 %v1843
        %1861 = vmatprep.subr.bf16.mxu0 0
        %1862 = vmatpush1.bf16.msra.mxu0 %v1844
        %1863 = vmatprep.subr.bf16.mxu0 0
        %1864 = vmatpush1.bf16.msra.mxu0 %v1845
        %1865 = vmatprep.subr.bf16.mxu0 0
        %1866 = vmatpush1.bf16.msra.mxu0 %v1846
        %1867 = vmatprep.subr.bf16.mxu0 0
        %1868 = vmatpush1.bf16.msra.mxu0 %v1847
        %1869 = vmatprep.subr.bf16.mxu0 0
        %1870 = vmatpush1.bf16.msra.mxu0 %v1848
        %1871 = vmatprep.subr.bf16.mxu0 0
        %1872 = vmatpush1.bf16.msra.mxu0 %v1849
        %1873 = vmatprep.subr.bf16.mxu0 0
        %1874 = vmatpush1.bf16.msra.mxu0 %v1850
        %1875 = vmatprep.subr.bf16.mxu0 0
        %1876 = vmatpush1.bf16.msra.mxu0 0
        %1877 = vmatprep.subr.bf16.mxu0 0
        %1878 = vmatpush1.bf16.msra.mxu0 0
        %1879 = vmatprep.subr.bf16.mxu0 0
        %1880 = vmatpush1.bf16.msra.mxu0 0
        %1881 = vmatprep.subr.bf16.mxu0 0
        %1882 = vmatpush1.bf16.msra.mxu0 0
        %1883 = vmatprep.subr.bf16.mxu0 0
        %1884 = vmatpush1.bf16.msra.mxu0 0
        %1885 = vmatprep.subr.bf16.mxu0 0
        %1886 = vmatpush1.bf16.msra.mxu0 0
        %1887 = vmatprep.subr.bf16.mxu0 0
        %1888 = vmatpush1.bf16.msra.mxu0 0
        %1889 = vmatprep.subr.bf16.mxu0 0
        %1890 = vmatpush1.bf16.msra.mxu0 0
        %1891 = vmatprep.mubr.bf16.mxu0 0
        %1892 = vmatmul.mubr.bf16.gmra.mrb[0].mxu0 %v1808
        %v1893 = vpop.f32.mrb[0].mxu0
        %v1894 = vadd.f32 0.0, %v1893
        %v1895 = vpop.f32.mrb[0].mxu0
        %v1896 = vpop.f32.mrb[0].mxu0
        %v1897 = vadd.f32 0.0, %v1896
        %v1898 = vpop.f32.mrb[0].mxu0
        %1899 = vmatprep.mubr.bf16.mxu0 0
        %1900 = vmatmul.mubr.bf16.gmra.mrb[0].mxu0 %v1807
        %v1901 = vpop.f32.mrb[0].mxu0
        %v1902 = vadd.f32 0.0, %v1901
        %v1903 = vpop.f32.mrb[0].mxu0
        %v1904 = vpop.f32.mrb[0].mxu0
        %v1905 = vpop.f32.mrb[0].mxu0
        %1906 = vdwg.mxu0
        %v1907 = vadd.f32 %v1764, %v1894
        %v1908 = vadd.f32 %v1765, %v1897
        %v1909 = vadd.f32 %v1766, %v1902
        %s1910 = scalar_lea.vmem [#allocation2], 704
        %v1911 = vld [vmem:[%s1910] sm:$0xf]
        %v1912 = vld [vmem:[%s1910 + $0x4] sm:$0xf]
        %v1913 = vld [vmem:[%s1910 + $0x8] sm:$0xf]
        %v1914 = vld [vmem:[%s1910 + $0xc] sm:$0xf]
        %v1915 = vld [vmem:[%s1910 + $0x10] sm:$0xf]
        %v1916 = vld [vmem:[%s1910 + $0x14] sm:$0xf]
        %v1917 = vld [vmem:[%s1910 + $0x18] sm:$0xf]
        %v1918 = vld [vmem:[%s1910 + $0x1c] sm:$0xf]
        %v1919 = vld [vmem:[%s1910 + $0x20] sm:$0xf]
        %v1920 = vld [vmem:[%s1910 + $0x24] sm:$0xf]
        %v1921 = vld [vmem:[%s1910 + $0x28] sm:$0xf]
        %v1922 = vld [vmem:[%s1910 + $0x2c] sm:$0xf]
        %v1923 = vld [vmem:[%s1910 + $0x30] sm:$0xf]
        %v1924 = vld [vmem:[%s1910 + $0x34] sm:$0xf]
        %v1925 = vld [vmem:[%s1910 + $0x38] sm:$0xf]
        %v1926 = vld [vmem:[%s1910 + $0x3c] sm:$0xf]
        %v1927 = vpack.c.b16 %v1522, %v1521
        %v1928 = vpack.c.b16 %v1789, %v1789
        %v1947 = vunpack.c.l.b16 %v1911
        %v1948 = vunpack.c.l.b16 %v1912
        %v1949 = vunpack.c.l.b16 %v1913
        %v1950 = vunpack.c.l.b16 %v1914
        %v1951 = vunpack.c.l.b16 %v1915
        %v1952 = vunpack.c.l.b16 %v1916
        %v1953 = vunpack.c.l.b16 %v1917
        %v1954 = vunpack.c.l.b16 %v1918
        %v1955 = vunpack.c.l.b16 %v1919
        %v1956 = vunpack.c.l.b16 %v1920
        %v1957 = vunpack.c.l.b16 %v1921
        %v1958 = vunpack.c.l.b16 %v1922
        %v1959 = vunpack.c.l.b16 %v1923
        %v1960 = vunpack.c.l.b16 %v1924
        %v1961 = vunpack.c.l.b16 %v1925
        %v1962 = vunpack.c.l.b16 %v1926
        %v1963 = vpack.c.b16 %v1948, %v1947
        %v1964 = vpack.c.b16 %v1950, %v1949
        %v1965 = vpack.c.b16 %v1952, %v1951
        %v1966 = vpack.c.b16 %v1954, %v1953
        %v1967 = vpack.c.b16 %v1956, %v1955
        %v1968 = vpack.c.b16 %v1958, %v1957
        %v1969 = vpack.c.b16 %v1960, %v1959
        %v1970 = vpack.c.b16 %v1962, %v1961
        %1979 = vmatprep.subr.bf16.mxu0 0
        %1980 = vmatpush1.bf16.msra.mxu0 %v1963
        %1981 = vmatprep.subr.bf16.mxu0 0
        %1982 = vmatpush1.bf16.msra.mxu0 %v1964
        %1983 = vmatprep.subr.bf16.mxu0 0
        %1984 = vmatpush1.bf16.msra.mxu0 %v1965
        %1985 = vmatprep.subr.bf16.mxu0 0
        %1986 = vmatpush1.bf16.msra.mxu0 %v1966
        %1987 = vmatprep.subr.bf16.mxu0 0
        %1988 = vmatpush1.bf16.msra.mxu0 %v1967
        %1989 = vmatprep.subr.bf16.mxu0 0
        %1990 = vmatpush1.bf16.msra.mxu0 %v1968
        %1991 = vmatprep.subr.bf16.mxu0 0
        %1992 = vmatpush1.bf16.msra.mxu0 %v1969
        %1993 = vmatprep.subr.bf16.mxu0 0
        %1994 = vmatpush1.bf16.msra.mxu0 %v1970
        %1995 = vmatprep.subr.bf16.mxu0 0
        %1996 = vmatpush1.bf16.msra.mxu0 0
        %1997 = vmatprep.subr.bf16.mxu0 0
        %1998 = vmatpush1.bf16.msra.mxu0 0
        %1999 = vmatprep.subr.bf16.mxu0 0
        %2000 = vmatpush1.bf16.msra.mxu0 0
        %2001 = vmatprep.subr.bf16.mxu0 0
        %2002 = vmatpush1.bf16.msra.mxu0 0
        %2003 = vmatprep.subr.bf16.mxu0 0
        %2004 = vmatpush1.bf16.msra.mxu0 0
        %2005 = vmatprep.subr.bf16.mxu0 0
        %2006 = vmatpush1.bf16.msra.mxu0 0
        %2007 = vmatprep.subr.bf16.mxu0 0
        %2008 = vmatpush1.bf16.msra.mxu0 0
        %2009 = vmatprep.subr.bf16.mxu0 0
        %2010 = vmatpush1.bf16.msra.mxu0 0
        %2011 = vmatprep.mubr.bf16.mxu0 0
        %2012 = vmatmul.mubr.bf16.gmra.mrb[0].mxu0 %v1927
        %v2013 = vpop.f32.mrb[0].mxu0
        %v2014 = vadd.f32 0.0, %v2013
        %v2015 = vpop.f32.mrb[0].mxu0
        %v2016 = vpop.f32.mrb[0].mxu0
        %v2017 = vadd.f32 0.0, %v2016
        %v2018 = vpop.f32.mrb[0].mxu0
        %2019 = vmatprep.mubr.bf16.mxu0 0
        %2020 = vmatmul.mubr.bf16.gmra.mrb[0].mxu0 %v1928
        %v2021 = vpop.f32.mrb[0].mxu0
        %v2022 = vadd.f32 0.0, %v2021
        %v2023 = vpop.f32.mrb[0].mxu0
        %v2024 = vpop.f32.mrb[0].mxu0
        %v2025 = vpop.f32.mrb[0].mxu0
        %2026 = vdwg.mxu0
        %v2027 = vadd.f32 %v1907, %v2014
        %v2028 = vadd.f32 %v1908, %v2017
        %v2029 = vadd.f32 %v1909, %v2022
        %v2030 = vld [vmem:[%s238 + $0x4] sm:$0xc]
        %v2031 = vld [vmem:[%s238 + $0x8] sm:$0xf]
        %v2032 = vld [vmem:[%s238 + $0xc] sm:$0xf]
        %v2033 = vld [vmem:[%s238 + $0x10] sm:$0x7]
        %s2034 = scalar_lea.vmem [#allocation2], 192
        %v2035 = vld [vmem:[%s2034] sm:$0xf]
        %v2036 = vld [vmem:[%s2034 + $0x4] sm:$0xf]
        %v2037 = vld [vmem:[%s2034 + $0x8] sm:$0xf]
        %v2038 = vld [vmem:[%s2034 + $0xc] sm:$0xf]
        %v2039 = vld [vmem:[%s2034 + $0x10] sm:$0xf]
        %v2040 = vld [vmem:[%s2034 + $0x14] sm:$0xf]
        %v2041 = vld [vmem:[%s2034 + $0x18] sm:$0xf]
        %v2042 = vld [vmem:[%s2034 + $0x1c] sm:$0xf]
        %v2043 = vld [vmem:[%s2034 + $0x20] sm:$0xf]
        %v2044 = vld [vmem:[%s2034 + $0x24] sm:$0xf]
        %v2045 = vld [vmem:[%s2034 + $0x28] sm:$0xf]
        %v2046 = vld [vmem:[%s2034 + $0x2c] sm:$0xf]
        %v2047 = vld [vmem:[%s2034 + $0x30] sm:$0xf]
        %v2048 = vld [vmem:[%s2034 + $0x34] sm:$0xf]
        %v2049 = vld [vmem:[%s2034 + $0x38] sm:$0xf]
        %v2050 = vld [vmem:[%s2034 + $0x3c] sm:$0xf]
        %v2055 = vunpack.c.l.b16 %v2030
        %v2056 = vunpack.c.l.b16 %v2031
        %v2057 = vunpack.c.l.b16 %v2032
        %v2058 = vunpack.c.l.b16 %v2033
        %v2059 = vpack.c.b16 %v2056, %v2055
        %v2060 = vpack.c.b16 %v2058, %v2057
        %v2062 = vshrl.u32 %v2059, 16
        %v2064 = vrot.slane %v2062, 2
        %v2065 = vshll.u32 %v2059, 16
        %v2067 = vrot.slane %v2065, 3
        %v2068 = vor.u32 %v2064, %v2067
        %v2070 = vshrl.u32 %v2060, 16
        %v2072 = vrot.slane %v2070, 2
        %v2073 = vshll.u32 %v2060, 16
        %v2075 = vrot.slane %v2073, 3
        %v2076 = vor.u32 %v2072, %v2075
        %v2077 = vsel %vm1198, %v2068, %v2076
        %v2096 = vunpack.c.l.b16 %v2035
        %v2097 = vunpack.c.l.b16 %v2036
        %v2098 = vunpack.c.l.b16 %v2037
        %v2099 = vunpack.c.l.b16 %v2038
        %v2100 = vunpack.c.l.b16 %v2039
        %v2101 = vunpack.c.l.b16 %v2040
        %v2102 = vunpack.c.l.b16 %v2041
        %v2103 = vunpack.c.l.b16 %v2042
        %v2104 = vunpack.c.l.b16 %v2043
        %v2105 = vunpack.c.l.b16 %v2044
        %v2106 = vunpack.c.l.b16 %v2045
        %v2107 = vunpack.c.l.b16 %v2046
        %v2108 = vunpack.c.l.b16 %v2047
        %v2109 = vunpack.c.l.b16 %v2048
        %v2110 = vunpack.c.l.b16 %v2049
        %v2111 = vunpack.c.l.b16 %v2050
        %v2112 = vpack.c.b16 %v2097, %v2096
        %v2113 = vpack.c.b16 %v2099, %v2098
        %v2114 = vpack.c.b16 %v2101, %v2100
        %v2115 = vpack.c.b16 %v2103, %v2102
        %v2116 = vpack.c.b16 %v2105, %v2104
        %v2117 = vpack.c.b16 %v2107, %v2106
        %v2118 = vpack.c.b16 %v2109, %v2108
        %v2119 = vpack.c.b16 %v2111, %v2110
        %2128 = vmatprep.subr.bf16.mxu0 0
        %2129 = vmatpush1.bf16.msra.mxu0 %v2112
        %2130 = vmatprep.subr.bf16.mxu0 0
        %2131 = vmatpush1.bf16.msra.mxu0 %v2113
        %2132 = vmatprep.subr.bf16.mxu0 0
        %2133 = vmatpush1.bf16.msra.mxu0 %v2114
        %2134 = vmatprep.subr.bf16.mxu0 0
        %2135 = vmatpush1.bf16.msra.mxu0 %v2115
        %2136 = vmatprep.subr.bf16.mxu0 0
        %2137 = vmatpush1.bf16.msra.mxu0 %v2116
        %2138 = vmatprep.subr.bf16.mxu0 0
        %2139 = vmatpush1.bf16.msra.mxu0 %v2117
        %2140 = vmatprep.subr.bf16.mxu0 0
        %2141 = vmatpush1.bf16.msra.mxu0 %v2118
        %2142 = vmatprep.subr.bf16.mxu0 0
        %2143 = vmatpush1.bf16.msra.mxu0 %v2119
        %2144 = vmatprep.subr.bf16.mxu0 0
        %2145 = vmatpush1.bf16.msra.mxu0 0
        %2146 = vmatprep.subr.bf16.mxu0 0
        %2147 = vmatpush1.bf16.msra.mxu0 0
        %2148 = vmatprep.subr.bf16.mxu0 0
        %2149 = vmatpush1.bf16.msra.mxu0 0
        %2150 = vmatprep.subr.bf16.mxu0 0
        %2151 = vmatpush1.bf16.msra.mxu0 0
        %2152 = vmatprep.subr.bf16.mxu0 0
        %2153 = vmatpush1.bf16.msra.mxu0 0
        %2154 = vmatprep.subr.bf16.mxu0 0
        %2155 = vmatpush1.bf16.msra.mxu0 0
        %2156 = vmatprep.subr.bf16.mxu0 0
        %2157 = vmatpush1.bf16.msra.mxu0 0
        %2158 = vmatprep.subr.bf16.mxu0 0
        %2159 = vmatpush1.bf16.msra.mxu0 0
        %2160 = vmatprep.mubr.bf16.mxu0 0
        %2161 = vmatmul.mubr.bf16.gmra.mrb[0].mxu0 %v2077
        %v2162 = vpop.f32.mrb[0].mxu0
        %v2163 = vadd.f32 0.0, %v2162
        %v2164 = vpop.f32.mrb[0].mxu0
        %v2165 = vpop.f32.mrb[0].mxu0
        %v2166 = vadd.f32 0.0, %v2165
        %v2167 = vpop.f32.mrb[0].mxu0
        %2168 = vmatprep.mubr.bf16.mxu0 0
        %2169 = vmatmul.mubr.bf16.gmra.mrb[0].mxu0 %v2076
        %v2170 = vpop.f32.mrb[0].mxu0
        %v2171 = vadd.f32 0.0, %v2170
        %v2172 = vpop.f32.mrb[0].mxu0
        %v2173 = vpop.f32.mrb[0].mxu0
        %v2174 = vpop.f32.mrb[0].mxu0
        %2175 = vdwg.mxu0
        %v2176 = vadd.f32 %v2027, %v2163
        %v2177 = vadd.f32 %v2028, %v2166
        %v2178 = vadd.f32 %v2029, %v2171
        %v2179 = vld [vmem:[%s238 + $0x4] sm:$0x8]
        %s2180 = scalar_lea.vmem [#allocation2], 64
        %v2181 = vld [vmem:[%s2180] sm:$0xf]
        %v2182 = vld [vmem:[%s2180 + $0x4] sm:$0xf]
        %v2183 = vld [vmem:[%s2180 + $0x8] sm:$0xf]
        %v2184 = vld [vmem:[%s2180 + $0xc] sm:$0xf]
        %v2185 = vld [vmem:[%s2180 + $0x10] sm:$0xf]
        %v2186 = vld [vmem:[%s2180 + $0x14] sm:$0xf]
        %v2187 = vld [vmem:[%s2180 + $0x18] sm:$0xf]
        %v2188 = vld [vmem:[%s2180 + $0x1c] sm:$0xf]
        %v2189 = vld [vmem:[%s2180 + $0x20] sm:$0xf]
        %v2190 = vld [vmem:[%s2180 + $0x24] sm:$0xf]
        %v2191 = vld [vmem:[%s2180 + $0x28] sm:$0xf]
        %v2192 = vld [vmem:[%s2180 + $0x2c] sm:$0xf]
        %v2193 = vld [vmem:[%s2180 + $0x30] sm:$0xf]
        %v2194 = vld [vmem:[%s2180 + $0x34] sm:$0xf]
        %v2195 = vld [vmem:[%s2180 + $0x38] sm:$0xf]
        %v2196 = vld [vmem:[%s2180 + $0x3c] sm:$0xf]
        %v2198 = vunpack.c.l.b16 %v2179
        %v2199 = vpack.c.b16 %v2056, %v2198
        %v2200 = vrot.slane %v2199, 3
        %v2201 = vrot.slane %v2060, 3
        %v2202 = vsel %vm676, %v2200, %v2201
        %v2221 = vunpack.c.l.b16 %v2181
        %v2222 = vunpack.c.l.b16 %v2182
        %v2223 = vunpack.c.l.b16 %v2183
        %v2224 = vunpack.c.l.b16 %v2184
        %v2225 = vunpack.c.l.b16 %v2185
        %v2226 = vunpack.c.l.b16 %v2186
        %v2227 = vunpack.c.l.b16 %v2187
        %v2228 = vunpack.c.l.b16 %v2188
        %v2229 = vunpack.c.l.b16 %v2189
        %v2230 = vunpack.c.l.b16 %v2190
        %v2231 = vunpack.c.l.b16 %v2191
        %v2232 = vunpack.c.l.b16 %v2192
        %v2233 = vunpack.c.l.b16 %v2193
        %v2234 = vunpack.c.l.b16 %v2194
        %v2235 = vunpack.c.l.b16 %v2195
        %v2236 = vunpack.c.l.b16 %v2196
        %v2237 = vpack.c.b16 %v2222, %v2221
        %v2238 = vpack.c.b16 %v2224, %v2223
        %v2239 = vpack.c.b16 %v2226, %v2225
        %v2240 = vpack.c.b16 %v2228, %v2227
        %v2241 = vpack.c.b16 %v2230, %v2229
        %v2242 = vpack.c.b16 %v2232, %v2231
        %v2243 = vpack.c.b16 %v2234, %v2233
        %v2244 = vpack.c.b16 %v2236, %v2235
        %2253 = vmatprep.subr.bf16.mxu0 0
        %2254 = vmatpush1.bf16.msra.mxu0 %v2237
        %2255 = vmatprep.subr.bf16.mxu0 0
        %2256 = vmatpush1.bf16.msra.mxu0 %v2238
        %2257 = vmatprep.subr.bf16.mxu0 0
        %2258 = vmatpush1.bf16.msra.mxu0 %v2239
        %2259 = vmatprep.subr.bf16.mxu0 0
        %2260 = vmatpush1.bf16.msra.mxu0 %v2240
        %2261 = vmatprep.subr.bf16.mxu0 0
        %2262 = vmatpush1.bf16.msra.mxu0 %v2241
        %2263 = vmatprep.subr.bf16.mxu0 0
        %2264 = vmatpush1.bf16.msra.mxu0 %v2242
        %2265 = vmatprep.subr.bf16.mxu0 0
        %2266 = vmatpush1.bf16.msra.mxu0 %v2243
        %2267 = vmatprep.subr.bf16.mxu0 0
        %2268 = vmatpush1.bf16.msra.mxu0 %v2244
        %2269 = vmatprep.subr.bf16.mxu0 0
        %2270 = vmatpush1.bf16.msra.mxu0 0
        %2271 = vmatprep.subr.bf16.mxu0 0
        %2272 = vmatpush1.bf16.msra.mxu0 0
        %2273 = vmatprep.subr.bf16.mxu0 0
        %2274 = vmatpush1.bf16.msra.mxu0 0
        %2275 = vmatprep.subr.bf16.mxu0 0
        %2276 = vmatpush1.bf16.msra.mxu0 0
        %2277 = vmatprep.subr.bf16.mxu0 0
        %2278 = vmatpush1.bf16.msra.mxu0 0
        %2279 = vmatprep.subr.bf16.mxu0 0
        %2280 = vmatpush1.bf16.msra.mxu0 0
        %2281 = vmatprep.subr.bf16.mxu0 0
        %2282 = vmatpush1.bf16.msra.mxu0 0
        %2283 = vmatprep.subr.bf16.mxu0 0
        %2284 = vmatpush1.bf16.msra.mxu0 0
        %2285 = vmatprep.mubr.bf16.mxu0 0
        %2286 = vmatmul.mubr.bf16.gmra.mrb[0].mxu0 %v2202
        %v2287 = vpop.f32.mrb[0].mxu0
        %v2288 = vadd.f32 0.0, %v2287
        %v2289 = vpop.f32.mrb[0].mxu0
        %v2290 = vpop.f32.mrb[0].mxu0
        %v2291 = vadd.f32 0.0, %v2290
        %v2292 = vpop.f32.mrb[0].mxu0
        %2293 = vmatprep.mubr.bf16.mxu0 0
        %2294 = vmatmul.mubr.bf16.gmra.mrb[0].mxu0 %v2201
        %v2295 = vpop.f32.mrb[0].mxu0
        %v2296 = vadd.f32 0.0, %v2295
        %v2297 = vpop.f32.mrb[0].mxu0
        %v2298 = vpop.f32.mrb[0].mxu0
        %v2299 = vpop.f32.mrb[0].mxu0
        %2300 = vdwg.mxu0
        %v2301 = vadd.f32 %v2176, %v2288
        %v2302 = vadd.f32 %v2177, %v2291
        %v2303 = vadd.f32 %v2178, %v2296
        %v2304 = vmul.f32 %v2301, %v1445
        %v2305 = vmul.f32 %v2302, %v1445
        %v2306 = vmul.f32 %v2303, %v1445
        %v2307 = vadd.f32 %v2304, 4096.0
        %v2308 = vadd.f32 %v2305, 4096.0
        %v2309 = vadd.f32 %v2306, 4096.0
        %v2310 = vmul.f32 %v2307, %v1453
        %v2311 = vmul.f32 %v2308, %v1453
        %v2312 = vmul.f32 %v2309, %v1453
        %v2313 = vfloor.f32 %v2310
        %v2314 = vfloor.f32 %v2311
        %v2315 = vfloor.f32 %v2312
        %v2316 = vmax.f32 %v2313, 0.0
        %v2317 = vmax.f32 %v2314, 0.0
        %v2318 = vmax.f32 %v2315, 0.0
        %v2319 = vmin.f32 %v2316, 255.0
        %v2320 = vmin.f32 %v2317, 255.0
        %v2321 = vmin.f32 %v2318, 255.0
        %v2322 = vmul.f32 %v2319, 32768.0
        %v2323 = vmul.f32 %v2320, 32768.0
        %v2324 = vmul.f32 %v2321, 32768.0
        %v2325 = vadd.f32 %v2322, 524288.0
        %v2326 = vadd.f32 %v2323, 524288.0
        %v2327 = vadd.f32 %v2324, 524288.0
        %v2328 = vmul.f32 %v2325, %v1472
        %v2329 = vmul.f32 %v2326, %v1472
        %v2330 = vmul.f32 %v2327, %v1472
        %v2331 = vfloor.f32 %v2328
        %v2332 = vfloor.f32 %v2329
        %v2333 = vfloor.f32 %v2330
        %v2334 = vpack.c.bf16 %v2332, %v2331
        %v2335 = vpack.c.bf16 %v2333, %v2333
        %v2338 = vunpack.c.l.b16 %v2334
        %v2339 = vunpack.c.h.b16 %v2334
        %v2340 = vunpack.c.l.b16 %v2335
        %v2341 = vpack.c.b16 %v2338, %v2338
        %v2342 = vpack.c.b16 %v2339, %v2339
        %v2343 = vpack.c.b16 %v2340, %v2340
        %s2347 = scalar_lea.vmem %s229, 12 [#allocation5]
        %2348 = vst [vmem:[%s2347] sm:$0xf] %v2341
        %2349 = vst [vmem:[%s2347 + $0x4] sm:$0xf] %v2342
        %2350 = vst [vmem:[%s2347 + $0x8] sm:$0xf] %v2343
        %v2351 = vld [vmem:[%s238] sm:$0x8]
        %v2352 = vld [vmem:[%s238 + $0x4] sm:$0xf]
        %v2353 = vld [vmem:[%s238 + $0x8] sm:$0xf]
        %v2354 = vld [vmem:[%s238 + $0xc] sm:$0x7]
        %s2355 = scalar_lea.vmem [#allocation2], 1216
        %v2356 = vld [vmem:[%s2355] sm:$0xf]
        %v2357 = vld [vmem:[%s2355 + $0x4] sm:$0xf]
        %v2358 = vld [vmem:[%s2355 + $0x8] sm:$0xf]
        %v2359 = vld [vmem:[%s2355 + $0xc] sm:$0xf]
        %v2360 = vld [vmem:[%s2355 + $0x10] sm:$0xf]
        %v2361 = vld [vmem:[%s2355 + $0x14] sm:$0xf]
        %v2362 = vld [vmem:[%s2355 + $0x18] sm:$0xf]
        %v2363 = vld [vmem:[%s2355 + $0x1c] sm:$0xf]
        %v2364 = vld [vmem:[%s2355 + $0x20] sm:$0xf]
        %v2365 = vld [vmem:[%s2355 + $0x24] sm:$0xf]
        %v2366 = vld [vmem:[%s2355 + $0x28] sm:$0xf]
        %v2367 = vld [vmem:[%s2355 + $0x2c] sm:$0xf]
        %v2368 = vld [vmem:[%s2355 + $0x30] sm:$0xf]
        %v2369 = vld [vmem:[%s2355 + $0x34] sm:$0xf]
        %v2370 = vld [vmem:[%s2355 + $0x38] sm:$0xf]
        %v2371 = vld [vmem:[%s2355 + $0x3c] sm:$0xf]
        %v2376 = vunpack.c.l.b16 %v2351
        %v2377 = vunpack.c.l.b16 %v2352
        %v2378 = vunpack.c.l.b16 %v2353
        %v2379 = vunpack.c.l.b16 %v2354
        %v2380 = vpack.c.b16 %v2377, %v2376
        %v2381 = vpack.c.b16 %v2379, %v2378
        %v2382 = vrot.slane %v2380, 3
        %v2383 = vrot.slane %v2381, 3
        %v2384 = vsel %vm676, %v2382, %v2383
        %v2403 = vunpack.c.l.b16 %v2356
        %v2404 = vunpack.c.l.b16 %v2357
        %v2405 = vunpack.c.l.b16 %v2358
        %v2406 = vunpack.c.l.b16 %v2359
        %v2407 = vunpack.c.l.b16 %v2360
        %v2408 = vunpack.c.l.b16 %v2361
        %v2409 = vunpack.c.l.b16 %v2362
        %v2410 = vunpack.c.l.b16 %v2363
        %v2411 = vunpack.c.l.b16 %v2364
        %v2412 = vunpack.c.l.b16 %v2365
        %v2413 = vunpack.c.l.b16 %v2366
        %v2414 = vunpack.c.l.b16 %v2367
        %v2415 = vunpack.c.l.b16 %v2368
        %v2416 = vunpack.c.l.b16 %v2369
        %v2417 = vunpack.c.l.b16 %v2370
        %v2418 = vunpack.c.l.b16 %v2371
        %v2419 = vpack.c.b16 %v2404, %v2403
        %v2420 = vpack.c.b16 %v2406, %v2405
        %v2421 = vpack.c.b16 %v2408, %v2407
        %v2422 = vpack.c.b16 %v2410, %v2409
        %v2423 = vpack.c.b16 %v2412, %v2411
        %v2424 = vpack.c.b16 %v2414, %v2413
        %v2425 = vpack.c.b16 %v2416, %v2415
        %v2426 = vpack.c.b16 %v2418, %v2417
        %2435 = vmatprep.subr.bf16.mxu0 0
        %2436 = vmatpush1.bf16.msra.mxu0 %v2419
        %2437 = vmatprep.subr.bf16.mxu0 0
        %2438 = vmatpush1.bf16.msra.mxu0 %v2420
        %2439 = vmatprep.subr.bf16.mxu0 0
        %2440 = vmatpush1.bf16.msra.mxu0 %v2421
        %2441 = vmatprep.subr.bf16.mxu0 0
        %2442 = vmatpush1.bf16.msra.mxu0 %v2422
        %2443 = vmatprep.subr.bf16.mxu0 0
        %2444 = vmatpush1.bf16.msra.mxu0 %v2423
        %2445 = vmatprep.subr.bf16.mxu0 0
        %2446 = vmatpush1.bf16.msra.mxu0 %v2424
        %2447 = vmatprep.subr.bf16.mxu0 0
        %2448 = vmatpush1.bf16.msra.mxu0 %v2425
        %2449 = vmatprep.subr.bf16.mxu0 0
        %2450 = vmatpush1.bf16.msra.mxu0 %v2426
        %2451 = vmatprep.subr.bf16.mxu0 0
        %2452 = vmatpush1.bf16.msra.mxu0 0
        %2453 = vmatprep.subr.bf16.mxu0 0
        %2454 = vmatpush1.bf16.msra.mxu0 0
        %2455 = vmatprep.subr.bf16.mxu0 0
        %2456 = vmatpush1.bf16.msra.mxu0 0
        %2457 = vmatprep.subr.bf16.mxu0 0
        %2458 = vmatpush1.bf16.msra.mxu0 0
        %2459 = vmatprep.subr.bf16.mxu0 0
        %2460 = vmatpush1.bf16.msra.mxu0 0
        %2461 = vmatprep.subr.bf16.mxu0 0
        %2462 = vmatpush1.bf16.msra.mxu0 0
        %2463 = vmatprep.subr.bf16.mxu0 0
        %2464 = vmatpush1.bf16.msra.mxu0 0
        %2465 = vmatprep.subr.bf16.mxu0 0
        %2466 = vmatpush1.bf16.msra.mxu0 0
        %2467 = vmatprep.mubr.bf16.mxu0 0
        %2468 = vmatmul.mubr.bf16.gmra.mrb[0].mxu0 %v2384
        %v2469 = vpop.f32.mrb[0].mxu0
        %v2470 = vadd.f32 0.0, %v2469
        %v2471 = vpop.f32.mrb[0].mxu0
        %v2472 = vpop.f32.mrb[0].mxu0
        %v2473 = vadd.f32 0.0, %v2472
        %v2474 = vpop.f32.mrb[0].mxu0
        %2475 = vmatprep.mubr.bf16.mxu0 0
        %2476 = vmatmul.mubr.bf16.gmra.mrb[0].mxu0 %v2383
        %v2477 = vpop.f32.mrb[0].mxu0
        %v2478 = vadd.f32 0.0, %v2477
        %v2479 = vpop.f32.mrb[0].mxu0
        %v2480 = vpop.f32.mrb[0].mxu0
        %v2481 = vpop.f32.mrb[0].mxu0
        %2482 = vdwg.mxu0
        %v2483 = vadd.f32 %v245, %v2470
        %v2484 = vadd.f32 %v245, %v2473
        %v2485 = vadd.f32 %v245, %v2478
        %v2486 = vld [vmem:[%s238 + $0xc] sm:$0xf]
        %s2487 = scalar_lea.vmem [#allocation2], 1088
        %v2488 = vld [vmem:[%s2487] sm:$0xf]
        %v2489 = vld [vmem:[%s2487 + $0x4] sm:$0xf]
        %v2490 = vld [vmem:[%s2487 + $0x8] sm:$0xf]
        %v2491 = vld [vmem:[%s2487 + $0xc] sm:$0xf]
        %v2492 = vld [vmem:[%s2487 + $0x10] sm:$0xf]
        %v2493 = vld [vmem:[%s2487 + $0x14] sm:$0xf]
        %v2494 = vld [vmem:[%s2487 + $0x18] sm:$0xf]
        %v2495 = vld [vmem:[%s2487 + $0x1c] sm:$0xf]
        %v2496 = vld [vmem:[%s2487 + $0x20] sm:$0xf]
        %v2497 = vld [vmem:[%s2487 + $0x24] sm:$0xf]
        %v2498 = vld [vmem:[%s2487 + $0x28] sm:$0xf]
        %v2499 = vld [vmem:[%s2487 + $0x2c] sm:$0xf]
        %v2500 = vld [vmem:[%s2487 + $0x30] sm:$0xf]
        %v2501 = vld [vmem:[%s2487 + $0x34] sm:$0xf]
        %v2502 = vld [vmem:[%s2487 + $0x38] sm:$0xf]
        %v2503 = vld [vmem:[%s2487 + $0x3c] sm:$0xf]
        %v2505 = vunpack.c.l.b16 %v2486
        %v2506 = vpack.c.b16 %v2505, %v2378
        %v2508 = vshrl.u32 %v2380, 16
        %v2510 = vrot.slane %v2508, 3
        %v2511 = vshll.u32 %v2380, 16
        %v2513 = vrot.slane %v2511, 4
        %v2514 = vor.u32 %v2510, %v2513
        %v2516 = vshrl.u32 %v2506, 16
        %v2518 = vrot.slane %v2516, 3
        %v2519 = vshll.u32 %v2506, 16
        %v2521 = vrot.slane %v2519, 4
        %v2522 = vor.u32 %v2518, %v2521
        %v2523 = vsel %vm802, %v2514, %v2522
        %v2542 = vunpack.c.l.b16 %v2488
        %v2543 = vunpack.c.l.b16 %v2489
        %v2544 = vunpack.c.l.b16 %v2490
        %v2545 = vunpack.c.l.b16 %v2491
        %v2546 = vunpack.c.l.b16 %v2492
        %v2547 = vunpack.c.l.b16 %v2493
        %v2548 = vunpack.c.l.b16 %v2494
        %v2549 = vunpack.c.l.b16 %v2495
        %v2550 = vunpack.c.l.b16 %v2496
        %v2551 = vunpack.c.l.b16 %v2497
        %v2552 = vunpack.c.l.b16 %v2498
        %v2553 = vunpack.c.l.b16 %v2499
        %v2554 = vunpack.c.l.b16 %v2500
        %v2555 = vunpack.c.l.b16 %v2501
        %v2556 = vunpack.c.l.b16 %v2502
        %v2557 = vunpack.c.l.b16 %v2503
        %v2558 = vpack.c.b16 %v2543, %v2542
        %v2559 = vpack.c.b16 %v2545, %v2544
        %v2560 = vpack.c.b16 %v2547, %v2546
        %v2561 = vpack.c.b16 %v2549, %v2548
        %v2562 = vpack.c.b16 %v2551, %v2550
        %v2563 = vpack.c.b16 %v2553, %v2552
        %v2564 = vpack.c.b16 %v2555, %v2554
        %v2565 = vpack.c.b16 %v2557, %v2556
        %2574 = vmatprep.subr.bf16.mxu0 0
        %2575 = vmatpush1.bf16.msra.mxu0 %v2558
        %2576 = vmatprep.subr.bf16.mxu0 0
        %2577 = vmatpush1.bf16.msra.mxu0 %v2559
        %2578 = vmatprep.subr.bf16.mxu0 0
        %2579 = vmatpush1.bf16.msra.mxu0 %v2560
        %2580 = vmatprep.subr.bf16.mxu0 0
        %2581 = vmatpush1.bf16.msra.mxu0 %v2561
        %2582 = vmatprep.subr.bf16.mxu0 0
        %2583 = vmatpush1.bf16.msra.mxu0 %v2562
        %2584 = vmatprep.subr.bf16.mxu0 0
        %2585 = vmatpush1.bf16.msra.mxu0 %v2563
        %2586 = vmatprep.subr.bf16.mxu0 0
        %2587 = vmatpush1.bf16.msra.mxu0 %v2564
        %2588 = vmatprep.subr.bf16.mxu0 0
        %2589 = vmatpush1.bf16.msra.mxu0 %v2565
        %2590 = vmatprep.subr.bf16.mxu0 0
        %2591 = vmatpush1.bf16.msra.mxu0 0
        %2592 = vmatprep.subr.bf16.mxu0 0
        %2593 = vmatpush1.bf16.msra.mxu0 0
        %2594 = vmatprep.subr.bf16.mxu0 0
        %2595 = vmatpush1.bf16.msra.mxu0 0
        %2596 = vmatprep.subr.bf16.mxu0 0
        %2597 = vmatpush1.bf16.msra.mxu0 0
        %2598 = vmatprep.subr.bf16.mxu0 0
        %2599 = vmatpush1.bf16.msra.mxu0 0
        %2600 = vmatprep.subr.bf16.mxu0 0
        %2601 = vmatpush1.bf16.msra.mxu0 0
        %2602 = vmatprep.subr.bf16.mxu0 0
        %2603 = vmatpush1.bf16.msra.mxu0 0
        %2604 = vmatprep.subr.bf16.mxu0 0
        %2605 = vmatpush1.bf16.msra.mxu0 0
        %2606 = vmatprep.mubr.bf16.mxu0 0
        %2607 = vmatmul.mubr.bf16.gmra.mrb[0].mxu0 %v2523
        %v2608 = vpop.f32.mrb[0].mxu0
        %v2609 = vadd.f32 0.0, %v2608
        %v2610 = vpop.f32.mrb[0].mxu0
        %v2611 = vpop.f32.mrb[0].mxu0
        %v2612 = vadd.f32 0.0, %v2611
        %v2613 = vpop.f32.mrb[0].mxu0
        %2614 = vmatprep.mubr.bf16.mxu0 0
        %2615 = vmatmul.mubr.bf16.gmra.mrb[0].mxu0 %v2522
        %v2616 = vpop.f32.mrb[0].mxu0
        %v2617 = vadd.f32 0.0, %v2616
        %v2618 = vpop.f32.mrb[0].mxu0
        %v2619 = vpop.f32.mrb[0].mxu0
        %v2620 = vpop.f32.mrb[0].mxu0
        %2621 = vdwg.mxu0
        %v2622 = vadd.f32 %v2483, %v2609
        %v2623 = vadd.f32 %v2484, %v2612
        %v2624 = vadd.f32 %v2485, %v2617
        %s2625 = scalar_lea.vmem [#allocation2], 960
        %v2626 = vld [vmem:[%s2625] sm:$0xf]
        %v2627 = vld [vmem:[%s2625 + $0x4] sm:$0xf]
        %v2628 = vld [vmem:[%s2625 + $0x8] sm:$0xf]
        %v2629 = vld [vmem:[%s2625 + $0xc] sm:$0xf]
        %v2630 = vld [vmem:[%s2625 + $0x10] sm:$0xf]
        %v2631 = vld [vmem:[%s2625 + $0x14] sm:$0xf]
        %v2632 = vld [vmem:[%s2625 + $0x18] sm:$0xf]
        %v2633 = vld [vmem:[%s2625 + $0x1c] sm:$0xf]
        %v2634 = vld [vmem:[%s2625 + $0x20] sm:$0xf]
        %v2635 = vld [vmem:[%s2625 + $0x24] sm:$0xf]
        %v2636 = vld [vmem:[%s2625 + $0x28] sm:$0xf]
        %v2637 = vld [vmem:[%s2625 + $0x2c] sm:$0xf]
        %v2638 = vld [vmem:[%s2625 + $0x30] sm:$0xf]
        %v2639 = vld [vmem:[%s2625 + $0x34] sm:$0xf]
        %v2640 = vld [vmem:[%s2625 + $0x38] sm:$0xf]
        %v2641 = vld [vmem:[%s2625 + $0x3c] sm:$0xf]
        %v2642 = vpack.c.b16 %v2378, %v2377
        %v2643 = vpack.c.b16 %v2505, %v2505
        %v2662 = vunpack.c.l.b16 %v2626
        %v2663 = vunpack.c.l.b16 %v2627
        %v2664 = vunpack.c.l.b16 %v2628
        %v2665 = vunpack.c.l.b16 %v2629
        %v2666 = vunpack.c.l.b16 %v2630
        %v2667 = vunpack.c.l.b16 %v2631
        %v2668 = vunpack.c.l.b16 %v2632
        %v2669 = vunpack.c.l.b16 %v2633
        %v2670 = vunpack.c.l.b16 %v2634
        %v2671 = vunpack.c.l.b16 %v2635
        %v2672 = vunpack.c.l.b16 %v2636
        %v2673 = vunpack.c.l.b16 %v2637
        %v2674 = vunpack.c.l.b16 %v2638
        %v2675 = vunpack.c.l.b16 %v2639
        %v2676 = vunpack.c.l.b16 %v2640
        %v2677 = vunpack.c.l.b16 %v2641
        %v2678 = vpack.c.b16 %v2663, %v2662
        %v2679 = vpack.c.b16 %v2665, %v2664
        %v2680 = vpack.c.b16 %v2667, %v2666
        %v2681 = vpack.c.b16 %v2669, %v2668
        %v2682 = vpack.c.b16 %v2671, %v2670
        %v2683 = vpack.c.b16 %v2673, %v2672
        %v2684 = vpack.c.b16 %v2675, %v2674
        %v2685 = vpack.c.b16 %v2677, %v2676
        %2694 = vmatprep.subr.bf16.mxu0 0
        %2695 = vmatpush1.bf16.msra.mxu0 %v2678
        %2696 = vmatprep.subr.bf16.mxu0 0
        %2697 = vmatpush1.bf16.msra.mxu0 %v2679
        %2698 = vmatprep.subr.bf16.mxu0 0
        %2699 = vmatpush1.bf16.msra.mxu0 %v2680
        %2700 = vmatprep.subr.bf16.mxu0 0
        %2701 = vmatpush1.bf16.msra.mxu0 %v2681
        %2702 = vmatprep.subr.bf16.mxu0 0
        %2703 = vmatpush1.bf16.msra.mxu0 %v2682
        %2704 = vmatprep.subr.bf16.mxu0 0
        %2705 = vmatpush1.bf16.msra.mxu0 %v2683
        %2706 = vmatprep.subr.bf16.mxu0 0
        %2707 = vmatpush1.bf16.msra.mxu0 %v2684
        %2708 = vmatprep.subr.bf16.mxu0 0
        %2709 = vmatpush1.bf16.msra.mxu0 %v2685
        %2710 = vmatprep.subr.bf16.mxu0 0
        %2711 = vmatpush1.bf16.msra.mxu0 0
        %2712 = vmatprep.subr.bf16.mxu0 0
        %2713 = vmatpush1.bf16.msra.mxu0 0
        %2714 = vmatprep.subr.bf16.mxu0 0
        %2715 = vmatpush1.bf16.msra.mxu0 0
        %2716 = vmatprep.subr.bf16.mxu0 0
        %2717 = vmatpush1.bf16.msra.mxu0 0
        %2718 = vmatprep.subr.bf16.mxu0 0
        %2719 = vmatpush1.bf16.msra.mxu0 0
        %2720 = vmatprep.subr.bf16.mxu0 0
        %2721 = vmatpush1.bf16.msra.mxu0 0
        %2722 = vmatprep.subr.bf16.mxu0 0
        %2723 = vmatpush1.bf16.msra.mxu0 0
        %2724 = vmatprep.subr.bf16.mxu0 0
        %2725 = vmatpush1.bf16.msra.mxu0 0
        %2726 = vmatprep.mubr.bf16.mxu0 0
        %2727 = vmatmul.mubr.bf16.gmra.mrb[0].mxu0 %v2642
        %v2728 = vpop.f32.mrb[0].mxu0
        %v2729 = vadd.f32 0.0, %v2728
        %v2730 = vpop.f32.mrb[0].mxu0
        %v2731 = vpop.f32.mrb[0].mxu0
        %v2732 = vadd.f32 0.0, %v2731
        %v2733 = vpop.f32.mrb[0].mxu0
        %2734 = vmatprep.mubr.bf16.mxu0 0
        %2735 = vmatmul.mubr.bf16.gmra.mrb[0].mxu0 %v2643
        %v2736 = vpop.f32.mrb[0].mxu0
        %v2737 = vadd.f32 0.0, %v2736
        %v2738 = vpop.f32.mrb[0].mxu0
        %v2739 = vpop.f32.mrb[0].mxu0
        %v2740 = vpop.f32.mrb[0].mxu0
        %2741 = vdwg.mxu0
        %v2742 = vadd.f32 %v2622, %v2729
        %v2743 = vadd.f32 %v2623, %v2732
        %v2744 = vadd.f32 %v2624, %v2737
        %v2745 = vld [vmem:[%s238 + $0x4] sm:$0xc]
        %v2746 = vld [vmem:[%s238 + $0x8] sm:$0xf]
        %v2747 = vld [vmem:[%s238 + $0xc] sm:$0xf]
        %v2748 = vld [vmem:[%s238 + $0x10] sm:$0x3]
        %s2749 = scalar_lea.vmem [#allocation2], 576
        %v2750 = vld [vmem:[%s2749] sm:$0xf]
        %v2751 = vld [vmem:[%s2749 + $0x4] sm:$0xf]
        %v2752 = vld [vmem:[%s2749 + $0x8] sm:$0xf]
        %v2753 = vld [vmem:[%s2749 + $0xc] sm:$0xf]
        %v2754 = vld [vmem:[%s2749 + $0x10] sm:$0xf]
        %v2755 = vld [vmem:[%s2749 + $0x14] sm:$0xf]
        %v2756 = vld [vmem:[%s2749 + $0x18] sm:$0xf]
        %v2757 = vld [vmem:[%s2749 + $0x1c] sm:$0xf]
        %v2758 = vld [vmem:[%s2749 + $0x20] sm:$0xf]
        %v2759 = vld [vmem:[%s2749 + $0x24] sm:$0xf]
        %v2760 = vld [vmem:[%s2749 + $0x28] sm:$0xf]
        %v2761 = vld [vmem:[%s2749 + $0x2c] sm:$0xf]
        %v2762 = vld [vmem:[%s2749 + $0x30] sm:$0xf]
        %v2763 = vld [vmem:[%s2749 + $0x34] sm:$0xf]
        %v2764 = vld [vmem:[%s2749 + $0x38] sm:$0xf]
        %v2765 = vld [vmem:[%s2749 + $0x3c] sm:$0xf]
        %v2770 = vunpack.c.l.b16 %v2745
        %v2771 = vunpack.c.l.b16 %v2746
        %v2772 = vunpack.c.l.b16 %v2747
        %v2773 = vunpack.c.l.b16 %v2748
        %v2774 = vpack.c.b16 %v2771, %v2770
        %v2775 = vpack.c.b16 %v2773, %v2772
        %v2776 = vrot.slane %v2774, 2
        %v2777 = vrot.slane %v2775, 2
        %v2778 = vsel %vm1072, %v2776, %v2777
        %v2797 = vunpack.c.l.b16 %v2750
        %v2798 = vunpack.c.l.b16 %v2751
        %v2799 = vunpack.c.l.b16 %v2752
        %v2800 = vunpack.c.l.b16 %v2753
        %v2801 = vunpack.c.l.b16 %v2754
        %v2802 = vunpack.c.l.b16 %v2755
        %v2803 = vunpack.c.l.b16 %v2756
        %v2804 = vunpack.c.l.b16 %v2757
        %v2805 = vunpack.c.l.b16 %v2758
        %v2806 = vunpack.c.l.b16 %v2759
        %v2807 = vunpack.c.l.b16 %v2760
        %v2808 = vunpack.c.l.b16 %v2761
        %v2809 = vunpack.c.l.b16 %v2762
        %v2810 = vunpack.c.l.b16 %v2763
        %v2811 = vunpack.c.l.b16 %v2764
        %v2812 = vunpack.c.l.b16 %v2765
        %v2813 = vpack.c.b16 %v2798, %v2797
        %v2814 = vpack.c.b16 %v2800, %v2799
        %v2815 = vpack.c.b16 %v2802, %v2801
        %v2816 = vpack.c.b16 %v2804, %v2803
        %v2817 = vpack.c.b16 %v2806, %v2805
        %v2818 = vpack.c.b16 %v2808, %v2807
        %v2819 = vpack.c.b16 %v2810, %v2809
        %v2820 = vpack.c.b16 %v2812, %v2811
        %2829 = vmatprep.subr.bf16.mxu0 0
        %2830 = vmatpush1.bf16.msra.mxu0 %v2813
        %2831 = vmatprep.subr.bf16.mxu0 0
        %2832 = vmatpush1.bf16.msra.mxu0 %v2814
        %2833 = vmatprep.subr.bf16.mxu0 0
        %2834 = vmatpush1.bf16.msra.mxu0 %v2815
        %2835 = vmatprep.subr.bf16.mxu0 0
        %2836 = vmatpush1.bf16.msra.mxu0 %v2816
        %2837 = vmatprep.subr.bf16.mxu0 0
        %2838 = vmatpush1.bf16.msra.mxu0 %v2817
        %2839 = vmatprep.subr.bf16.mxu0 0
        %2840 = vmatpush1.bf16.msra.mxu0 %v2818
        %2841 = vmatprep.subr.bf16.mxu0 0
        %2842 = vmatpush1.bf16.msra.mxu0 %v2819
        %2843 = vmatprep.subr.bf16.mxu0 0
        %2844 = vmatpush1.bf16.msra.mxu0 %v2820
        %2845 = vmatprep.subr.bf16.mxu0 0
        %2846 = vmatpush1.bf16.msra.mxu0 0
        %2847 = vmatprep.subr.bf16.mxu0 0
        %2848 = vmatpush1.bf16.msra.mxu0 0
        %2849 = vmatprep.subr.bf16.mxu0 0
        %2850 = vmatpush1.bf16.msra.mxu0 0
        %2851 = vmatprep.subr.bf16.mxu0 0
        %2852 = vmatpush1.bf16.msra.mxu0 0
        %2853 = vmatprep.subr.bf16.mxu0 0
        %2854 = vmatpush1.bf16.msra.mxu0 0
        %2855 = vmatprep.subr.bf16.mxu0 0
        %2856 = vmatpush1.bf16.msra.mxu0 0
        %2857 = vmatprep.subr.bf16.mxu0 0
        %2858 = vmatpush1.bf16.msra.mxu0 0
        %2859 = vmatprep.subr.bf16.mxu0 0
        %2860 = vmatpush1.bf16.msra.mxu0 0
        %2861 = vmatprep.mubr.bf16.mxu0 0
        %2862 = vmatmul.mubr.bf16.gmra.mrb[0].mxu0 %v2778
        %v2863 = vpop.f32.mrb[0].mxu0
        %v2864 = vadd.f32 0.0, %v2863
        %v2865 = vpop.f32.mrb[0].mxu0
        %v2866 = vpop.f32.mrb[0].mxu0
        %v2867 = vadd.f32 0.0, %v2866
        %v2868 = vpop.f32.mrb[0].mxu0
        %2869 = vmatprep.mubr.bf16.mxu0 0
        %2870 = vmatmul.mubr.bf16.gmra.mrb[0].mxu0 %v2777
        %v2871 = vpop.f32.mrb[0].mxu0
        %v2872 = vadd.f32 0.0, %v2871
        %v2873 = vpop.f32.mrb[0].mxu0
        %v2874 = vpop.f32.mrb[0].mxu0
        %v2875 = vpop.f32.mrb[0].mxu0
        %2876 = vdwg.mxu0
        %v2877 = vadd.f32 %v2742, %v2864
        %v2878 = vadd.f32 %v2743, %v2867
        %v2879 = vadd.f32 %v2744, %v2872
        %v2880 = vld [vmem:[%s238 + $0x10] sm:$0x7]
        %s2881 = scalar_lea.vmem [#allocation2], 448
        %v2882 = vld [vmem:[%s2881] sm:$0xf]
        %v2883 = vld [vmem:[%s2881 + $0x4] sm:$0xf]
        %v2884 = vld [vmem:[%s2881 + $0x8] sm:$0xf]
        %v2885 = vld [vmem:[%s2881 + $0xc] sm:$0xf]
        %v2886 = vld [vmem:[%s2881 + $0x10] sm:$0xf]
        %v2887 = vld [vmem:[%s2881 + $0x14] sm:$0xf]
        %v2888 = vld [vmem:[%s2881 + $0x18] sm:$0xf]
        %v2889 = vld [vmem:[%s2881 + $0x1c] sm:$0xf]
        %v2890 = vld [vmem:[%s2881 + $0x20] sm:$0xf]
        %v2891 = vld [vmem:[%s2881 + $0x24] sm:$0xf]
        %v2892 = vld [vmem:[%s2881 + $0x28] sm:$0xf]
        %v2893 = vld [vmem:[%s2881 + $0x2c] sm:$0xf]
        %v2894 = vld [vmem:[%s2881 + $0x30] sm:$0xf]
        %v2895 = vld [vmem:[%s2881 + $0x34] sm:$0xf]
        %v2896 = vld [vmem:[%s2881 + $0x38] sm:$0xf]
        %v2897 = vld [vmem:[%s2881 + $0x3c] sm:$0xf]
        %v2899 = vunpack.c.l.b16 %v2880
        %v2900 = vpack.c.b16 %v2899, %v2772
        %v2902 = vshrl.u32 %v2774, 16
        %v2904 = vrot.slane %v2902, 2
        %v2905 = vshll.u32 %v2774, 16
        %v2907 = vrot.slane %v2905, 3
        %v2908 = vor.u32 %v2904, %v2907
        %v2910 = vshrl.u32 %v2900, 16
        %v2912 = vrot.slane %v2910, 2
        %v2913 = vshll.u32 %v2900, 16
        %v2915 = vrot.slane %v2913, 3
        %v2916 = vor.u32 %v2912, %v2915
        %v2917 = vsel %vm1198, %v2908, %v2916
        %v2936 = vunpack.c.l.b16 %v2882
        %v2937 = vunpack.c.l.b16 %v2883
        %v2938 = vunpack.c.l.b16 %v2884
        %v2939 = vunpack.c.l.b16 %v2885
        %v2940 = vunpack.c.l.b16 %v2886
        %v2941 = vunpack.c.l.b16 %v2887
        %v2942 = vunpack.c.l.b16 %v2888
        %v2943 = vunpack.c.l.b16 %v2889
        %v2944 = vunpack.c.l.b16 %v2890
        %v2945 = vunpack.c.l.b16 %v2891
        %v2946 = vunpack.c.l.b16 %v2892
        %v2947 = vunpack.c.l.b16 %v2893
        %v2948 = vunpack.c.l.b16 %v2894
        %v2949 = vunpack.c.l.b16 %v2895
        %v2950 = vunpack.c.l.b16 %v2896
        %v2951 = vunpack.c.l.b16 %v2897
        %v2952 = vpack.c.b16 %v2937, %v2936
        %v2953 = vpack.c.b16 %v2939, %v2938
        %v2954 = vpack.c.b16 %v2941, %v2940
        %v2955 = vpack.c.b16 %v2943, %v2942
        %v2956 = vpack.c.b16 %v2945, %v2944
        %v2957 = vpack.c.b16 %v2947, %v2946
        %v2958 = vpack.c.b16 %v2949, %v2948
        %v2959 = vpack.c.b16 %v2951, %v2950
        %2968 = vmatprep.subr.bf16.mxu0 0
        %2969 = vmatpush1.bf16.msra.mxu0 %v2952
        %2970 = vmatprep.subr.bf16.mxu0 0
        %2971 = vmatpush1.bf16.msra.mxu0 %v2953
        %2972 = vmatprep.subr.bf16.mxu0 0
        %2973 = vmatpush1.bf16.msra.mxu0 %v2954
        %2974 = vmatprep.subr.bf16.mxu0 0
        %2975 = vmatpush1.bf16.msra.mxu0 %v2955
        %2976 = vmatprep.subr.bf16.mxu0 0
        %2977 = vmatpush1.bf16.msra.mxu0 %v2956
        %2978 = vmatprep.subr.bf16.mxu0 0
        %2979 = vmatpush1.bf16.msra.mxu0 %v2957
        %2980 = vmatprep.subr.bf16.mxu0 0
        %2981 = vmatpush1.bf16.msra.mxu0 %v2958
        %2982 = vmatprep.subr.bf16.mxu0 0
        %2983 = vmatpush1.bf16.msra.mxu0 %v2959
        %2984 = vmatprep.subr.bf16.mxu0 0
        %2985 = vmatpush1.bf16.msra.mxu0 0
        %2986 = vmatprep.subr.bf16.mxu0 0
        %2987 = vmatpush1.bf16.msra.mxu0 0
        %2988 = vmatprep.subr.bf16.mxu0 0
        %2989 = vmatpush1.bf16.msra.mxu0 0
        %2990 = vmatprep.subr.bf16.mxu0 0
        %2991 = vmatpush1.bf16.msra.mxu0 0
        %2992 = vmatprep.subr.bf16.mxu0 0
        %2993 = vmatpush1.bf16.msra.mxu0 0
        %2994 = vmatprep.subr.bf16.mxu0 0
        %2995 = vmatpush1.bf16.msra.mxu0 0
        %2996 = vmatprep.subr.bf16.mxu0 0
        %2997 = vmatpush1.bf16.msra.mxu0 0
        %2998 = vmatprep.subr.bf16.mxu0 0
        %2999 = vmatpush1.bf16.msra.mxu0 0
        %3000 = vmatprep.mubr.bf16.mxu0 0
        %3001 = vmatmul.mubr.bf16.gmra.mrb[0].mxu0 %v2917
        %v3002 = vpop.f32.mrb[0].mxu0
        %v3003 = vadd.f32 0.0, %v3002
        %v3004 = vpop.f32.mrb[0].mxu0
        %v3005 = vpop.f32.mrb[0].mxu0
        %v3006 = vadd.f32 0.0, %v3005
        %v3007 = vpop.f32.mrb[0].mxu0
        %3008 = vmatprep.mubr.bf16.mxu0 0
        %3009 = vmatmul.mubr.bf16.gmra.mrb[0].mxu0 %v2916
        %v3010 = vpop.f32.mrb[0].mxu0
        %v3011 = vadd.f32 0.0, %v3010
        %v3012 = vpop.f32.mrb[0].mxu0
        %v3013 = vpop.f32.mrb[0].mxu0
        %v3014 = vpop.f32.mrb[0].mxu0
        %3015 = vdwg.mxu0
        %v3016 = vadd.f32 %v2877, %v3003
        %v3017 = vadd.f32 %v2878, %v3006
        %v3018 = vadd.f32 %v2879, %v3011
        %v3019 = vld [vmem:[%s238 + $0x4] sm:$0x8]
        %s3020 = scalar_lea.vmem [#allocation2], 320
        %v3021 = vld [vmem:[%s3020] sm:$0xf]
        %v3022 = vld [vmem:[%s3020 + $0x4] sm:$0xf]
        %v3023 = vld [vmem:[%s3020 + $0x8] sm:$0xf]
        %v3024 = vld [vmem:[%s3020 + $0xc] sm:$0xf]
        %v3025 = vld [vmem:[%s3020 + $0x10] sm:$0xf]
        %v3026 = vld [vmem:[%s3020 + $0x14] sm:$0xf]
        %v3027 = vld [vmem:[%s3020 + $0x18] sm:$0xf]
        %v3028 = vld [vmem:[%s3020 + $0x1c] sm:$0xf]
        %v3029 = vld [vmem:[%s3020 + $0x20] sm:$0xf]
        %v3030 = vld [vmem:[%s3020 + $0x24] sm:$0xf]
        %v3031 = vld [vmem:[%s3020 + $0x28] sm:$0xf]
        %v3032 = vld [vmem:[%s3020 + $0x2c] sm:$0xf]
        %v3033 = vld [vmem:[%s3020 + $0x30] sm:$0xf]
        %v3034 = vld [vmem:[%s3020 + $0x34] sm:$0xf]
        %v3035 = vld [vmem:[%s3020 + $0x38] sm:$0xf]
        %v3036 = vld [vmem:[%s3020 + $0x3c] sm:$0xf]
        %v3038 = vunpack.c.l.b16 %v3019
        %v3039 = vpack.c.b16 %v2771, %v3038
        %v3040 = vrot.slane %v3039, 3
        %v3041 = vrot.slane %v2900, 3
        %v3042 = vsel %vm676, %v3040, %v3041
        %v3061 = vunpack.c.l.b16 %v3021
        %v3062 = vunpack.c.l.b16 %v3022
        %v3063 = vunpack.c.l.b16 %v3023
        %v3064 = vunpack.c.l.b16 %v3024
        %v3065 = vunpack.c.l.b16 %v3025
        %v3066 = vunpack.c.l.b16 %v3026
        %v3067 = vunpack.c.l.b16 %v3027
        %v3068 = vunpack.c.l.b16 %v3028
        %v3069 = vunpack.c.l.b16 %v3029
        %v3070 = vunpack.c.l.b16 %v3030
        %v3071 = vunpack.c.l.b16 %v3031
        %v3072 = vunpack.c.l.b16 %v3032
        %v3073 = vunpack.c.l.b16 %v3033
        %v3074 = vunpack.c.l.b16 %v3034
        %v3075 = vunpack.c.l.b16 %v3035
        %v3076 = vunpack.c.l.b16 %v3036
        %v3077 = vpack.c.b16 %v3062, %v3061
        %v3078 = vpack.c.b16 %v3064, %v3063
        %v3079 = vpack.c.b16 %v3066, %v3065
        %v3080 = vpack.c.b16 %v3068, %v3067
        %v3081 = vpack.c.b16 %v3070, %v3069
        %v3082 = vpack.c.b16 %v3072, %v3071
        %v3083 = vpack.c.b16 %v3074, %v3073
        %v3084 = vpack.c.b16 %v3076, %v3075
        %3093 = vmatprep.subr.bf16.mxu0 0
        %3094 = vmatpush1.bf16.msra.mxu0 %v3077
        %3095 = vmatprep.subr.bf16.mxu0 0
        %3096 = vmatpush1.bf16.msra.mxu0 %v3078
        %3097 = vmatprep.subr.bf16.mxu0 0
        %3098 = vmatpush1.bf16.msra.mxu0 %v3079
        %3099 = vmatprep.subr.bf16.mxu0 0
        %3100 = vmatpush1.bf16.msra.mxu0 %v3080
        %3101 = vmatprep.subr.bf16.mxu0 0
        %3102 = vmatpush1.bf16.msra.mxu0 %v3081
        %3103 = vmatprep.subr.bf16.mxu0 0
        %3104 = vmatpush1.bf16.msra.mxu0 %v3082
        %3105 = vmatprep.subr.bf16.mxu0 0
        %3106 = vmatpush1.bf16.msra.mxu0 %v3083
        %3107 = vmatprep.subr.bf16.mxu0 0
        %3108 = vmatpush1.bf16.msra.mxu0 %v3084
        %3109 = vmatprep.subr.bf16.mxu0 0
        %3110 = vmatpush1.bf16.msra.mxu0 0
        %3111 = vmatprep.subr.bf16.mxu0 0
        %3112 = vmatpush1.bf16.msra.mxu0 0
        %3113 = vmatprep.subr.bf16.mxu0 0
        %3114 = vmatpush1.bf16.msra.mxu0 0
        %3115 = vmatprep.subr.bf16.mxu0 0
        %3116 = vmatpush1.bf16.msra.mxu0 0
        %3117 = vmatprep.subr.bf16.mxu0 0
        %3118 = vmatpush1.bf16.msra.mxu0 0
        %3119 = vmatprep.subr.bf16.mxu0 0
        %3120 = vmatpush1.bf16.msra.mxu0 0
        %3121 = vmatprep.subr.bf16.mxu0 0
        %3122 = vmatpush1.bf16.msra.mxu0 0
        %3123 = vmatprep.subr.bf16.mxu0 0
        %3124 = vmatpush1.bf16.msra.mxu0 0
        %3125 = vmatprep.mubr.bf16.mxu0 0
        %3126 = vmatmul.mubr.bf16.gmra.mrb[0].mxu0 %v3042
        %v3127 = vpop.f32.mrb[0].mxu0
        %v3128 = vadd.f32 0.0, %v3127
        %v3129 = vpop.f32.mrb[0].mxu0
        %v3130 = vpop.f32.mrb[0].mxu0
        %v3131 = vadd.f32 0.0, %v3130
        %v3132 = vpop.f32.mrb[0].mxu0
        %3133 = vmatprep.mubr.bf16.mxu0 0
        %3134 = vmatmul.mubr.bf16.gmra.mrb[0].mxu0 %v3041
        %v3135 = vpop.f32.mrb[0].mxu0
        %v3136 = vadd.f32 0.0, %v3135
        %v3137 = vpop.f32.mrb[0].mxu0
        %v3138 = vpop.f32.mrb[0].mxu0
        %v3139 = vpop.f32.mrb[0].mxu0
        %3140 = vdwg.mxu0
        %v3141 = vadd.f32 %v3016, %v3128
        %v3142 = vadd.f32 %v3017, %v3131
        %v3143 = vadd.f32 %v3018, %v3136
        %v3144 = vmul.f32 %v3141, %v1445
        %v3145 = vmul.f32 %v3142, %v1445
        %v3146 = vmul.f32 %v3143, %v1445
        %v3147 = vadd.f32 %v3144, 4096.0
        %v3148 = vadd.f32 %v3145, 4096.0
        %v3149 = vadd.f32 %v3146, 4096.0
        %v3150 = vmul.f32 %v3147, %v1453
        %v3151 = vmul.f32 %v3148, %v1453
        %v3152 = vmul.f32 %v3149, %v1453
        %v3153 = vfloor.f32 %v3150
        %v3154 = vfloor.f32 %v3151
        %v3155 = vfloor.f32 %v3152
        %v3156 = vmax.f32 %v3153, 0.0
        %v3157 = vmax.f32 %v3154, 0.0
        %v3158 = vmax.f32 %v3155, 0.0
        %v3159 = vmin.f32 %v3156, 255.0
        %v3160 = vmin.f32 %v3157, 255.0
        %v3161 = vmin.f32 %v3158, 255.0
        %v3162 = vmul.f32 %v3159, 32768.0
        %v3163 = vmul.f32 %v3160, 32768.0
        %v3164 = vmul.f32 %v3161, 32768.0
        %v3165 = vadd.f32 %v3162, 524288.0
        %v3166 = vadd.f32 %v3163, 524288.0
        %v3167 = vadd.f32 %v3164, 524288.0
        %v3168 = vmul.f32 %v3165, %v1472
        %v3169 = vmul.f32 %v3166, %v1472
        %v3170 = vmul.f32 %v3167, %v1472
        %v3171 = vfloor.f32 %v3168
        %v3172 = vfloor.f32 %v3169
        %v3173 = vfloor.f32 %v3170
        %v3174 = vpack.c.bf16 %v3172, %v3171
        %v3175 = vpack.c.bf16 %v3173, %v3173
        %v3178 = vunpack.c.l.b16 %v3174
        %v3179 = vunpack.c.h.b16 %v3174
        %v3180 = vunpack.c.l.b16 %v3175
        %v3181 = vpack.c.b16 %v3178, %v3178
        %v3182 = vpack.c.b16 %v3179, %v3179
        %v3183 = vpack.c.b16 %v3180, %v3180
        %s3187 = scalar_lea.vmem %s229, 24 [#allocation5]
        %3188 = vst [vmem:[%s3187] sm:$0xf] %v3181
        %3189 = vst [vmem:[%s3187 + $0x4] sm:$0xf] %v3182
        %3190 = vst [vmem:[%s3187 + $0x8] sm:$0xf] %v3183
        %v3191 = vld [vmem:[%s238] sm:$0x8]
        %v3192 = vld [vmem:[%s238 + $0x4] sm:$0xf]
        %v3193 = vld [vmem:[%s238 + $0x8] sm:$0xf]
        %v3194 = vld [vmem:[%s238 + $0xc] sm:$0xf]
        %s3195 = scalar_lea.vmem [#allocation2], 1152
        %v3196 = vld [vmem:[%s3195] sm:$0xf]
        %v3197 = vld [vmem:[%s3195 + $0x4] sm:$0xf]
        %v3198 = vld [vmem:[%s3195 + $0x8] sm:$0xf]
        %v3199 = vld [vmem:[%s3195 + $0xc] sm:$0xf]
        %v3200 = vld [vmem:[%s3195 + $0x10] sm:$0xf]
        %v3201 = vld [vmem:[%s3195 + $0x14] sm:$0xf]
        %v3202 = vld [vmem:[%s3195 + $0x18] sm:$0xf]
        %v3203 = vld [vmem:[%s3195 + $0x1c] sm:$0xf]
        %v3204 = vld [vmem:[%s3195 + $0x20] sm:$0xf]
        %v3205 = vld [vmem:[%s3195 + $0x24] sm:$0xf]
        %v3206 = vld [vmem:[%s3195 + $0x28] sm:$0xf]
        %v3207 = vld [vmem:[%s3195 + $0x2c] sm:$0xf]
        %v3208 = vld [vmem:[%s3195 + $0x30] sm:$0xf]
        %v3209 = vld [vmem:[%s3195 + $0x34] sm:$0xf]
        %v3210 = vld [vmem:[%s3195 + $0x38] sm:$0xf]
        %v3211 = vld [vmem:[%s3195 + $0x3c] sm:$0xf]
        %v3216 = vunpack.c.l.b16 %v3191
        %v3217 = vunpack.c.l.b16 %v3192
        %v3218 = vunpack.c.l.b16 %v3193
        %v3219 = vunpack.c.l.b16 %v3194
        %v3220 = vpack.c.b16 %v3217, %v3216
        %v3221 = vpack.c.b16 %v3219, %v3218
        %v3223 = vshrl.u32 %v3220, 16
        %v3225 = vrot.slane %v3223, 3
        %v3226 = vshll.u32 %v3220, 16
        %v3228 = vrot.slane %v3226, 4
        %v3229 = vor.u32 %v3225, %v3228
        %v3231 = vshrl.u32 %v3221, 16
        %v3233 = vrot.slane %v3231, 3
        %v3234 = vshll.u32 %v3221, 16
        %v3236 = vrot.slane %v3234, 4
        %v3237 = vor.u32 %v3233, %v3236
        %v3238 = vsel %vm802, %v3229, %v3237
        %v3257 = vunpack.c.l.b16 %v3196
        %v3258 = vunpack.c.l.b16 %v3197
        %v3259 = vunpack.c.l.b16 %v3198
        %v3260 = vunpack.c.l.b16 %v3199
        %v3261 = vunpack.c.l.b16 %v3200
        %v3262 = vunpack.c.l.b16 %v3201
        %v3263 = vunpack.c.l.b16 %v3202
        %v3264 = vunpack.c.l.b16 %v3203
        %v3265 = vunpack.c.l.b16 %v3204
        %v3266 = vunpack.c.l.b16 %v3205
        %v3267 = vunpack.c.l.b16 %v3206
        %v3268 = vunpack.c.l.b16 %v3207
        %v3269 = vunpack.c.l.b16 %v3208
        %v3270 = vunpack.c.l.b16 %v3209
        %v3271 = vunpack.c.l.b16 %v3210
        %v3272 = vunpack.c.l.b16 %v3211
        %v3273 = vpack.c.b16 %v3258, %v3257
        %v3274 = vpack.c.b16 %v3260, %v3259
        %v3275 = vpack.c.b16 %v3262, %v3261
        %v3276 = vpack.c.b16 %v3264, %v3263
        %v3277 = vpack.c.b16 %v3266, %v3265
        %v3278 = vpack.c.b16 %v3268, %v3267
        %v3279 = vpack.c.b16 %v3270, %v3269
        %v3280 = vpack.c.b16 %v3272, %v3271
        %3289 = vmatprep.subr.bf16.mxu0 0
        %3290 = vmatpush1.bf16.msra.mxu0 %v3273
        %3291 = vmatprep.subr.bf16.mxu0 0
        %3292 = vmatpush1.bf16.msra.mxu0 %v3274
        %3293 = vmatprep.subr.bf16.mxu0 0
        %3294 = vmatpush1.bf16.msra.mxu0 %v3275
        %3295 = vmatprep.subr.bf16.mxu0 0
        %3296 = vmatpush1.bf16.msra.mxu0 %v3276
        %3297 = vmatprep.subr.bf16.mxu0 0
        %3298 = vmatpush1.bf16.msra.mxu0 %v3277
        %3299 = vmatprep.subr.bf16.mxu0 0
        %3300 = vmatpush1.bf16.msra.mxu0 %v3278
        %3301 = vmatprep.subr.bf16.mxu0 0
        %3302 = vmatpush1.bf16.msra.mxu0 %v3279
        %3303 = vmatprep.subr.bf16.mxu0 0
        %3304 = vmatpush1.bf16.msra.mxu0 %v3280
        %3305 = vmatprep.subr.bf16.mxu0 0
        %3306 = vmatpush1.bf16.msra.mxu0 0
        %3307 = vmatprep.subr.bf16.mxu0 0
        %3308 = vmatpush1.bf16.msra.mxu0 0
        %3309 = vmatprep.subr.bf16.mxu0 0
        %3310 = vmatpush1.bf16.msra.mxu0 0
        %3311 = vmatprep.subr.bf16.mxu0 0
        %3312 = vmatpush1.bf16.msra.mxu0 0
        %3313 = vmatprep.subr.bf16.mxu0 0
        %3314 = vmatpush1.bf16.msra.mxu0 0
        %3315 = vmatprep.subr.bf16.mxu0 0
        %3316 = vmatpush1.bf16.msra.mxu0 0
        %3317 = vmatprep.subr.bf16.mxu0 0
        %3318 = vmatpush1.bf16.msra.mxu0 0
        %3319 = vmatprep.subr.bf16.mxu0 0
        %3320 = vmatpush1.bf16.msra.mxu0 0
        %3321 = vmatprep.mubr.bf16.mxu0 0
        %3322 = vmatmul.mubr.bf16.gmra.mrb[0].mxu0 %v3238
        %v3323 = vpop.f32.mrb[0].mxu0
        %v3324 = vadd.f32 0.0, %v3323
        %v3325 = vpop.f32.mrb[0].mxu0
        %v3326 = vpop.f32.mrb[0].mxu0
        %v3327 = vadd.f32 0.0, %v3326
        %v3328 = vpop.f32.mrb[0].mxu0
        %3329 = vmatprep.mubr.bf16.mxu0 0
        %3330 = vmatmul.mubr.bf16.gmra.mrb[0].mxu0 %v3237
        %v3331 = vpop.f32.mrb[0].mxu0
        %v3332 = vadd.f32 0.0, %v3331
        %v3333 = vpop.f32.mrb[0].mxu0
        %v3334 = vpop.f32.mrb[0].mxu0
        %v3335 = vpop.f32.mrb[0].mxu0
        %3336 = vdwg.mxu0
        %v3337 = vadd.f32 %v245, %v3324
        %v3338 = vadd.f32 %v245, %v3327
        %v3339 = vadd.f32 %v245, %v3332
        %s3340 = scalar_lea.vmem [#allocation2], 1024
        %v3341 = vld [vmem:[%s3340] sm:$0xf]
        %v3342 = vld [vmem:[%s3340 + $0x4] sm:$0xf]
        %v3343 = vld [vmem:[%s3340 + $0x8] sm:$0xf]
        %v3344 = vld [vmem:[%s3340 + $0xc] sm:$0xf]
        %v3345 = vld [vmem:[%s3340 + $0x10] sm:$0xf]
        %v3346 = vld [vmem:[%s3340 + $0x14] sm:$0xf]
        %v3347 = vld [vmem:[%s3340 + $0x18] sm:$0xf]
        %v3348 = vld [vmem:[%s3340 + $0x1c] sm:$0xf]
        %v3349 = vld [vmem:[%s3340 + $0x20] sm:$0xf]
        %v3350 = vld [vmem:[%s3340 + $0x24] sm:$0xf]
        %v3351 = vld [vmem:[%s3340 + $0x28] sm:$0xf]
        %v3352 = vld [vmem:[%s3340 + $0x2c] sm:$0xf]
        %v3353 = vld [vmem:[%s3340 + $0x30] sm:$0xf]
        %v3354 = vld [vmem:[%s3340 + $0x34] sm:$0xf]
        %v3355 = vld [vmem:[%s3340 + $0x38] sm:$0xf]
        %v3356 = vld [vmem:[%s3340 + $0x3c] sm:$0xf]
        %v3357 = vpack.c.b16 %v3218, %v3217
        %v3358 = vpack.c.b16 %v3219, %v3219
        %v3377 = vunpack.c.l.b16 %v3341
        %v3378 = vunpack.c.l.b16 %v3342
        %v3379 = vunpack.c.l.b16 %v3343
        %v3380 = vunpack.c.l.b16 %v3344
        %v3381 = vunpack.c.l.b16 %v3345
        %v3382 = vunpack.c.l.b16 %v3346
        %v3383 = vunpack.c.l.b16 %v3347
        %v3384 = vunpack.c.l.b16 %v3348
        %v3385 = vunpack.c.l.b16 %v3349
        %v3386 = vunpack.c.l.b16 %v3350
        %v3387 = vunpack.c.l.b16 %v3351
        %v3388 = vunpack.c.l.b16 %v3352
        %v3389 = vunpack.c.l.b16 %v3353
        %v3390 = vunpack.c.l.b16 %v3354
        %v3391 = vunpack.c.l.b16 %v3355
        %v3392 = vunpack.c.l.b16 %v3356
        %v3393 = vpack.c.b16 %v3378, %v3377
        %v3394 = vpack.c.b16 %v3380, %v3379
        %v3395 = vpack.c.b16 %v3382, %v3381
        %v3396 = vpack.c.b16 %v3384, %v3383
        %v3397 = vpack.c.b16 %v3386, %v3385
        %v3398 = vpack.c.b16 %v3388, %v3387
        %v3399 = vpack.c.b16 %v3390, %v3389
        %v3400 = vpack.c.b16 %v3392, %v3391
        %3409 = vmatprep.subr.bf16.mxu0 0
        %3410 = vmatpush1.bf16.msra.mxu0 %v3393
        %3411 = vmatprep.subr.bf16.mxu0 0
        %3412 = vmatpush1.bf16.msra.mxu0 %v3394
        %3413 = vmatprep.subr.bf16.mxu0 0
        %3414 = vmatpush1.bf16.msra.mxu0 %v3395
        %3415 = vmatprep.subr.bf16.mxu0 0
        %3416 = vmatpush1.bf16.msra.mxu0 %v3396
        %3417 = vmatprep.subr.bf16.mxu0 0
        %3418 = vmatpush1.bf16.msra.mxu0 %v3397
        %3419 = vmatprep.subr.bf16.mxu0 0
        %3420 = vmatpush1.bf16.msra.mxu0 %v3398
        %3421 = vmatprep.subr.bf16.mxu0 0
        %3422 = vmatpush1.bf16.msra.mxu0 %v3399
        %3423 = vmatprep.subr.bf16.mxu0 0
        %3424 = vmatpush1.bf16.msra.mxu0 %v3400
        %3425 = vmatprep.subr.bf16.mxu0 0
        %3426 = vmatpush1.bf16.msra.mxu0 0
        %3427 = vmatprep.subr.bf16.mxu0 0
        %3428 = vmatpush1.bf16.msra.mxu0 0
        %3429 = vmatprep.subr.bf16.mxu0 0
        %3430 = vmatpush1.bf16.msra.mxu0 0
        %3431 = vmatprep.subr.bf16.mxu0 0
        %3432 = vmatpush1.bf16.msra.mxu0 0
        %3433 = vmatprep.subr.bf16.mxu0 0
        %3434 = vmatpush1.bf16.msra.mxu0 0
        %3435 = vmatprep.subr.bf16.mxu0 0
        %3436 = vmatpush1.bf16.msra.mxu0 0
        %3437 = vmatprep.subr.bf16.mxu0 0
        %3438 = vmatpush1.bf16.msra.mxu0 0
        %3439 = vmatprep.subr.bf16.mxu0 0
        %3440 = vmatpush1.bf16.msra.mxu0 0
        %3441 = vmatprep.mubr.bf16.mxu0 0
        %3442 = vmatmul.mubr.bf16.gmra.mrb[0].mxu0 %v3357
        %v3443 = vpop.f32.mrb[0].mxu0
        %v3444 = vadd.f32 0.0, %v3443
        %v3445 = vpop.f32.mrb[0].mxu0
        %v3446 = vpop.f32.mrb[0].mxu0
        %v3447 = vadd.f32 0.0, %v3446
        %v3448 = vpop.f32.mrb[0].mxu0
        %3449 = vmatprep.mubr.bf16.mxu0 0
        %3450 = vmatmul.mubr.bf16.gmra.mrb[0].mxu0 %v3358
        %v3451 = vpop.f32.mrb[0].mxu0
        %v3452 = vadd.f32 0.0, %v3451
        %v3453 = vpop.f32.mrb[0].mxu0
        %v3454 = vpop.f32.mrb[0].mxu0
        %v3455 = vpop.f32.mrb[0].mxu0
        %3456 = vdwg.mxu0
        %v3457 = vadd.f32 %v3337, %v3444
        %v3458 = vadd.f32 %v3338, %v3447
        %v3459 = vadd.f32 %v3339, %v3452
        %v3460 = vld [vmem:[%s238 + $0x4] sm:$0xc]
        %v3461 = vld [vmem:[%s238 + $0x8] sm:$0xf]
        %v3462 = vld [vmem:[%s238 + $0xc] sm:$0xf]
        %v3463 = vld [vmem:[%s238 + $0x10] sm:$0x7]
        %s3464 = scalar_lea.vmem [#allocation2], 512
        %v3465 = vld [vmem:[%s3464] sm:$0xf]
        %v3466 = vld [vmem:[%s3464 + $0x4] sm:$0xf]
        %v3467 = vld [vmem:[%s3464 + $0x8] sm:$0xf]
        %v3468 = vld [vmem:[%s3464 + $0xc] sm:$0xf]
        %v3469 = vld [vmem:[%s3464 + $0x10] sm:$0xf]
        %v3470 = vld [vmem:[%s3464 + $0x14] sm:$0xf]
        %v3471 = vld [vmem:[%s3464 + $0x18] sm:$0xf]
        %v3472 = vld [vmem:[%s3464 + $0x1c] sm:$0xf]
        %v3473 = vld [vmem:[%s3464 + $0x20] sm:$0xf]
        %v3474 = vld [vmem:[%s3464 + $0x24] sm:$0xf]
        %v3475 = vld [vmem:[%s3464 + $0x28] sm:$0xf]
        %v3476 = vld [vmem:[%s3464 + $0x2c] sm:$0xf]
        %v3477 = vld [vmem:[%s3464 + $0x30] sm:$0xf]
        %v3478 = vld [vmem:[%s3464 + $0x34] sm:$0xf]
        %v3479 = vld [vmem:[%s3464 + $0x38] sm:$0xf]
        %v3480 = vld [vmem:[%s3464 + $0x3c] sm:$0xf]
        %v3485 = vunpack.c.l.b16 %v3460
        %v3486 = vunpack.c.l.b16 %v3461
        %v3487 = vunpack.c.l.b16 %v3462
        %v3488 = vunpack.c.l.b16 %v3463
        %v3489 = vpack.c.b16 %v3486, %v3485
        %v3490 = vpack.c.b16 %v3488, %v3487
        %v3492 = vshrl.u32 %v3489, 16
        %v3494 = vrot.slane %v3492, 2
        %v3495 = vshll.u32 %v3489, 16
        %v3497 = vrot.slane %v3495, 3
        %v3498 = vor.u32 %v3494, %v3497
        %v3500 = vshrl.u32 %v3490, 16
        %v3502 = vrot.slane %v3500, 2
        %v3503 = vshll.u32 %v3490, 16
        %v3505 = vrot.slane %v3503, 3
        %v3506 = vor.u32 %v3502, %v3505
        %v3507 = vsel %vm1198, %v3498, %v3506
        %v3526 = vunpack.c.l.b16 %v3465
        %v3527 = vunpack.c.l.b16 %v3466
        %v3528 = vunpack.c.l.b16 %v3467
        %v3529 = vunpack.c.l.b16 %v3468
        %v3530 = vunpack.c.l.b16 %v3469
        %v3531 = vunpack.c.l.b16 %v3470
        %v3532 = vunpack.c.l.b16 %v3471
        %v3533 = vunpack.c.l.b16 %v3472
        %v3534 = vunpack.c.l.b16 %v3473
        %v3535 = vunpack.c.l.b16 %v3474
        %v3536 = vunpack.c.l.b16 %v3475
        %v3537 = vunpack.c.l.b16 %v3476
        %v3538 = vunpack.c.l.b16 %v3477
        %v3539 = vunpack.c.l.b16 %v3478
        %v3540 = vunpack.c.l.b16 %v3479
        %v3541 = vunpack.c.l.b16 %v3480
        %v3542 = vpack.c.b16 %v3527, %v3526
        %v3543 = vpack.c.b16 %v3529, %v3528
        %v3544 = vpack.c.b16 %v3531, %v3530
        %v3545 = vpack.c.b16 %v3533, %v3532
        %v3546 = vpack.c.b16 %v3535, %v3534
        %v3547 = vpack.c.b16 %v3537, %v3536
        %v3548 = vpack.c.b16 %v3539, %v3538
        %v3549 = vpack.c.b16 %v3541, %v3540
        %3558 = vmatprep.subr.bf16.mxu0 0
        %3559 = vmatpush1.bf16.msra.mxu0 %v3542
        %3560 = vmatprep.subr.bf16.mxu0 0
        %3561 = vmatpush1.bf16.msra.mxu0 %v3543
        %3562 = vmatprep.subr.bf16.mxu0 0
        %3563 = vmatpush1.bf16.msra.mxu0 %v3544
        %3564 = vmatprep.subr.bf16.mxu0 0
        %3565 = vmatpush1.bf16.msra.mxu0 %v3545
        %3566 = vmatprep.subr.bf16.mxu0 0
        %3567 = vmatpush1.bf16.msra.mxu0 %v3546
        %3568 = vmatprep.subr.bf16.mxu0 0
        %3569 = vmatpush1.bf16.msra.mxu0 %v3547
        %3570 = vmatprep.subr.bf16.mxu0 0
        %3571 = vmatpush1.bf16.msra.mxu0 %v3548
        %3572 = vmatprep.subr.bf16.mxu0 0
        %3573 = vmatpush1.bf16.msra.mxu0 %v3549
        %3574 = vmatprep.subr.bf16.mxu0 0
        %3575 = vmatpush1.bf16.msra.mxu0 0
        %3576 = vmatprep.subr.bf16.mxu0 0
        %3577 = vmatpush1.bf16.msra.mxu0 0
        %3578 = vmatprep.subr.bf16.mxu0 0
        %3579 = vmatpush1.bf16.msra.mxu0 0
        %3580 = vmatprep.subr.bf16.mxu0 0
        %3581 = vmatpush1.bf16.msra.mxu0 0
        %3582 = vmatprep.subr.bf16.mxu0 0
        %3583 = vmatpush1.bf16.msra.mxu0 0
        %3584 = vmatprep.subr.bf16.mxu0 0
        %3585 = vmatpush1.bf16.msra.mxu0 0
        %3586 = vmatprep.subr.bf16.mxu0 0
        %3587 = vmatpush1.bf16.msra.mxu0 0
        %3588 = vmatprep.subr.bf16.mxu0 0
        %3589 = vmatpush1.bf16.msra.mxu0 0
        %3590 = vmatprep.mubr.bf16.mxu0 0
        %3591 = vmatmul.mubr.bf16.gmra.mrb[0].mxu0 %v3507
        %v3592 = vpop.f32.mrb[0].mxu0
        %v3593 = vadd.f32 0.0, %v3592
        %v3594 = vpop.f32.mrb[0].mxu0
        %v3595 = vpop.f32.mrb[0].mxu0
        %v3596 = vadd.f32 0.0, %v3595
        %v3597 = vpop.f32.mrb[0].mxu0
        %3598 = vmatprep.mubr.bf16.mxu0 0
        %3599 = vmatmul.mubr.bf16.gmra.mrb[0].mxu0 %v3506
        %v3600 = vpop.f32.mrb[0].mxu0
        %v3601 = vadd.f32 0.0, %v3600
        %v3602 = vpop.f32.mrb[0].mxu0
        %v3603 = vpop.f32.mrb[0].mxu0
        %v3604 = vpop.f32.mrb[0].mxu0
        %3605 = vdwg.mxu0
        %v3606 = vadd.f32 %v3457, %v3593
        %v3607 = vadd.f32 %v3458, %v3596
        %v3608 = vadd.f32 %v3459, %v3601
        %v3609 = vld [vmem:[%s238 + $0x4] sm:$0x8]
        %s3610 = scalar_lea.vmem [#allocation2], 384
        %v3611 = vld [vmem:[%s3610] sm:$0xf]
        %v3612 = vld [vmem:[%s3610 + $0x4] sm:$0xf]
        %v3613 = vld [vmem:[%s3610 + $0x8] sm:$0xf]
        %v3614 = vld [vmem:[%s3610 + $0xc] sm:$0xf]
        %v3615 = vld [vmem:[%s3610 + $0x10] sm:$0xf]
        %v3616 = vld [vmem:[%s3610 + $0x14] sm:$0xf]
        %v3617 = vld [vmem:[%s3610 + $0x18] sm:$0xf]
        %v3618 = vld [vmem:[%s3610 + $0x1c] sm:$0xf]
        %v3619 = vld [vmem:[%s3610 + $0x20] sm:$0xf]
        %v3620 = vld [vmem:[%s3610 + $0x24] sm:$0xf]
        %v3621 = vld [vmem:[%s3610 + $0x28] sm:$0xf]
        %v3622 = vld [vmem:[%s3610 + $0x2c] sm:$0xf]
        %v3623 = vld [vmem:[%s3610 + $0x30] sm:$0xf]
        %v3624 = vld [vmem:[%s3610 + $0x34] sm:$0xf]
        %v3625 = vld [vmem:[%s3610 + $0x38] sm:$0xf]
        %v3626 = vld [vmem:[%s3610 + $0x3c] sm:$0xf]
        %v3628 = vunpack.c.l.b16 %v3609
        %v3629 = vpack.c.b16 %v3486, %v3628
        %v3630 = vrot.slane %v3629, 3
        %v3631 = vrot.slane %v3490, 3
        %v3632 = vsel %vm676, %v3630, %v3631
        %v3651 = vunpack.c.l.b16 %v3611
        %v3652 = vunpack.c.l.b16 %v3612
        %v3653 = vunpack.c.l.b16 %v3613
        %v3654 = vunpack.c.l.b16 %v3614
        %v3655 = vunpack.c.l.b16 %v3615
        %v3656 = vunpack.c.l.b16 %v3616
        %v3657 = vunpack.c.l.b16 %v3617
        %v3658 = vunpack.c.l.b16 %v3618
        %v3659 = vunpack.c.l.b16 %v3619
        %v3660 = vunpack.c.l.b16 %v3620
        %v3661 = vunpack.c.l.b16 %v3621
        %v3662 = vunpack.c.l.b16 %v3622
        %v3663 = vunpack.c.l.b16 %v3623
        %v3664 = vunpack.c.l.b16 %v3624
        %v3665 = vunpack.c.l.b16 %v3625
        %v3666 = vunpack.c.l.b16 %v3626
        %v3667 = vpack.c.b16 %v3652, %v3651
        %v3668 = vpack.c.b16 %v3654, %v3653
        %v3669 = vpack.c.b16 %v3656, %v3655
        %v3670 = vpack.c.b16 %v3658, %v3657
        %v3671 = vpack.c.b16 %v3660, %v3659
        %v3672 = vpack.c.b16 %v3662, %v3661
        %v3673 = vpack.c.b16 %v3664, %v3663
        %v3674 = vpack.c.b16 %v3666, %v3665
        %3683 = vmatprep.subr.bf16.mxu0 0
        %3684 = vmatpush1.bf16.msra.mxu0 %v3667
        %3685 = vmatprep.subr.bf16.mxu0 0
        %3686 = vmatpush1.bf16.msra.mxu0 %v3668
        %3687 = vmatprep.subr.bf16.mxu0 0
        %3688 = vmatpush1.bf16.msra.mxu0 %v3669
        %3689 = vmatprep.subr.bf16.mxu0 0
        %3690 = vmatpush1.bf16.msra.mxu0 %v3670
        %3691 = vmatprep.subr.bf16.mxu0 0
        %3692 = vmatpush1.bf16.msra.mxu0 %v3671
        %3693 = vmatprep.subr.bf16.mxu0 0
        %3694 = vmatpush1.bf16.msra.mxu0 %v3672
        %3695 = vmatprep.subr.bf16.mxu0 0
        %3696 = vmatpush1.bf16.msra.mxu0 %v3673
        %3697 = vmatprep.subr.bf16.mxu0 0
        %3698 = vmatpush1.bf16.msra.mxu0 %v3674
        %3699 = vmatprep.subr.bf16.mxu0 0
        %3700 = vmatpush1.bf16.msra.mxu0 0
        %3701 = vmatprep.subr.bf16.mxu0 0
        %3702 = vmatpush1.bf16.msra.mxu0 0
        %3703 = vmatprep.subr.bf16.mxu0 0
        %3704 = vmatpush1.bf16.msra.mxu0 0
        %3705 = vmatprep.subr.bf16.mxu0 0
        %3706 = vmatpush1.bf16.msra.mxu0 0
        %3707 = vmatprep.subr.bf16.mxu0 0
        %3708 = vmatpush1.bf16.msra.mxu0 0
        %3709 = vmatprep.subr.bf16.mxu0 0
        %3710 = vmatpush1.bf16.msra.mxu0 0
        %3711 = vmatprep.subr.bf16.mxu0 0
        %3712 = vmatpush1.bf16.msra.mxu0 0
        %3713 = vmatprep.subr.bf16.mxu0 0
        %3714 = vmatpush1.bf16.msra.mxu0 0
        %3715 = vmatprep.mubr.bf16.mxu0 0
        %3716 = vmatmul.mubr.bf16.gmra.mrb[0].mxu0 %v3632
        %v3717 = vpop.f32.mrb[0].mxu0
        %v3718 = vadd.f32 0.0, %v3717
        %v3719 = vpop.f32.mrb[0].mxu0
        %v3720 = vpop.f32.mrb[0].mxu0
        %v3721 = vadd.f32 0.0, %v3720
        %v3722 = vpop.f32.mrb[0].mxu0
        %3723 = vmatprep.mubr.bf16.mxu0 0
        %3724 = vmatmul.mubr.bf16.gmra.mrb[0].mxu0 %v3631
        %v3725 = vpop.f32.mrb[0].mxu0
        %v3726 = vadd.f32 0.0, %v3725
        %v3727 = vpop.f32.mrb[0].mxu0
        %v3728 = vpop.f32.mrb[0].mxu0
        %v3729 = vpop.f32.mrb[0].mxu0
        %3730 = vdwg.mxu0
        %v3731 = vadd.f32 %v3606, %v3718
        %v3732 = vadd.f32 %v3607, %v3721
        %v3733 = vadd.f32 %v3608, %v3726
        %v3734 = vmul.f32 %v3731, %v1445
        %v3735 = vmul.f32 %v3732, %v1445
        %v3736 = vmul.f32 %v3733, %v1445
        %v3737 = vadd.f32 %v3734, 4096.0
        %v3738 = vadd.f32 %v3735, 4096.0
        %v3739 = vadd.f32 %v3736, 4096.0
        %v3740 = vmul.f32 %v3737, %v1453
        %v3741 = vmul.f32 %v3738, %v1453
        %v3742 = vmul.f32 %v3739, %v1453
        %v3743 = vfloor.f32 %v3740
        %v3744 = vfloor.f32 %v3741
        %v3745 = vfloor.f32 %v3742
        %v3746 = vmax.f32 %v3743, 0.0
        %v3747 = vmax.f32 %v3744, 0.0
        %v3748 = vmax.f32 %v3745, 0.0
        %v3749 = vmin.f32 %v3746, 255.0
        %v3750 = vmin.f32 %v3747, 255.0
        %v3751 = vmin.f32 %v3748, 255.0
        %v3752 = vmul.f32 %v3749, 32768.0
        %v3753 = vmul.f32 %v3750, 32768.0
        %v3754 = vmul.f32 %v3751, 32768.0
        %v3755 = vadd.f32 %v3752, 524288.0
        %v3756 = vadd.f32 %v3753, 524288.0
        %v3757 = vadd.f32 %v3754, 524288.0
        %v3758 = vmul.f32 %v3755, %v1472
        %v3759 = vmul.f32 %v3756, %v1472
        %v3760 = vmul.f32 %v3757, %v1472
        %v3761 = vfloor.f32 %v3758
        %v3762 = vfloor.f32 %v3759
        %v3763 = vfloor.f32 %v3760
        %v3764 = vpack.c.bf16 %v3762, %v3761
        %v3765 = vpack.c.bf16 %v3763, %v3763
        %v3768 = vunpack.c.l.b16 %v3764
        %v3769 = vunpack.c.h.b16 %v3764
        %v3770 = vunpack.c.l.b16 %v3765
        %v3771 = vpack.c.b16 %v3768, %v3768
        %v3772 = vpack.c.b16 %v3769, %v3769
        %v3773 = vpack.c.b16 %v3770, %v3770
        %s3777 = scalar_lea.vmem %s229, 36 [#allocation5]
        %3778 = vst [vmem:[%s3777] sm:$0xf] %v3771
        %3779 = vst [vmem:[%s3777 + $0x4] sm:$0xf] %v3772
        %3780 = vst [vmem:[%s3777 + $0x8] sm:$0xf] %v3773
        %s3781 = sand.u32 %s132, 1
        %s3782 = scalar_lea.sflag [#allocation4], %s3781
        %s3783 = sand.u32 %s132, 1
        %s3784 = smul.addr %s3783, 48
        %s3785 = scalar_lea.vmem [#allocation5], %s3784
        // Predicated region
        $region41: #{tpu_custom_call.1} parent=35 // pred_check
          %p3786 = pneg %p142
        $region42: #{tpu_custom_call.1} parent=35 // pred_check_branch
          %3788 = sbr.rel (%p3786) target = $region44
        $region43: #{tpu_custom_call.1} parent=35 // pred_region
          %s3790 = ssub.s32 768, 768
          %3791 = vsyncadd %s3782, %s3790
          %s3792 = smul.addr %s24, 12
          %s3793 = smul.addr %s23, 12
          %s3794 = sadd.s32 %s3792, %s3793
          %s3795 = smul.addr %s3794, 64
          %s3796 = scalar_lea.hbm %s4, %s3795
          %s3797 = sshll.u32 %s3785, 4
          %s3798 = int_to_ptr.vmem [resolvable:$true] %s3797
          %3803 = dma.vmem_to_hbm [thread:$0]  %s3798, 768, %s3796, %s3782, 64, 64, 4
        $region44: #{tpu_custom_call.1} parent=35 // pred_fallthru
          _
      $region36: #{tpu_custom_call.1} parent=5 // pred_fallthru
        _
      %p3804 = scmp.le.s32.totalorder 2, %s14
      // Predicated region
      $region45: #{tpu_custom_call.1} parent=5 // pred_check
        %p3805 = pneg %p3804
      $region46: #{tpu_custom_call.1} parent=5 // pred_check_branch
        %3807 = sbr.rel (%p3805) target = $region48
      $region47: #{tpu_custom_call.1} parent=5 // pred_region
        %s3808 = ssub.s32 %s14, 2
        // Predicated region
        $region49: #{tpu_custom_call.1} parent=47 // pred_check
          %p3809 = pneg %p148
        $region50: #{tpu_custom_call.1} parent=47 // pred_check_branch
          %3811 = sbr.rel (%p3809) target = $region52
        $region51: #{tpu_custom_call.1} parent=47 // pred_region
          %s3812 = sand.u32 %s133, 1
          %s3813 = scalar_lea.sflag [#allocation4], %s3812
          %s3814 = sand.u32 %s133, 1
          %s3815 = smul.addr %s3814, 48
          %s3816 = scalar_lea.vmem [#allocation5], %s3815
          %3817 = dma.done %s3813, 768
        $region52: #{tpu_custom_call.1} parent=47 // pred_fallthru
          _
      $region48: #{tpu_custom_call.1} parent=5 // pred_fallthru
        _
    $region6: #{tpu_custom_call.1} parent=1 // loop_footer
      %s18 = sadd.s32 1, %s14
    $region7: #{tpu_custom_call.1} parent=1 // loop_footer_branch
      %13 = sbr.rel target = $region3
    $region8: #{tpu_custom_call.1} parent=1 // loop_exit
      _
    %3818 = vsyncpa [#allocation3], 1
    %s3819 = scalar_lea.sflag [#allocation3], 1
    %3820 = vsyncpa %s3819, 1
    %3821 = vsyncpa [#allocation4], 1
    %s3822 = scalar_lea.sflag [#allocation4], 1
    %3823 = vsyncpa %s3822, 1

</llo_original>
